<compile_context>
chip_gen: v5e
topology: v5e:2x2
jax: 0.10.0
libtpu: 0.0.40
codegen_flags: <defaults>
</compile_context>

<pallas_src>
import jax
import jax.numpy as jnp
from jax import lax
from jax.experimental import pallas as pl
from jax.experimental.pallas import tpu as pltpu

BN_EPS = 1e-5


# ----------------------------------------------------------------------------
# Fused kernel: (conv3x3 + folded BN + ReLU) x n_layers  ->  skip + maxpool2x2
# ----------------------------------------------------------------------------
def _make_down_block_kernel(n_layers, H, W, cin, cout):
    Ho, Wo = H // 2, W // 2

    def conv_bn_relu(pad_ref, w_ref, scale, bias, c_in):
        # K-stack the 3 kx taps once per layer: (H+2, W, 3*c_in) bf16 slab.
        # Each ky then needs a single MXU dot with K = 3*c_in (3 dots/layer
        # instead of 9 with K = c_in).
        xk = jnp.concatenate(
            [pad_ref[:, 0:W, :], pad_ref[:, 1:W + 1, :], pad_ref[:, 2:W + 2, :]],
            axis=-1)
        acc = None
        for ky in range(3):
            patch = xk[ky:ky + H].reshape(H * W, 3 * c_in)          # bf16
            d = jnp.dot(patch, w_ref[ky], preferred_element_type=jnp.float32)
            acc = d if acc is None else acc + d
        # Folded BatchNorm + ReLU epilogue in f32 (v5e has no bf16 VPU).
        return jnp.maximum(acc * scale + bias, 0.0)                  # (H*W, cout)

    def kernel(*refs):
        x_ref = refs[0]                                     # (1, H, W, cin)  bf16
        layer_refs = refs[1:1 + 3 * n_layers]               # (w, scale, bias)/layer
        skip_ref = refs[1 + 3 * n_layers]                   # (1, H, W, cout)    f32
        pool_ref = refs[2 + 3 * n_layers]                   # (1, Ho, Wo, cout)  f32
        pad_in, pad_mid, row_s = refs[3 + 3 * n_layers:]    # VMEM scratch

        # Zero only the 1-pixel halo strips (the interior is fully overwritten
        # below): O((H+W)*C) stores instead of O(H*W*C) memsets.  Done every
        # grid step so "parallel" batch sharding across TensorCores is safe.
        def zero_halo(pad, c):
            z_row = jnp.zeros((1, W + 2, c), jnp.bfloat16)
            pad[0:1, :, :] = z_row
            pad[H + 1:H + 2, :, :] = z_row
            z_col = jnp.zeros((H + 2, 1, c), jnp.bfloat16)
            pad[:, 0:1, :] = z_col
            pad[:, W + 1:W + 2, :] = z_col

        zero_halo(pad_in, cin)
        zero_halo(pad_mid, cout)

        # Stage the (already bf16) input tile into the padded scratch interior:
        # halo handled in-kernel, no wrapper-side jnp.pad / HBM round trip.
        # TODO(synk): the +1 W offset makes this a sublane-offset store; if
        #             bundle dumps show it masked/slow, handle the kx halo with
        #             pltpu.roll instead of physical W padding.
        pad_in[1:H + 1, 1:W + 1, :] = x_ref[0]

        y = None
        src, c_in = pad_in, cin
        for l in range(n_layers):
            w_ref, s_ref, b_ref = layer_refs[3 * l:3 * l + 3]
            y = conv_bn_relu(src, w_ref, s_ref[...], b_ref[...], c_in)
            if l + 1 < n_layers:
                # Intermediate activation never leaves VMEM; exactly one
                # f32->bf16 cast when staging into the padded scratch.
                pad_mid[1:H + 1, 1:W + 1, :] = (
                    y.reshape(H, W, cout).astype(jnp.bfloat16))
                src, c_in = pad_mid, cout

        y_hw = y.reshape(H, W, cout)
        # Skip output: single dense (H, W, C) store.
        skip_ref[0] = y_hw

        # 2x2 / stride-2 max pool, fully vectorised:
        #   - row pairs via a major-dim-only (layout preserving) reshape,
        #   - column pairs via stride-2 VMEM reads of a small scratch,
        #   - one dense (Ho, Wo, C) store.
        y4 = y_hw.reshape(Ho, 2, W, cout)
        row_s[...] = jnp.maximum(y4[:, 0], y4[:, 1])                 # (Ho, W, cout)
        pool_ref[0] = jnp.maximum(row_s[:, pl.ds(0, Wo, 2), :],      # cols 0,2,4,...
                                  row_s[:, pl.ds(1, Wo, 2), :])      # cols 1,3,5,...

    return kernel


# ----------------------------------------------------------------------------
# Wrappers
# ----------------------------------------------------------------------------
def _fold_bn(p):
    scale = p["gamma"] / jnp.sqrt(p["var"] + BN_EPS)
    bias = p["beta"] + scale * (p["b"] - p["mean"])
    return (scale.reshape(1, -1).astype(jnp.float32),
            bias.reshape(1, -1).astype(jnp.float32))


def down_block_forward_nhwc(x_nhwc, params):
    """Fused DownBlock on NHWC input. Returns (pooled, skip), both NHWC f32."""
    N, H, W, Cin = x_nhwc.shape
    assert H % 2 == 0 and W % 2 == 0, "MaxPool2d(2,2) requires even H and W"
    convs = params["convs"]
    n_layers = len(convs)
    Cout = convs[0]["w"].shape[-1]
    Ho, Wo = H // 2, W // 2

    args = [x_nhwc.astype(jnp.bfloat16)]            # halves activation DMA bytes
    in_specs = [pl.BlockSpec((1, H, W, Cin), lambda n: (n, 0, 0, 0))]
    for p in convs:
        assert p["w"].shape[:2] == (3, 3)
        cin_l = p["w"].shape[2]
        scale, bias = _fold_bn(p)
        # Pre-stack the kx taps in the weights: (3,3,cin,cout) -> (3, 3*cin, cout),
        # matching the channel-concat order used in the kernel.
        w_k = p["w"].astype(jnp.bfloat16).reshape(3, 3 * cin_l, Cout)
        args += [w_k, scale, bias]
        in_specs += [
            pl.BlockSpec((3, 3 * cin_l, Cout), lambda n: (0, 0, 0)),
            pl.BlockSpec((1, Cout), lambda n: (0, 0)),
            pl.BlockSpec((1, Cout), lambda n: (0, 0)),
        ]

    kernel = _make_down_block_kernel(n_layers, H, W, Cin, Cout)
    skip, pooled = pl.pallas_call(
        kernel,
        out_shape=(jax.ShapeDtypeStruct((N, H, W, Cout), jnp.float32),
                   jax.ShapeDtypeStruct((N, Ho, Wo, Cout), jnp.float32)),
        grid_spec=pltpu.PrefetchScalarGridSpec(
            num_scalar_prefetch=0,
            grid=(N,),
            in_specs=in_specs,
            out_specs=[
                pl.BlockSpec((1, H, W, Cout), lambda n: (n, 0, 0, 0)),
                pl.BlockSpec((1, Ho, Wo, Cout), lambda n: (n, 0, 0, 0)),
            ],
            scratch_shapes=[
                pltpu.VMEM((H + 2, W + 2, Cin), jnp.bfloat16),    # padded input
                pltpu.VMEM((H + 2, W + 2, Cout), jnp.bfloat16),   # padded mid act
                pltpu.VMEM((Ho, W, Cout), jnp.float32),           # row-pooled
            ],
        ),
        compiler_params=pltpu.CompilerParams(
            dimension_semantics=("parallel",),
            # Above the 16/32 MiB scoped defaults, still <= v7x's 64 MiB VMEM.
            vmem_limit_bytes=48 * 1024 * 1024,
        ),
    )(*args)
    return pooled, skip


def down_block_forward(x_nchw, params):
    """DownBlock.forward: NCHW in, (pooled, skip) NCHW out (PyTorch layout).

    TODO(synk): if the surrounding model can stay NHWC end-to-end, call
                down_block_forward_nhwc directly and drop these transposes
                (they are extra HBM read+writes of the largest tensors).
    """
    x = jnp.transpose(x_nchw, (0, 2, 3, 1))                  # NCHW -> NHWC
    pooled, skip = down_block_forward_nhwc(x, params)
    return (jnp.transpose(pooled, (0, 3, 1, 2)),
            jnp.transpose(skip, (0, 3, 1, 2)))


# ----------------------------------------------------------------------------
# Parameter setup (deterministic, synthetic)
# ----------------------------------------------------------------------------
def init_conv_bn_params(key, cin, cout):
    kw, kb = jax.random.split(key)
    w = jax.random.normal(kw, (3, 3, cin, cout), jnp.float32) / jnp.sqrt(9.0 * cin)
    b = 0.1 * jax.random.normal(kb, (cout,), jnp.float32)
    idx = jnp.arange(cout, dtype=jnp.float32)
    return dict(w=w, b=b,
                gamma=1.0 + 0.05 * idx, beta=0.02 * idx - 0.03,
                mean=0.01 * idx, var=1.0 + 0.1 * idx)


def init_down_block_params(key, in_channels, out_channels):
    keys = jax.random.split(key, 3)
    convs = [init_conv_bn_params(keys[0], in_channels, out_channels),
             init_conv_bn_params(keys[1], out_channels, out_channels)]
    if out_channels == 256:              # mirrors the PyTorch conv_3 condition
        convs.append(init_conv_bn_params(keys[2], out_channels, out_channels))
    return dict(convs=convs)


# ----------------------------------------------------------------------------
# Pure-JAX reference (same dtype policy: bf16 conv operands, f32 accum/epilogue)
# ----------------------------------------------------------------------------
def _reference_forward(x_nchw, params):
    x = jnp.transpose(x_nchw, (0, 2, 3, 1)).astype(jnp.float32)
    for p in params["convs"]:
        y = lax.conv_general_dilated(
            x.astype(jnp.bfloat16), p["w"].astype(jnp.bfloat16),
            window_strides=(1, 1), padding=((1, 1), (1, 1)),
            dimension_numbers=("NHWC", "HWIO", "NHWC"),
            preferred_element_type=jnp.float32)
        y = y + p["b"]
        y = (y - p["mean"]) / jnp.sqrt(p["var"] + BN_EPS) * p["gamma"] + p["beta"]
        x = jnp.maximum(y, 0.0)
    skip = x
    N, H, W, C = x.shape
    pooled = x.reshape(N, H // 2, 2, W // 2, 2, C).max(axis=(2, 4))
    return (jnp.transpose(pooled, (0, 3, 1, 2)),
            jnp.transpose(skip, (0, 3, 1, 2)))


if __name__ == "__main__":
    key = jax.random.PRNGKey(0)
    k_x1, k_p1, k_x2, k_p2 = jax.random.split(key, 4)

    configs = [
        # DownBlock(4 -> 8): two ConvBNReLU stages, N=2, 16x16 spatial.
        (jax.random.normal(k_x1, (2, 4, 16, 16), jnp.float32),
         init_down_block_params(k_p1, 4, 8)),
        # DownBlock(16 -> 256): exercises the conv_3 branch, N=1, 8x8 spatial.
        (jax.random.normal(k_x2, (1, 16, 8, 8), jnp.float32),
         init_down_block_params(k_p2, 16, 256)),
    ]

    for x, params in configs:
        pooled, skip = down_block_forward(x, params)
        jax.block_until_ready((pooled, skip))
        want_pooled, want_skip = _reference_forward(x, params)
        for got, want in ((pooled, want_pooled), (skip, want_skip)):
            assert got.shape == want.shape, (got.shape, want.shape)
            err = float(jnp.max(jnp.abs(got - want)))
            # bf16 MXU operands in both paths -> 2e-2 relative tolerance.
            tol = 2e-2 * (1.0 + float(jnp.max(jnp.abs(want))))
            if err > tol:
                raise AssertionError(
                    f"mismatch vs reference: max abs err {err:.3e} > tol {tol:.3e}")

    print("KERNEL_OK")
</pallas_src>

<mosaic_0001>
module attributes {stable_mosaic.version = 11 : i64} {
  func.func @kernel(%arg0: i32, %arg1: memref<1x16x16x4xbf16, #tpu.memory_space<vmem>>, %arg2: memref<3x12x8xbf16, #tpu.memory_space<vmem>>, %arg3: memref<1x8xf32, #tpu.memory_space<vmem>>, %arg4: memref<1x8xf32, #tpu.memory_space<vmem>>, %arg5: memref<3x24x8xbf16, #tpu.memory_space<vmem>>, %arg6: memref<1x8xf32, #tpu.memory_space<vmem>>, %arg7: memref<1x8xf32, #tpu.memory_space<vmem>>, %arg8: memref<1x16x16x8xf32, #tpu.memory_space<vmem>>, %arg9: memref<1x8x8x8xf32, #tpu.memory_space<vmem>>, %arg10: memref<18x18x4xbf16, #tpu.memory_space<vmem>>, %arg11: memref<18x18x8xbf16, #tpu.memory_space<vmem>>, %arg12: memref<8x16x8xf32, #tpu.memory_space<vmem>>) attributes {dimension_semantics = [#tpu.dimension_semantics<parallel>], iteration_bounds = array<i64: 2>, scalar_prefetch = 0 : i64, scratch_operands = 3 : i64, tpu.core_type = #tpu.core_type<tc>, window_params = [{transform_indices = @transform_0, window_bounds = array<i64: 1, 16, 16, 4>}, {pipeline_mode = #tpu.pipeline_mode<synchronous>, transform_indices = @transform_1, window_bounds = array<i64: 3, 12, 8>}, {pipeline_mode = #tpu.pipeline_mode<synchronous>, transform_indices = @transform_2, window_bounds = array<i64: 1, 8>}, {pipeline_mode = #tpu.pipeline_mode<synchronous>, transform_indices = @transform_3, window_bounds = array<i64: 1, 8>}, {pipeline_mode = #tpu.pipeline_mode<synchronous>, transform_indices = @transform_4, window_bounds = array<i64: 3, 24, 8>}, {pipeline_mode = #tpu.pipeline_mode<synchronous>, transform_indices = @transform_5, window_bounds = array<i64: 1, 8>}, {pipeline_mode = #tpu.pipeline_mode<synchronous>, transform_indices = @transform_6, window_bounds = array<i64: 1, 8>}, {transform_indices = @transform_7, window_bounds = array<i64: 1, 16, 16, 8>}, {transform_indices = @transform_8, window_bounds = array<i64: 1, 8, 8, 8>}]} {
    %cst = arith.constant 0.000000e+00 : bf16
    %0 = vector.broadcast %cst : bf16 to vector<1x18x4xbf16>
    %c0 = arith.constant 0 : index
    %c0_0 = arith.constant 0 : index
    %c0_1 = arith.constant 0 : index
    %1 = vector.load %arg10[%c0, %c0_0, %c0_1] : memref<18x18x4xbf16, #tpu.memory_space<vmem>>, vector<1x18x4xbf16>
    tpu.vector_store %arg10[%c0, %c0_0, %c0_1], %0 {strides = array<i32>} : memref<18x18x4xbf16, #tpu.memory_space<vmem>>, vector<1x18x4xbf16>,
    %c17 = arith.constant 17 : index
    %c0_2 = arith.constant 0 : index
    %c0_3 = arith.constant 0 : index
    %2 = vector.load %arg10[%c17, %c0_2, %c0_3] : memref<18x18x4xbf16, #tpu.memory_space<vmem>>, vector<1x18x4xbf16>
    tpu.vector_store %arg10[%c17, %c0_2, %c0_3], %0 {strides = array<i32>} : memref<18x18x4xbf16, #tpu.memory_space<vmem>>, vector<1x18x4xbf16>,
    %cst_4 = arith.constant 0.000000e+00 : bf16
    %3 = vector.broadcast %cst_4 : bf16 to vector<18x1x4xbf16>
    %c0_5 = arith.constant 0 : index
    %c0_6 = arith.constant 0 : index
    %c0_7 = arith.constant 0 : index
    %4 = vector.load %arg10[%c0_5, %c0_6, %c0_7] : memref<18x18x4xbf16, #tpu.memory_space<vmem>>, vector<18x1x4xbf16>
    tpu.vector_store %arg10[%c0_5, %c0_6, %c0_7], %3 {strides = array<i32>} : memref<18x18x4xbf16, #tpu.memory_space<vmem>>, vector<18x1x4xbf16>,
    %c0_8 = arith.constant 0 : index
    %c17_9 = arith.constant 17 : index
    %c0_10 = arith.constant 0 : index
    %5 = vector.load %arg10[%c0_8, %c17_9, %c0_10] : memref<18x18x4xbf16, #tpu.memory_space<vmem>>, vector<18x1x4xbf16>
    tpu.vector_store %arg10[%c0_8, %c17_9, %c0_10], %3 {strides = array<i32>} : memref<18x18x4xbf16, #tpu.memory_space<vmem>>, vector<18x1x4xbf16>,
    %cst_11 = arith.constant 0.000000e+00 : bf16
    %6 = vector.broadcast %cst_11 : bf16 to vector<1x18x8xbf16>
    %c0_12 = arith.constant 0 : index
    %c0_13 = arith.constant 0 : index
    %c0_14 = arith.constant 0 : index
    %7 = vector.load %arg11[%c0_12, %c0_13, %c0_14] : memref<18x18x8xbf16, #tpu.memory_space<vmem>>, vector<1x18x8xbf16>
    tpu.vector_store %arg11[%c0_12, %c0_13, %c0_14], %6 {strides = array<i32>} : memref<18x18x8xbf16, #tpu.memory_space<vmem>>, vector<1x18x8xbf16>,
    %c17_15 = arith.constant 17 : index
    %c0_16 = arith.constant 0 : index
    %c0_17 = arith.constant 0 : index
    %8 = vector.load %arg11[%c17_15, %c0_16, %c0_17] : memref<18x18x8xbf16, #tpu.memory_space<vmem>>, vector<1x18x8xbf16>
    tpu.vector_store %arg11[%c17_15, %c0_16, %c0_17], %6 {strides = array<i32>} : memref<18x18x8xbf16, #tpu.memory_space<vmem>>, vector<1x18x8xbf16>,
    %cst_18 = arith.constant 0.000000e+00 : bf16
    %9 = vector.broadcast %cst_18 : bf16 to vector<18x1x8xbf16>
    %c0_19 = arith.constant 0 : index
    %c0_20 = arith.constant 0 : index
    %c0_21 = arith.constant 0 : index
    %10 = vector.load %arg11[%c0_19, %c0_20, %c0_21] : memref<18x18x8xbf16, #tpu.memory_space<vmem>>, vector<18x1x8xbf16>
    tpu.vector_store %arg11[%c0_19, %c0_20, %c0_21], %9 {strides = array<i32>} : memref<18x18x8xbf16, #tpu.memory_space<vmem>>, vector<18x1x8xbf16>,
    %c0_22 = arith.constant 0 : index
    %c17_23 = arith.constant 17 : index
    %c0_24 = arith.constant 0 : index
    %11 = vector.load %arg11[%c0_22, %c17_23, %c0_24] : memref<18x18x8xbf16, #tpu.memory_space<vmem>>, vector<18x1x8xbf16>
    tpu.vector_store %arg11[%c0_22, %c17_23, %c0_24], %9 {strides = array<i32>} : memref<18x18x8xbf16, #tpu.memory_space<vmem>>, vector<18x1x8xbf16>,
    %c0_25 = arith.constant 0 : index
    %c0_26 = arith.constant 0 : index
    %c0_27 = arith.constant 0 : index
    %c0_28 = arith.constant 0 : index
    %12 = vector.load %arg1[%c0_25, %c0_26, %c0_27, %c0_28] : memref<1x16x16x4xbf16, #tpu.memory_space<vmem>>, vector<1x16x16x4xbf16>
    %13 = vector.shape_cast %12 : vector<1x16x16x4xbf16> to vector<16x16x4xbf16>
    %c1 = arith.constant 1 : index
    %c1_29 = arith.constant 1 : index
    %c0_30 = arith.constant 0 : index
    %14 = vector.load %arg10[%c1, %c1_29, %c0_30] : memref<18x18x4xbf16, #tpu.memory_space<vmem>>, vector<16x16x4xbf16>
    tpu.vector_store %arg10[%c1, %c1_29, %c0_30], %13 {strides = array<i32>} : memref<18x18x4xbf16, #tpu.memory_space<vmem>>, vector<16x16x4xbf16>,
    %c0_31 = arith.constant 0 : index
    %c0_32 = arith.constant 0 : index
    %15 = vector.load %arg3[%c0_31, %c0_32] : memref<1x8xf32, #tpu.memory_space<vmem>>, vector<1x8xf32>
    %c0_33 = arith.constant 0 : index
    %c0_34 = arith.constant 0 : index
    %16 = vector.load %arg4[%c0_33, %c0_34] : memref<1x8xf32, #tpu.memory_space<vmem>>, vector<1x8xf32>
    %c0_35 = arith.constant 0 : index
    %c0_36 = arith.constant 0 : index
    %c0_37 = arith.constant 0 : index
    %17 = vector.load %arg10[%c0_35, %c0_36, %c0_37] : memref<18x18x4xbf16, #tpu.memory_space<vmem>>, vector<18x16x4xbf16>
    %c0_38 = arith.constant 0 : index
    %c1_39 = arith.constant 1 : index
    %c0_40 = arith.constant 0 : index
    %18 = vector.load %arg10[%c0_38, %c1_39, %c0_40] : memref<18x18x4xbf16, #tpu.memory_space<vmem>>, vector<18x16x4xbf16>
    %c0_41 = arith.constant 0 : index
    %c2 = arith.constant 2 : index
    %c0_42 = arith.constant 0 : index
    %19 = vector.load %arg10[%c0_41, %c2, %c0_42] : memref<18x18x4xbf16, #tpu.memory_space<vmem>>, vector<18x16x4xbf16>
    %20 = tpu.concatenate %17, %18, %19 in 2 : vector<18x16x4xbf16>, vector<18x16x4xbf16>, vector<18x16x4xbf16> -> vector<18x16x12xbf16>
    %21 = vector.extract_strided_slice %20 {offsets = [0, 0, 0], sizes = [16, 16, 12], strides = [1, 1, 1]} : vector<18x16x12xbf16> to vector<16x16x12xbf16>
    %22 = vector.shape_cast %21 : vector<16x16x12xbf16> to vector<256x12xbf16>
    %c0_43 = arith.constant 0 : index
    %c0_44 = arith.constant 0 : index
    %c0_45 = arith.constant 0 : index
    %23 = vector.load %arg2[%c0_43, %c0_44, %c0_45] : memref<3x12x8xbf16, #tpu.memory_space<vmem>>, vector<1x12x8xbf16>
    %24 = vector.shape_cast %23 : vector<1x12x8xbf16> to vector<12x8xbf16>
    %cst_46 = arith.constant dense<0.000000e+00> : vector<256x8xf32>
    %25 = tpu.matmul %22, %24, %cst_46 {dimension_numbers = #tpu.dot_dimension_numbers<[1], [0], [0], [1], [0, 0, 1, 1], [], []>} : vector<256x12xbf16>, vector<12x8xbf16>, vector<256x8xf32> -> vector<256x8xf32>
    %26 = vector.extract_strided_slice %20 {offsets = [1, 0, 0], sizes = [16, 16, 12], strides = [1, 1, 1]} : vector<18x16x12xbf16> to vector<16x16x12xbf16>
    %27 = vector.shape_cast %26 : vector<16x16x12xbf16> to vector<256x12xbf16>
    %c1_47 = arith.constant 1 : index
    %c0_48 = arith.constant 0 : index
    %c0_49 = arith.constant 0 : index
    %28 = vector.load %arg2[%c1_47, %c0_48, %c0_49] : memref<3x12x8xbf16, #tpu.memory_space<vmem>>, vector<1x12x8xbf16>
    %29 = vector.shape_cast %28 : vector<1x12x8xbf16> to vector<12x8xbf16>
    %cst_50 = arith.constant dense<0.000000e+00> : vector<256x8xf32>
    %30 = tpu.matmul %27, %29, %cst_50 {dimension_numbers = #tpu.dot_dimension_numbers<[1], [0], [0], [1], [0, 0, 1, 1], [], []>} : vector<256x12xbf16>, vector<12x8xbf16>, vector<256x8xf32> -> vector<256x8xf32>
    %31 = arith.addf %25, %30 : vector<256x8xf32>
    %32 = vector.extract_strided_slice %20 {offsets = [2, 0, 0], sizes = [16, 16, 12], strides = [1, 1, 1]} : vector<18x16x12xbf16> to vector<16x16x12xbf16>
    %33 = vector.shape_cast %32 : vector<16x16x12xbf16> to vector<256x12xbf16>
    %c2_51 = arith.constant 2 : index
    %c0_52 = arith.constant 0 : index
    %c0_53 = arith.constant 0 : index
    %34 = vector.load %arg2[%c2_51, %c0_52, %c0_53] : memref<3x12x8xbf16, #tpu.memory_space<vmem>>, vector<1x12x8xbf16>
    %35 = vector.shape_cast %34 : vector<1x12x8xbf16> to vector<12x8xbf16>
    %cst_54 = arith.constant dense<0.000000e+00> : vector<256x8xf32>
    %36 = tpu.matmul %33, %35, %cst_54 {dimension_numbers = #tpu.dot_dimension_numbers<[1], [0], [0], [1], [0, 0, 1, 1], [], []>} : vector<256x12xbf16>, vector<12x8xbf16>, vector<256x8xf32> -> vector<256x8xf32>
    %37 = arith.addf %31, %36 : vector<256x8xf32>
    %38 = vector.broadcast %15 : vector<1x8xf32> to vector<256x8xf32>
    %39 = arith.mulf %37, %38 : vector<256x8xf32>
    %40 = vector.broadcast %16 : vector<1x8xf32> to vector<256x8xf32>
    %41 = arith.addf %39, %40 : vector<256x8xf32>
    %cst_55 = arith.constant 0.000000e+00 : f32
    %42 = vector.broadcast %cst_55 : f32 to vector<256x8xf32>
    %43 = arith.maximumf %41, %42 : vector<256x8xf32>
    %44 = vector.shape_cast %43 : vector<256x8xf32> to vector<16x16x8xf32>
    %45 = arith.truncf %44 : vector<16x16x8xf32> to vector<16x16x8xbf16>
    %c1_56 = arith.constant 1 : index
    %c1_57 = arith.constant 1 : index
    %c0_58 = arith.constant 0 : index
    %46 = vector.load %arg11[%c1_56, %c1_57, %c0_58] : memref<18x18x8xbf16, #tpu.memory_space<vmem>>, vector<16x16x8xbf16>
    tpu.vector_store %arg11[%c1_56, %c1_57, %c0_58], %45 {strides = array<i32>} : memref<18x18x8xbf16, #tpu.memory_space<vmem>>, vector<16x16x8xbf16>,
    %c0_59 = arith.constant 0 : index
    %c0_60 = arith.constant 0 : index
    %47 = vector.load %arg6[%c0_59, %c0_60] : memref<1x8xf32, #tpu.memory_space<vmem>>, vector<1x8xf32>
    %c0_61 = arith.constant 0 : index
    %c0_62 = arith.constant 0 : index
    %48 = vector.load %arg7[%c0_61, %c0_62] : memref<1x8xf32, #tpu.memory_space<vmem>>, vector<1x8xf32>
    %c0_63 = arith.constant 0 : index
    %c0_64 = arith.constant 0 : index
    %c0_65 = arith.constant 0 : index
    %49 = vector.load %arg11[%c0_63, %c0_64, %c0_65] : memref<18x18x8xbf16, #tpu.memory_space<vmem>>, vector<18x16x8xbf16>
    %c0_66 = arith.constant 0 : index
    %c1_67 = arith.constant 1 : index
    %c0_68 = arith.constant 0 : index
    %50 = vector.load %arg11[%c0_66, %c1_67, %c0_68] : memref<18x18x8xbf16, #tpu.memory_space<vmem>>, vector<18x16x8xbf16>
    %c0_69 = arith.constant 0 : index
    %c2_70 = arith.constant 2 : index
    %c0_71 = arith.constant 0 : index
    %51 = vector.load %arg11[%c0_69, %c2_70, %c0_71] : memref<18x18x8xbf16, #tpu.memory_space<vmem>>, vector<18x16x8xbf16>
    %52 = tpu.concatenate %49, %50, %51 in 2 : vector<18x16x8xbf16>, vector<18x16x8xbf16>, vector<18x16x8xbf16> -> vector<18x16x24xbf16>
    %53 = vector.extract_strided_slice %52 {offsets = [0, 0, 0], sizes = [16, 16, 24], strides = [1, 1, 1]} : vector<18x16x24xbf16> to vector<16x16x24xbf16>
    %54 = vector.shape_cast %53 : vector<16x16x24xbf16> to vector<256x24xbf16>
    %c0_72 = arith.constant 0 : index
    %c0_73 = arith.constant 0 : index
    %c0_74 = arith.constant 0 : index
    %55 = vector.load %arg5[%c0_72, %c0_73, %c0_74] : memref<3x24x8xbf16, #tpu.memory_space<vmem>>, vector<1x24x8xbf16>
    %56 = vector.shape_cast %55 : vector<1x24x8xbf16> to vector<24x8xbf16>
    %cst_75 = arith.constant dense<0.000000e+00> : vector<256x8xf32>
    %57 = tpu.matmul %54, %56, %cst_75 {dimension_numbers = #tpu.dot_dimension_numbers<[1], [0], [0], [1], [0, 0, 1, 1], [], []>} : vector<256x24xbf16>, vector<24x8xbf16>, vector<256x8xf32> -> vector<256x8xf32>
    %58 = vector.extract_strided_slice %52 {offsets = [1, 0, 0], sizes = [16, 16, 24], strides = [1, 1, 1]} : vector<18x16x24xbf16> to vector<16x16x24xbf16>
    %59 = vector.shape_cast %58 : vector<16x16x24xbf16> to vector<256x24xbf16>
    %c1_76 = arith.constant 1 : index
    %c0_77 = arith.constant 0 : index
    %c0_78 = arith.constant 0 : index
    %60 = vector.load %arg5[%c1_76, %c0_77, %c0_78] : memref<3x24x8xbf16, #tpu.memory_space<vmem>>, vector<1x24x8xbf16>
    %61 = vector.shape_cast %60 : vector<1x24x8xbf16> to vector<24x8xbf16>
    %cst_79 = arith.constant dense<0.000000e+00> : vector<256x8xf32>
    %62 = tpu.matmul %59, %61, %cst_79 {dimension_numbers = #tpu.dot_dimension_numbers<[1], [0], [0], [1], [0, 0, 1, 1], [], []>} : vector<256x24xbf16>, vector<24x8xbf16>, vector<256x8xf32> -> vector<256x8xf32>
    %63 = arith.addf %57, %62 : vector<256x8xf32>
    %64 = vector.extract_strided_slice %52 {offsets = [2, 0, 0], sizes = [16, 16, 24], strides = [1, 1, 1]} : vector<18x16x24xbf16> to vector<16x16x24xbf16>
    %65 = vector.shape_cast %64 : vector<16x16x24xbf16> to vector<256x24xbf16>
    %c2_80 = arith.constant 2 : index
    %c0_81 = arith.constant 0 : index
    %c0_82 = arith.constant 0 : index
    %66 = vector.load %arg5[%c2_80, %c0_81, %c0_82] : memref<3x24x8xbf16, #tpu.memory_space<vmem>>, vector<1x24x8xbf16>
    %67 = vector.shape_cast %66 : vector<1x24x8xbf16> to vector<24x8xbf16>
    %cst_83 = arith.constant dense<0.000000e+00> : vector<256x8xf32>
    %68 = tpu.matmul %65, %67, %cst_83 {dimension_numbers = #tpu.dot_dimension_numbers<[1], [0], [0], [1], [0, 0, 1, 1], [], []>} : vector<256x24xbf16>, vector<24x8xbf16>, vector<256x8xf32> -> vector<256x8xf32>
    %69 = arith.addf %63, %68 : vector<256x8xf32>
    %70 = vector.broadcast %47 : vector<1x8xf32> to vector<256x8xf32>
    %71 = arith.mulf %69, %70 : vector<256x8xf32>
    %72 = vector.broadcast %48 : vector<1x8xf32> to vector<256x8xf32>
    %73 = arith.addf %71, %72 : vector<256x8xf32>
    %cst_84 = arith.constant 0.000000e+00 : f32
    %74 = vector.broadcast %cst_84 : f32 to vector<256x8xf32>
    %75 = arith.maximumf %73, %74 : vector<256x8xf32>
    %76 = vector.shape_cast %75 : vector<256x8xf32> to vector<16x16x8xf32>
    %c0_85 = arith.constant 0 : index
    %c0_86 = arith.constant 0 : index
    %c0_87 = arith.constant 0 : index
    %c0_88 = arith.constant 0 : index
    %77 = vector.load %arg8[%c0_85, %c0_86, %c0_87, %c0_88] : memref<1x16x16x8xf32, #tpu.memory_space<vmem>>, vector<1x16x16x8xf32>
    %78 = vector.shape_cast %77 : vector<1x16x16x8xf32> to vector<16x16x8xf32>
    %79 = vector.shape_cast %76 : vector<16x16x8xf32> to vector<1x16x16x8xf32>
    tpu.vector_store %arg8[%c0_85, %c0_86, %c0_87, %c0_88], %79 {strides = array<i32>} : memref<1x16x16x8xf32, #tpu.memory_space<vmem>>, vector<1x16x16x8xf32>,
    %80 = vector.shape_cast %76 : vector<16x16x8xf32> to vector<8x2x16x8xf32>
    %81 = vector.extract_strided_slice %80 {offsets = [0, 0, 0, 0], sizes = [8, 1, 16, 8], strides = [1, 1, 1, 1]} : vector<8x2x16x8xf32> to vector<8x1x16x8xf32>
    %82 = vector.shape_cast %81 : vector<8x1x16x8xf32> to vector<8x16x8xf32>
    %83 = vector.extract_strided_slice %80 {offsets = [0, 1, 0, 0], sizes = [8, 1, 16, 8], strides = [1, 1, 1, 1]} : vector<8x2x16x8xf32> to vector<8x1x16x8xf32>
    %84 = vector.shape_cast %83 : vector<8x1x16x8xf32> to vector<8x16x8xf32>
    %85 = arith.maximumf %82, %84 : vector<8x16x8xf32>
    %c0_89 = arith.constant 0 : index
    %c0_90 = arith.constant 0 : index
    %c0_91 = arith.constant 0 : index
    %86 = vector.load %arg12[%c0_89, %c0_90, %c0_91] : memref<8x16x8xf32, #tpu.memory_space<vmem>>, vector<8x16x8xf32>
    tpu.vector_store %arg12[%c0_89, %c0_90, %c0_91], %85 {strides = array<i32>} : memref<8x16x8xf32, #tpu.memory_space<vmem>>, vector<8x16x8xf32>,
    %c0_92 = arith.constant 0 : index
    %c0_93 = arith.constant 0 : index
    %c0_94 = arith.constant 0 : index
    %87 = tpu.strided_load %arg12[%c0_92, %c0_93, %c0_94] {strides = array<i32: 1, 2, 1>} : memref<8x16x8xf32, #tpu.memory_space<vmem>>, vector<8x8x8xf32>
    %c0_95 = arith.constant 0 : index
    %c1_96 = arith.constant 1 : index
    %c0_97 = arith.constant 0 : index
    %88 = tpu.strided_load %arg12[%c0_95, %c1_96, %c0_97] {strides = array<i32: 1, 2, 1>} : memref<8x16x8xf32, #tpu.memory_space<vmem>>, vector<8x8x8xf32>
    %89 = arith.maximumf %87, %88 : vector<8x8x8xf32>
    %c0_98 = arith.constant 0 : index
    %c0_99 = arith.constant 0 : index
    %c0_100 = arith.constant 0 : index
    %c0_101 = arith.constant 0 : index
    %90 = vector.load %arg9[%c0_98, %c0_99, %c0_100, %c0_101] : memref<1x8x8x8xf32, #tpu.memory_space<vmem>>, vector<1x8x8x8xf32>
    %91 = vector.shape_cast %90 : vector<1x8x8x8xf32> to vector<8x8x8xf32>
    %92 = vector.shape_cast %89 : vector<8x8x8xf32> to vector<1x8x8x8xf32>
    tpu.vector_store %arg9[%c0_98, %c0_99, %c0_100, %c0_101], %92 {strides = array<i32>} : memref<1x8x8x8xf32, #tpu.memory_space<vmem>>, vector<1x8x8x8xf32>,
    return
  }
  func.func @transform_0(%arg0: i32) -> (i32, i32, i32, i32) {
    %c0_i32 = arith.constant 0 : i32
    %c0_i32_0 = arith.constant 0 : i32
    %c0_i32_1 = arith.constant 0 : i32
    %c0_i32_2 = arith.constant 0 : i32
    return %arg0, %c0_i32, %c0_i32_0, %c0_i32_1 : i32, i32, i32, i32
  }
  func.func @transform_1(%arg0: i32) -> (i32, i32, i32) {
    %c0_i32 = arith.constant 0 : i32
    %c0_i32_0 = arith.constant 0 : i32
    %c0_i32_1 = arith.constant 0 : i32
    %c0_i32_2 = arith.constant 0 : i32
    return %c0_i32, %c0_i32_0, %c0_i32_1 : i32, i32, i32
  }
  func.func @transform_2(%arg0: i32) -> (i32, i32) {
    %c0_i32 = arith.constant 0 : i32
    %c0_i32_0 = arith.constant 0 : i32
    %c0_i32_1 = arith.constant 0 : i32
    return %c0_i32, %c0_i32_0 : i32, i32
  }
  func.func @transform_3(%arg0: i32) -> (i32, i32) {
    %c0_i32 = arith.constant 0 : i32
    %c0_i32_0 = arith.constant 0 : i32
    %c0_i32_1 = arith.constant 0 : i32
    return %c0_i32, %c0_i32_0 : i32, i32
  }
  func.func @transform_4(%arg0: i32) -> (i32, i32, i32) {
    %c0_i32 = arith.constant 0 : i32
    %c0_i32_0 = arith.constant 0 : i32
    %c0_i32_1 = arith.constant 0 : i32
    %c0_i32_2 = arith.constant 0 : i32
    return %c0_i32, %c0_i32_0, %c0_i32_1 : i32, i32, i32
  }
  func.func @transform_5(%arg0: i32) -> (i32, i32) {
    %c0_i32 = arith.constant 0 : i32
    %c0_i32_0 = arith.constant 0 : i32
    %c0_i32_1 = arith.constant 0 : i32
    return %c0_i32, %c0_i32_0 : i32, i32
  }
  func.func @transform_6(%arg0: i32) -> (i32, i32) {
    %c0_i32 = arith.constant 0 : i32
    %c0_i32_0 = arith.constant 0 : i32
    %c0_i32_1 = arith.constant 0 : i32
    return %c0_i32, %c0_i32_0 : i32, i32
  }
  func.func @transform_7(%arg0: i32) -> (i32, i32, i32, i32) {
    %c0_i32 = arith.constant 0 : i32
    %c0_i32_0 = arith.constant 0 : i32
    %c0_i32_1 = arith.constant 0 : i32
    %c0_i32_2 = arith.constant 0 : i32
    return %arg0, %c0_i32, %c0_i32_0, %c0_i32_1 : i32, i32, i32, i32
  }
  func.func @transform_8(%arg0: i32) -> (i32, i32, i32, i32) {
    %c0_i32 = arith.constant 0 : i32
    %c0_i32_0 = arith.constant 0 : i32
    %c0_i32_1 = arith.constant 0 : i32
    %c0_i32_2 = arith.constant 0 : i32
    return %arg0, %c0_i32, %c0_i32_0, %c0_i32_1 : i32, i32, i32, i32
  }
}

</mosaic_0001>

<llo_original>
// kernel: tpu_custom_call.1
$region0: #{tpu_custom_call.1}
  #allocation0 [shape = 'u32[]', space=smem, size = 0x4, offset = 0x4, fixed_abs, tag = 'smem constant byte address 0x4 - core index']
  #allocation1 [shape = 'u32[72,128]{1,0:T(1,128)}', space=vmem, size = 0x9000, scoped, tag = 'internal scratch']
  #allocation2 [shape = 'bf16[18,18,4]{2,1,0:T(8,128)(2,1)}', space=vmem, size = 0x1b000, scoped, tag = 'scratch operand']
  #allocation3 [shape = 'bf16[18,18,8]{2,1,0:T(8,128)(2,1)}', space=vmem, size = 0x1b000, scoped, tag = 'scratch operand']
  #allocation4 [shape = 'f32[8,16,8]{2,1,0:T(8,128)}', space=vmem, size = 0x10000, scoped, tag = 'scratch operand']
  %s0 = inlined_call_operand.vmem [shape: bf16[2,16,16,4], index: 0, kind: input, shape index: {}]
  %s1 = inlined_call_operand.vmem [shape: bf16[3,12,8], index: 1, kind: input, shape index: {}]
  %s2 = inlined_call_operand.vmem [shape: f32[1,8], index: 2, kind: input, shape index: {}]
  %s3 = inlined_call_operand.vmem [shape: f32[1,8], index: 3, kind: input, shape index: {}]
  %s4 = inlined_call_operand.vmem [shape: bf16[3,24,8], index: 4, kind: input, shape index: {}]
  %s5 = inlined_call_operand.vmem [shape: f32[1,8], index: 5, kind: input, shape index: {}]
  %s6 = inlined_call_operand.vmem [shape: f32[1,8], index: 6, kind: input, shape index: {}]
  %s7 = inlined_call_operand.vmem [shape: f32[2,16,16,8], index: 7, kind: output, shape index: {0}]
  %s8 = inlined_call_operand.hbm [shape: f32[2,8,8,8], index: 8, kind: output, shape index: {1}]
  %9 = xla_tuple %s7, %s8
  %s10 = sld [smem:[#allocation0]]
  $region69: #{tpu_custom_call.1} parent=0
    _
  %s12 = ssub.s32 1, %s10
  %s13 = scalar_select 0, %s12, %s10
  $region1: #{tpu_custom_call.1} parent=0
    #allocation5 [shape = 'u8[65536]{0}', space=vmem, size = 0x10000, scoped, tag = 'output window, operand 1']
    #allocation6 [shape = 's32[2]{0}', space=sflag, size = 0x8, scoped, tag = 'scoped memory for tpu_custom_call.1']
    %14 = vsyncpa [#allocation6], 0
    %s15 = scalar_lea.sflag [#allocation6], 1
    %16 = vsyncpa %s15, 0
    loop: start=0, step=1, limit=4
    $region2: #{tpu_custom_call.1} parent=1 // loop_pre_header
      _
    $region3: #{tpu_custom_call.1} parent=1 // loop_header
      %s18 = sphi 0, %s22
      %p19 = scmp.ge.s32.totalorder %s18, 4
      %s28 = sphi 0, %s30
      %s31 = sphi 0, %s28
      %s32 = sphi 0, %s31
      %s48 = sphi 0, %s32
      %s52 = sphi 0, %s52
      %s54 = sphi 0, %s52
      %s55 = sphi 0, %s54
      %s69 = sphi 0, %s55
      %s73 = sphi 0, %s73
      %s75 = sphi 0, %s73
      %s76 = sphi 0, %s75
      %s90 = sphi 0, %s76
      %s94 = sphi 0, %s94
      %s96 = sphi 0, %s94
      %s97 = sphi 0, %s96
      %s111 = sphi 0, %s97
      %s115 = sphi 0, %s115
      %s117 = sphi 0, %s115
      %s118 = sphi 0, %s117
      %s132 = sphi 0, %s118
      %s136 = sphi 0, %s136
      %s138 = sphi 0, %s136
      %s139 = sphi 0, %s138
      %s153 = sphi 0, %s139
      %s157 = sphi 0, %s157
      %s159 = sphi 0, %s157
      %s160 = sphi 0, %s159
      %s174 = sphi 0, %s160
      %s180 = sphi 0, %s182
      %s183 = sphi 0, %s180
      %s184 = sphi 0, %s183
      %s200 = sphi 0, %s184
      %s206 = sphi 0, %s208
      %s209 = sphi 0, %s206
      %s210 = sphi 0, %s209
      %s226 = sphi 0, %s210
    $region4: #{tpu_custom_call.1} parent=1 // loop_header_branch
      %21 = sbr.rel (%p19) target = $region8
    $region5: #{tpu_custom_call.1} parent=1 // loop_body
      %s23 = ssub.s32 %s18, 1
      %s24 = ssub.s32 %s18, 2
      %s25 = sadd.s32 %s18, 1
      %s26 = ssub.s32 %s18, %s25
      %p27 = scmp.eq.s32.totalorder %s26, 0
      %s29 = sadd.s32 %s28, 1
      %s30 = scalar_select %p27, %s28, %s29
      %p33 = pneg %p27
      %p34 = scmp.eq.s32.totalorder %s18, 1
      %p35 = por %p33, %p34
      %p36 = scmp.ne.s32.totalorder %s28, %s31
      %p37 = scmp.eq.s32.totalorder %s18, 0
      %p38 = por %p36, %p37
      %p39 = scmp.ne.s32.totalorder %s28, %s31
      %p40 = scmp.eq.s32.totalorder %s23, 1
      %p41 = por %p39, %p40
      %p42 = scmp.ne.s32.totalorder %s31, %s32
      %p43 = scmp.eq.s32.totalorder %s23, 0
      %p44 = por %p42, %p43
      %p45 = scmp.ne.s32.totalorder %s31, %s32
      %p46 = scmp.eq.s32.totalorder %s24, 1
      %p47 = por %p45, %p46
      %p49 = scmp.ne.s32.totalorder %s32, %s48
      %p50 = scmp.eq.s32.totalorder %s24, 0
      %p51 = por %p49, %p50
      %s53 = sadd.s32 %s52, 1
      %p56 = scmp.eq.s32.totalorder %s18, 1
      %p57 = scmp.ne.s32.totalorder %s52, %s54
      %p58 = scmp.eq.s32.totalorder %s18, 0
      %p59 = por %p57, %p58
      %p60 = scmp.ne.s32.totalorder %s52, %s54
      %p61 = scmp.eq.s32.totalorder %s23, 1
      %p62 = por %p60, %p61
      %p63 = scmp.ne.s32.totalorder %s54, %s55
      %p64 = scmp.eq.s32.totalorder %s23, 0
      %p65 = por %p63, %p64
      %p66 = scmp.ne.s32.totalorder %s54, %s55
      %p67 = scmp.eq.s32.totalorder %s24, 1
      %p68 = por %p66, %p67
      %p70 = scmp.ne.s32.totalorder %s55, %s69
      %p71 = scmp.eq.s32.totalorder %s24, 0
      %p72 = por %p70, %p71
      %s74 = sadd.s32 %s73, 1
      %p77 = scmp.eq.s32.totalorder %s18, 1
      %p78 = scmp.ne.s32.totalorder %s73, %s75
      %p79 = scmp.eq.s32.totalorder %s18, 0
      %p80 = por %p78, %p79
      %p81 = scmp.ne.s32.totalorder %s73, %s75
      %p82 = scmp.eq.s32.totalorder %s23, 1
      %p83 = por %p81, %p82
      %p84 = scmp.ne.s32.totalorder %s75, %s76
      %p85 = scmp.eq.s32.totalorder %s23, 0
      %p86 = por %p84, %p85
      %p87 = scmp.ne.s32.totalorder %s75, %s76
      %p88 = scmp.eq.s32.totalorder %s24, 1
      %p89 = por %p87, %p88
      %p91 = scmp.ne.s32.totalorder %s76, %s90
      %p92 = scmp.eq.s32.totalorder %s24, 0
      %p93 = por %p91, %p92
      %s95 = sadd.s32 %s94, 1
      %p98 = scmp.eq.s32.totalorder %s18, 1
      %p99 = scmp.ne.s32.totalorder %s94, %s96
      %p100 = scmp.eq.s32.totalorder %s18, 0
      %p101 = por %p99, %p100
      %p102 = scmp.ne.s32.totalorder %s94, %s96
      %p103 = scmp.eq.s32.totalorder %s23, 1
      %p104 = por %p102, %p103
      %p105 = scmp.ne.s32.totalorder %s96, %s97
      %p106 = scmp.eq.s32.totalorder %s23, 0
      %p107 = por %p105, %p106
      %p108 = scmp.ne.s32.totalorder %s96, %s97
      %p109 = scmp.eq.s32.totalorder %s24, 1
      %p110 = por %p108, %p109
      %p112 = scmp.ne.s32.totalorder %s97, %s111
      %p113 = scmp.eq.s32.totalorder %s24, 0
      %p114 = por %p112, %p113
      %s116 = sadd.s32 %s115, 1
      %p119 = scmp.eq.s32.totalorder %s18, 1
      %p120 = scmp.ne.s32.totalorder %s115, %s117
      %p121 = scmp.eq.s32.totalorder %s18, 0
      %p122 = por %p120, %p121
      %p123 = scmp.ne.s32.totalorder %s115, %s117
      %p124 = scmp.eq.s32.totalorder %s23, 1
      %p125 = por %p123, %p124
      %p126 = scmp.ne.s32.totalorder %s117, %s118
      %p127 = scmp.eq.s32.totalorder %s23, 0
      %p128 = por %p126, %p127
      %p129 = scmp.ne.s32.totalorder %s117, %s118
      %p130 = scmp.eq.s32.totalorder %s24, 1
      %p131 = por %p129, %p130
      %p133 = scmp.ne.s32.totalorder %s118, %s132
      %p134 = scmp.eq.s32.totalorder %s24, 0
      %p135 = por %p133, %p134
      %s137 = sadd.s32 %s136, 1
      %p140 = scmp.eq.s32.totalorder %s18, 1
      %p141 = scmp.ne.s32.totalorder %s136, %s138
      %p142 = scmp.eq.s32.totalorder %s18, 0
      %p143 = por %p141, %p142
      %p144 = scmp.ne.s32.totalorder %s136, %s138
      %p145 = scmp.eq.s32.totalorder %s23, 1
      %p146 = por %p144, %p145
      %p147 = scmp.ne.s32.totalorder %s138, %s139
      %p148 = scmp.eq.s32.totalorder %s23, 0
      %p149 = por %p147, %p148
      %p150 = scmp.ne.s32.totalorder %s138, %s139
      %p151 = scmp.eq.s32.totalorder %s24, 1
      %p152 = por %p150, %p151
      %p154 = scmp.ne.s32.totalorder %s139, %s153
      %p155 = scmp.eq.s32.totalorder %s24, 0
      %p156 = por %p154, %p155
      %s158 = sadd.s32 %s157, 1
      %p161 = scmp.eq.s32.totalorder %s18, 1
      %p162 = scmp.ne.s32.totalorder %s157, %s159
      %p163 = scmp.eq.s32.totalorder %s18, 0
      %p164 = por %p162, %p163
      %p165 = scmp.ne.s32.totalorder %s157, %s159
      %p166 = scmp.eq.s32.totalorder %s23, 1
      %p167 = por %p165, %p166
      %p168 = scmp.ne.s32.totalorder %s159, %s160
      %p169 = scmp.eq.s32.totalorder %s23, 0
      %p170 = por %p168, %p169
      %p171 = scmp.ne.s32.totalorder %s159, %s160
      %p172 = scmp.eq.s32.totalorder %s24, 1
      %p173 = por %p171, %p172
      %p175 = scmp.ne.s32.totalorder %s160, %s174
      %p176 = scmp.eq.s32.totalorder %s24, 0
      %p177 = por %p175, %p176
      %s178 = ssub.s32 %s18, %s25
      %p179 = scmp.eq.s32.totalorder %s178, 0
      %s181 = sadd.s32 %s180, 1
      %s182 = scalar_select %p179, %s180, %s181
      %p185 = pneg %p179
      %p186 = scmp.eq.s32.totalorder %s18, 1
      %p187 = por %p185, %p186
      %p188 = scmp.ne.s32.totalorder %s180, %s183
      %p189 = scmp.eq.s32.totalorder %s18, 0
      %p190 = por %p188, %p189
      %p191 = scmp.ne.s32.totalorder %s180, %s183
      %p192 = scmp.eq.s32.totalorder %s23, 1
      %p193 = por %p191, %p192
      %p194 = scmp.ne.s32.totalorder %s183, %s184
      %p195 = scmp.eq.s32.totalorder %s23, 0
      %p196 = por %p194, %p195
      %p197 = scmp.ne.s32.totalorder %s183, %s184
      %p198 = scmp.eq.s32.totalorder %s24, 1
      %p199 = por %p197, %p198
      %p201 = scmp.ne.s32.totalorder %s184, %s200
      %p202 = scmp.eq.s32.totalorder %s24, 0
      %p203 = por %p201, %p202
      %s204 = ssub.s32 %s18, %s25
      %p205 = scmp.eq.s32.totalorder %s204, 0
      %s207 = sadd.s32 %s206, 1
      %s208 = scalar_select %p205, %s206, %s207
      %p211 = pneg %p205
      %p212 = scmp.eq.s32.totalorder %s18, 1
      %p213 = por %p211, %p212
      %p214 = scmp.ne.s32.totalorder %s206, %s209
      %p215 = scmp.eq.s32.totalorder %s18, 0
      %p216 = por %p214, %p215
      %p217 = scmp.ne.s32.totalorder %s206, %s209
      %p218 = scmp.eq.s32.totalorder %s23, 1
      %p219 = por %p217, %p218
      %p220 = scmp.ne.s32.totalorder %s209, %s210
      %p221 = scmp.eq.s32.totalorder %s23, 0
      %p222 = por %p220, %p221
      %p223 = scmp.ne.s32.totalorder %s209, %s210
      %p224 = scmp.eq.s32.totalorder %s24, 1
      %p225 = por %p223, %p224
      %p227 = scmp.ne.s32.totalorder %s210, %s226
      %p228 = scmp.eq.s32.totalorder %s24, 0
      %p229 = por %p227, %p228
      %p230 = scmp.le.s32.totalorder 1, %s18
      %p231 = scmp.lt.s32.totalorder %s18, 3
      %p232 = pnand %p230, %p231
      %p233 = pneg %p232
      // Predicated region
      $region9: #{tpu_custom_call.1} parent=5 // pred_check
        _
      $region10: #{tpu_custom_call.1} parent=5 // pred_check_branch
        %235 = sbr.rel (%p232) target = $region12
      $region11: #{tpu_custom_call.1} parent=5 // pred_region
        %s236 = ssub.s32 %s18, 1
        // Predicated region
        $region13: #{tpu_custom_call.1} parent=11 // pred_check
          %p237 = pneg %p65
        $region14: #{tpu_custom_call.1} parent=11 // pred_check_branch
          %239 = sbr.rel (%p237) target = $region16
        $region15: #{tpu_custom_call.1} parent=11 // pred_region
          _
        $region16: #{tpu_custom_call.1} parent=11 // pred_fallthru
          _
        // Predicated region
        $region17: #{tpu_custom_call.1} parent=11 // pred_check
          %p240 = pneg %p86
        $region18: #{tpu_custom_call.1} parent=11 // pred_check_branch
          %242 = sbr.rel (%p240) target = $region20
        $region19: #{tpu_custom_call.1} parent=11 // pred_region
          _
        $region20: #{tpu_custom_call.1} parent=11 // pred_fallthru
          _
        // Predicated region
        $region21: #{tpu_custom_call.1} parent=11 // pred_check
          %p243 = pneg %p107
        $region22: #{tpu_custom_call.1} parent=11 // pred_check_branch
          %245 = sbr.rel (%p243) target = $region24
        $region23: #{tpu_custom_call.1} parent=11 // pred_region
          _
        $region24: #{tpu_custom_call.1} parent=11 // pred_fallthru
          _
        // Predicated region
        $region25: #{tpu_custom_call.1} parent=11 // pred_check
          %p246 = pneg %p128
        $region26: #{tpu_custom_call.1} parent=11 // pred_check_branch
          %248 = sbr.rel (%p246) target = $region28
        $region27: #{tpu_custom_call.1} parent=11 // pred_region
          _
        $region28: #{tpu_custom_call.1} parent=11 // pred_fallthru
          _
        // Predicated region
        $region29: #{tpu_custom_call.1} parent=11 // pred_check
          %p249 = pneg %p149
        $region30: #{tpu_custom_call.1} parent=11 // pred_check_branch
          %251 = sbr.rel (%p249) target = $region32
        $region31: #{tpu_custom_call.1} parent=11 // pred_region
          _
        $region32: #{tpu_custom_call.1} parent=11 // pred_fallthru
          _
        // Predicated region
        $region33: #{tpu_custom_call.1} parent=11 // pred_check
          %p252 = pneg %p170
        $region34: #{tpu_custom_call.1} parent=11 // pred_check_branch
          %254 = sbr.rel (%p252) target = $region36
        $region35: #{tpu_custom_call.1} parent=11 // pred_region
          _
        $region36: #{tpu_custom_call.1} parent=11 // pred_fallthru
          _
      $region12: #{tpu_custom_call.1} parent=5 // pred_fallthru
        _
      %p255 = scmp.lt.s32.totalorder %s18, 2
      // Predicated region
      $region37: #{tpu_custom_call.1} parent=5 // pred_check
        %p256 = pneg %p255
      $region38: #{tpu_custom_call.1} parent=5 // pred_check_branch
        %258 = sbr.rel (%p256) target = $region40
      $region39: #{tpu_custom_call.1} parent=5 // pred_region
        // Predicated region
        $region41: #{tpu_custom_call.1} parent=39 // pred_check
          %p259 = pneg %p38
        $region42: #{tpu_custom_call.1} parent=39 // pred_check_branch
          %261 = sbr.rel (%p259) target = $region44
        $region43: #{tpu_custom_call.1} parent=39 // pred_region
          %p262 = scmp.lt.s32.totalorder %s18, 1
          %s263 = scalar_select %p262, %s18, 1
          %s264 = smul.addr %s263, 32
          %s265 = smul.addr %s264, 4
          %s266 = scalar_lea.vmem %s0, %s265
        $region44: #{tpu_custom_call.1} parent=39 // pred_fallthru
          _
      $region40: #{tpu_custom_call.1} parent=5 // pred_fallthru
        _
      %p267 = scmp.le.s32.totalorder 1, %s18
      %p268 = scmp.lt.s32.totalorder %s18, 3
      %p269 = pnand %p267, %p268
      %p270 = pneg %p269
      // Predicated region
      $region45: #{tpu_custom_call.1} parent=5 // pred_check
        _
      $region46: #{tpu_custom_call.1} parent=5 // pred_check_branch
        %272 = sbr.rel (%p269) target = $region48
      $region47: #{tpu_custom_call.1} parent=5 // pred_region
        %s273 = ssub.s32 %s18, 1
        %p274 = scmp.lt.s32.totalorder %s23, 1
        %s275 = scalar_select %p274, %s23, 1
        %s276 = smul.addr %s275, 32
        %s277 = smul.addr %s276, 4
        %s278 = scalar_lea.vmem %s0, %s277
        %p279 = pneg %p44
        %p280 = pneg %p41
        %p281 = pneg %p65
        %p282 = pneg %p62
        %p283 = pneg %p86
        %p284 = pneg %p83
        %p285 = pneg %p107
        %p286 = pneg %p104
        %p287 = pneg %p128
        %p288 = pneg %p125
        %p289 = pneg %p149
        %p290 = pneg %p146
        %p291 = pneg %p170
        %p292 = pneg %p167
        %p293 = pneg %p196
        %p294 = pneg %p193
        %p295 = scmp.lt.s32.totalorder %s23, 1
        %s296 = scalar_select %p295, %s23, 1
        %s297 = smul.addr %s296, 32
        %s298 = smul.addr %s297, 8
        %s299 = scalar_lea.vmem %s7, %s298
        %p300 = pneg %p222
        %p301 = pneg %p219
        %s302 = sand.u32 %s209, 1
        %s303 = scalar_lea.sflag [#allocation6], %s302
        %s304 = sand.u32 %s209, 1
        %s305 = smul.addr %s304, 64
        %s306 = scalar_lea.vmem [#allocation5], %s305
        %p307 = scmp.lt.s32.totalorder %s23, 1
        %s308 = scalar_select %p307, %s23, 1
        %s309 = smul.addr %s308, 32
        %s310 = smul.addr %s309, 4
        %s311 = scalar_lea.vmem %s0, %s310
        %p312 = scmp.lt.s32.totalorder %s23, 1
        %s313 = scalar_select %p312, %s23, 1
        %s314 = smul.addr %s313, 32
        %s315 = smul.addr %s314, 8
        %s316 = scalar_lea.vmem %s7, %s315
        %vm318 = vcmask 27648
        %319 = vst.msk [vmem:[#allocation2] sm:$0xf] %vm318, 0
        %320 = vst.msk [vmem:[#allocation2 + $0x4] sm:$0xf] %vm318, 0
        %vm321 = vcmask 24576
        %322 = vst.msk [vmem:[#allocation2 + $0x8] sm:$0x1] %vm321, 0
        %s323 = scalar_lea.vmem [#allocation2], 204
        %324 = vst.msk [vmem:[%s323] sm:$0xf] %vm318, 0
        %325 = vst.msk [vmem:[%s323 + $0x4] sm:$0xf] %vm318, 0
        %326 = vst.msk [vmem:[%s323 + $0x8] sm:$0x1] %vm321, 0
        %vm327 = vcmask 24576
        %vm328 = vsmask.f32 256
        %vm329 = vmand %vm327, %vm328
        %v330 = vld [vmem:[#allocation2] sm:$0x1]
        %v331 = vsel %vm329, 0, %v330
        %332 = vst [vmem:[#allocation2] sm:$0x1] %v331
        %v333 = vld [vmem:[#allocation2 + $0xc] sm:$0x1]
        %v334 = vsel %vm329, 0, %v333
        %335 = vst [vmem:[#allocation2 + $0xc] sm:$0x1] %v334
        %v336 = vld [vmem:[#allocation2 + $0x18] sm:$0x1]
        %v337 = vsel %vm329, 0, %v336
        %338 = vst [vmem:[#allocation2 + $0x18] sm:$0x1] %v337
        %v339 = vld [vmem:[#allocation2 + $0x24] sm:$0x1]
        %v340 = vsel %vm329, 0, %v339
        %341 = vst [vmem:[#allocation2 + $0x24] sm:$0x1] %v340
        %v342 = vld [vmem:[#allocation2 + $0x30] sm:$0x1]
        %v343 = vsel %vm329, 0, %v342
        %344 = vst [vmem:[#allocation2 + $0x30] sm:$0x1] %v343
        %v345 = vld [vmem:[#allocation2 + $0x3c] sm:$0x1]
        %v346 = vsel %vm329, 0, %v345
        %347 = vst [vmem:[#allocation2 + $0x3c] sm:$0x1] %v346
        %v348 = vld [vmem:[#allocation2 + $0x48] sm:$0x1]
        %v349 = vsel %vm329, 0, %v348
        %350 = vst [vmem:[#allocation2 + $0x48] sm:$0x1] %v349
        %v351 = vld [vmem:[#allocation2 + $0x54] sm:$0x1]
        %v352 = vsel %vm329, 0, %v351
        %353 = vst [vmem:[#allocation2 + $0x54] sm:$0x1] %v352
        %v354 = vld [vmem:[#allocation2 + $0x60] sm:$0x1]
        %v355 = vsel %vm329, 0, %v354
        %356 = vst [vmem:[#allocation2 + $0x60] sm:$0x1] %v355
        %v357 = vld [vmem:[#allocation2 + $0x6c] sm:$0x1]
        %v358 = vsel %vm329, 0, %v357
        %359 = vst [vmem:[#allocation2 + $0x6c] sm:$0x1] %v358
        %v360 = vld [vmem:[#allocation2 + $0x78] sm:$0x1]
        %v361 = vsel %vm329, 0, %v360
        %362 = vst [vmem:[#allocation2 + $0x78] sm:$0x1] %v361
        %v363 = vld [vmem:[#allocation2 + $0x84] sm:$0x1]
        %v364 = vsel %vm329, 0, %v363
        %365 = vst [vmem:[#allocation2 + $0x84] sm:$0x1] %v364
        %v366 = vld [vmem:[#allocation2 + $0x90] sm:$0x1]
        %v367 = vsel %vm329, 0, %v366
        %368 = vst [vmem:[#allocation2 + $0x90] sm:$0x1] %v367
        %v369 = vld [vmem:[#allocation2 + $0x9c] sm:$0x1]
        %v370 = vsel %vm329, 0, %v369
        %371 = vst [vmem:[#allocation2 + $0x9c] sm:$0x1] %v370
        %v372 = vld [vmem:[#allocation2 + $0xa8] sm:$0x1]
        %v373 = vsel %vm329, 0, %v372
        %374 = vst [vmem:[#allocation2 + $0xa8] sm:$0x1] %v373
        %v375 = vld [vmem:[#allocation2 + $0xb4] sm:$0x1]
        %v376 = vsel %vm329, 0, %v375
        %377 = vst [vmem:[#allocation2 + $0xb4] sm:$0x1] %v376
        %v378 = vld [vmem:[#allocation2 + $0xc0] sm:$0x1]
        %v379 = vsel %vm329, 0, %v378
        %380 = vst [vmem:[#allocation2 + $0xc0] sm:$0x1] %v379
        %v381 = vld [vmem:[#allocation2 + $0xcc] sm:$0x1]
        %v382 = vsel %vm329, 0, %v381
        %383 = vst [vmem:[#allocation2 + $0xcc] sm:$0x1] %v382
        %vm384 = vsmask.f32 7938
        %vm385 = vmand %vm327, %vm384
        %v386 = vld [vmem:[#allocation2 + $0x8] sm:$0x1]
        %v387 = vsel %vm385, 0, %v386
        %388 = vst [vmem:[#allocation2 + $0x8] sm:$0x1] %v387
        %v389 = vld [vmem:[#allocation2 + $0x14] sm:$0x1]
        %v390 = vsel %vm385, 0, %v389
        %391 = vst [vmem:[#allocation2 + $0x14] sm:$0x1] %v390
        %v392 = vld [vmem:[#allocation2 + $0x20] sm:$0x1]
        %v393 = vsel %vm385, 0, %v392
        %394 = vst [vmem:[#allocation2 + $0x20] sm:$0x1] %v393
        %v395 = vld [vmem:[#allocation2 + $0x2c] sm:$0x1]
        %v396 = vsel %vm385, 0, %v395
        %397 = vst [vmem:[#allocation2 + $0x2c] sm:$0x1] %v396
        %v398 = vld [vmem:[#allocation2 + $0x38] sm:$0x1]
        %v399 = vsel %vm385, 0, %v398
        %400 = vst [vmem:[#allocation2 + $0x38] sm:$0x1] %v399
        %v401 = vld [vmem:[#allocation2 + $0x44] sm:$0x1]
        %v402 = vsel %vm385, 0, %v401
        %403 = vst [vmem:[#allocation2 + $0x44] sm:$0x1] %v402
        %v404 = vld [vmem:[#allocation2 + $0x50] sm:$0x1]
        %v405 = vsel %vm385, 0, %v404
        %406 = vst [vmem:[#allocation2 + $0x50] sm:$0x1] %v405
        %v407 = vld [vmem:[#allocation2 + $0x5c] sm:$0x1]
        %v408 = vsel %vm385, 0, %v407
        %409 = vst [vmem:[#allocation2 + $0x5c] sm:$0x1] %v408
        %v410 = vld [vmem:[#allocation2 + $0x68] sm:$0x1]
        %v411 = vsel %vm385, 0, %v410
        %412 = vst [vmem:[#allocation2 + $0x68] sm:$0x1] %v411
        %v413 = vld [vmem:[#allocation2 + $0x74] sm:$0x1]
        %v414 = vsel %vm385, 0, %v413
        %415 = vst [vmem:[#allocation2 + $0x74] sm:$0x1] %v414
        %v416 = vld [vmem:[#allocation2 + $0x80] sm:$0x1]
        %v417 = vsel %vm385, 0, %v416
        %418 = vst [vmem:[#allocation2 + $0x80] sm:$0x1] %v417
        %v419 = vld [vmem:[#allocation2 + $0x8c] sm:$0x1]
        %v420 = vsel %vm385, 0, %v419
        %421 = vst [vmem:[#allocation2 + $0x8c] sm:$0x1] %v420
        %v422 = vld [vmem:[#allocation2 + $0x98] sm:$0x1]
        %v423 = vsel %vm385, 0, %v422
        %424 = vst [vmem:[#allocation2 + $0x98] sm:$0x1] %v423
        %v425 = vld [vmem:[#allocation2 + $0xa4] sm:$0x1]
        %v426 = vsel %vm385, 0, %v425
        %427 = vst [vmem:[#allocation2 + $0xa4] sm:$0x1] %v426
        %v428 = vld [vmem:[#allocation2 + $0xb0] sm:$0x1]
        %v429 = vsel %vm385, 0, %v428
        %430 = vst [vmem:[#allocation2 + $0xb0] sm:$0x1] %v429
        %v431 = vld [vmem:[#allocation2 + $0xbc] sm:$0x1]
        %v432 = vsel %vm385, 0, %v431
        %433 = vst [vmem:[#allocation2 + $0xbc] sm:$0x1] %v432
        %v434 = vld [vmem:[#allocation2 + $0xc8] sm:$0x1]
        %v435 = vsel %vm385, 0, %v434
        %436 = vst [vmem:[#allocation2 + $0xc8] sm:$0x1] %v435
        %v437 = vld [vmem:[#allocation2 + $0xd4] sm:$0x1]
        %v438 = vsel %vm385, 0, %v437
        %439 = vst [vmem:[#allocation2 + $0xd4] sm:$0x1] %v438
        %vm440 = vcmask 60416
        %441 = vst.msk [vmem:[#allocation3] sm:$0xf] %vm440, 0
        %442 = vst.msk [vmem:[#allocation3 + $0x4] sm:$0xf] %vm440, 0
        %vm443 = vcmask 57344
        %444 = vst.msk [vmem:[#allocation3 + $0x8] sm:$0x1] %vm443, 0
        %s445 = scalar_lea.vmem [#allocation3], 204
        %446 = vst.msk [vmem:[%s445] sm:$0xf] %vm440, 0
        %447 = vst.msk [vmem:[%s445 + $0x4] sm:$0xf] %vm440, 0
        %448 = vst.msk [vmem:[%s445 + $0x8] sm:$0x1] %vm443, 0
        %vm449 = vcmask 57344
        %vm450 = vmand %vm449, %vm328
        %v451 = vld [vmem:[#allocation3] sm:$0x1]
        %v452 = vsel %vm450, 0, %v451
        %453 = vst [vmem:[#allocation3] sm:$0x1] %v452
        %v454 = vld [vmem:[#allocation3 + $0xc] sm:$0x1]
        %v455 = vsel %vm450, 0, %v454
        %456 = vst [vmem:[#allocation3 + $0xc] sm:$0x1] %v455
        %v457 = vld [vmem:[#allocation3 + $0x18] sm:$0x1]
        %v458 = vsel %vm450, 0, %v457
        %459 = vst [vmem:[#allocation3 + $0x18] sm:$0x1] %v458
        %v460 = vld [vmem:[#allocation3 + $0x24] sm:$0x1]
        %v461 = vsel %vm450, 0, %v460
        %462 = vst [vmem:[#allocation3 + $0x24] sm:$0x1] %v461
        %v463 = vld [vmem:[#allocation3 + $0x30] sm:$0x1]
        %v464 = vsel %vm450, 0, %v463
        %465 = vst [vmem:[#allocation3 + $0x30] sm:$0x1] %v464
        %v466 = vld [vmem:[#allocation3 + $0x3c] sm:$0x1]
        %v467 = vsel %vm450, 0, %v466
        %468 = vst [vmem:[#allocation3 + $0x3c] sm:$0x1] %v467
        %v469 = vld [vmem:[#allocation3 + $0x48] sm:$0x1]
        %v470 = vsel %vm450, 0, %v469
        %471 = vst [vmem:[#allocation3 + $0x48] sm:$0x1] %v470
        %v472 = vld [vmem:[#allocation3 + $0x54] sm:$0x1]
        %v473 = vsel %vm450, 0, %v472
        %474 = vst [vmem:[#allocation3 + $0x54] sm:$0x1] %v473
        %v475 = vld [vmem:[#allocation3 + $0x60] sm:$0x1]
        %v476 = vsel %vm450, 0, %v475
        %477 = vst [vmem:[#allocation3 + $0x60] sm:$0x1] %v476
        %v478 = vld [vmem:[#allocation3 + $0x6c] sm:$0x1]
        %v479 = vsel %vm450, 0, %v478
        %480 = vst [vmem:[#allocation3 + $0x6c] sm:$0x1] %v479
        %v481 = vld [vmem:[#allocation3 + $0x78] sm:$0x1]
        %v482 = vsel %vm450, 0, %v481
        %483 = vst [vmem:[#allocation3 + $0x78] sm:$0x1] %v482
        %v484 = vld [vmem:[#allocation3 + $0x84] sm:$0x1]
        %v485 = vsel %vm450, 0, %v484
        %486 = vst [vmem:[#allocation3 + $0x84] sm:$0x1] %v485
        %v487 = vld [vmem:[#allocation3 + $0x90] sm:$0x1]
        %v488 = vsel %vm450, 0, %v487
        %489 = vst [vmem:[#allocation3 + $0x90] sm:$0x1] %v488
        %v490 = vld [vmem:[#allocation3 + $0x9c] sm:$0x1]
        %v491 = vsel %vm450, 0, %v490
        %492 = vst [vmem:[#allocation3 + $0x9c] sm:$0x1] %v491
        %v493 = vld [vmem:[#allocation3 + $0xa8] sm:$0x1]
        %v494 = vsel %vm450, 0, %v493
        %495 = vst [vmem:[#allocation3 + $0xa8] sm:$0x1] %v494
        %v496 = vld [vmem:[#allocation3 + $0xb4] sm:$0x1]
        %v497 = vsel %vm450, 0, %v496
        %498 = vst [vmem:[#allocation3 + $0xb4] sm:$0x1] %v497
        %v499 = vld [vmem:[#allocation3 + $0xc0] sm:$0x1]
        %v500 = vsel %vm450, 0, %v499
        %501 = vst [vmem:[#allocation3 + $0xc0] sm:$0x1] %v500
        %v502 = vld [vmem:[#allocation3 + $0xcc] sm:$0x1]
        %v503 = vsel %vm450, 0, %v502
        %504 = vst [vmem:[#allocation3 + $0xcc] sm:$0x1] %v503
        %vm505 = vmand %vm449, %vm384
        %v506 = vld [vmem:[#allocation3 + $0x8] sm:$0x1]
        %v507 = vsel %vm505, 0, %v506
        %508 = vst [vmem:[#allocation3 + $0x8] sm:$0x1] %v507
        %v509 = vld [vmem:[#allocation3 + $0x14] sm:$0x1]
        %v510 = vsel %vm505, 0, %v509
        %511 = vst [vmem:[#allocation3 + $0x14] sm:$0x1] %v510
        %v512 = vld [vmem:[#allocation3 + $0x20] sm:$0x1]
        %v513 = vsel %vm505, 0, %v512
        %514 = vst [vmem:[#allocation3 + $0x20] sm:$0x1] %v513
        %v515 = vld [vmem:[#allocation3 + $0x2c] sm:$0x1]
        %v516 = vsel %vm505, 0, %v515
        %517 = vst [vmem:[#allocation3 + $0x2c] sm:$0x1] %v516
        %v518 = vld [vmem:[#allocation3 + $0x38] sm:$0x1]
        %v519 = vsel %vm505, 0, %v518
        %520 = vst [vmem:[#allocation3 + $0x38] sm:$0x1] %v519
        %v521 = vld [vmem:[#allocation3 + $0x44] sm:$0x1]
        %v522 = vsel %vm505, 0, %v521
        %523 = vst [vmem:[#allocation3 + $0x44] sm:$0x1] %v522
        %v524 = vld [vmem:[#allocation3 + $0x50] sm:$0x1]
        %v525 = vsel %vm505, 0, %v524
        %526 = vst [vmem:[#allocation3 + $0x50] sm:$0x1] %v525
        %v527 = vld [vmem:[#allocation3 + $0x5c] sm:$0x1]
        %v528 = vsel %vm505, 0, %v527
        %529 = vst [vmem:[#allocation3 + $0x5c] sm:$0x1] %v528
        %v530 = vld [vmem:[#allocation3 + $0x68] sm:$0x1]
        %v531 = vsel %vm505, 0, %v530
        %532 = vst [vmem:[#allocation3 + $0x68] sm:$0x1] %v531
        %v533 = vld [vmem:[#allocation3 + $0x74] sm:$0x1]
        %v534 = vsel %vm505, 0, %v533
        %535 = vst [vmem:[#allocation3 + $0x74] sm:$0x1] %v534
        %v536 = vld [vmem:[#allocation3 + $0x80] sm:$0x1]
        %v537 = vsel %vm505, 0, %v536
        %538 = vst [vmem:[#allocation3 + $0x80] sm:$0x1] %v537
        %v539 = vld [vmem:[#allocation3 + $0x8c] sm:$0x1]
        %v540 = vsel %vm505, 0, %v539
        %541 = vst [vmem:[#allocation3 + $0x8c] sm:$0x1] %v540
        %v542 = vld [vmem:[#allocation3 + $0x98] sm:$0x1]
        %v543 = vsel %vm505, 0, %v542
        %544 = vst [vmem:[#allocation3 + $0x98] sm:$0x1] %v543
        %v545 = vld [vmem:[#allocation3 + $0xa4] sm:$0x1]
        %v546 = vsel %vm505, 0, %v545
        %547 = vst [vmem:[#allocation3 + $0xa4] sm:$0x1] %v546
        %v548 = vld [vmem:[#allocation3 + $0xb0] sm:$0x1]
        %v549 = vsel %vm505, 0, %v548
        %550 = vst [vmem:[#allocation3 + $0xb0] sm:$0x1] %v549
        %v551 = vld [vmem:[#allocation3 + $0xbc] sm:$0x1]
        %v552 = vsel %vm505, 0, %v551
        %553 = vst [vmem:[#allocation3 + $0xbc] sm:$0x1] %v552
        %v554 = vld [vmem:[#allocation3 + $0xc8] sm:$0x1]
        %v555 = vsel %vm505, 0, %v554
        %556 = vst [vmem:[#allocation3 + $0xc8] sm:$0x1] %v555
        %v557 = vld [vmem:[#allocation3 + $0xd4] sm:$0x1]
        %v558 = vsel %vm505, 0, %v557
        %559 = vst [vmem:[#allocation3 + $0xd4] sm:$0x1] %v558
        %v560 = vld [vmem:[%s311] sm:$0xf]
        %v561 = vld [vmem:[%s311 + $0x4] sm:$0xf]
        %v562 = vld [vmem:[%s311 + $0x8] sm:$0xf]
        %v563 = vld [vmem:[%s311 + $0xc] sm:$0xf]
        %v564 = vld [vmem:[%s311 + $0x10] sm:$0xf]
        %v565 = vld [vmem:[%s311 + $0x14] sm:$0xf]
        %v566 = vld [vmem:[%s311 + $0x18] sm:$0xf]
        %v567 = vld [vmem:[%s311 + $0x1c] sm:$0xf]
        %v568 = vld [vmem:[%s311 + $0x20] sm:$0xf]
        %v569 = vld [vmem:[%s311 + $0x24] sm:$0xf]
        %v570 = vld [vmem:[%s311 + $0x28] sm:$0xf]
        %v571 = vld [vmem:[%s311 + $0x2c] sm:$0xf]
        %v572 = vld [vmem:[%s311 + $0x30] sm:$0xf]
        %v573 = vld [vmem:[%s311 + $0x34] sm:$0xf]
        %v574 = vld [vmem:[%s311 + $0x38] sm:$0xf]
        %v575 = vld [vmem:[%s311 + $0x3c] sm:$0xf]
        %v576 = vld [vmem:[%s311 + $0x40] sm:$0xf]
        %v577 = vld [vmem:[%s311 + $0x44] sm:$0xf]
        %v578 = vld [vmem:[%s311 + $0x48] sm:$0xf]
        %v579 = vld [vmem:[%s311 + $0x4c] sm:$0xf]
        %v580 = vld [vmem:[%s311 + $0x50] sm:$0xf]
        %v581 = vld [vmem:[%s311 + $0x54] sm:$0xf]
        %v582 = vld [vmem:[%s311 + $0x58] sm:$0xf]
        %v583 = vld [vmem:[%s311 + $0x5c] sm:$0xf]
        %v584 = vld [vmem:[%s311 + $0x60] sm:$0xf]
        %v585 = vld [vmem:[%s311 + $0x64] sm:$0xf]
        %v586 = vld [vmem:[%s311 + $0x68] sm:$0xf]
        %v587 = vld [vmem:[%s311 + $0x6c] sm:$0xf]
        %v588 = vld [vmem:[%s311 + $0x70] sm:$0xf]
        %v589 = vld [vmem:[%s311 + $0x74] sm:$0xf]
        %v590 = vld [vmem:[%s311 + $0x78] sm:$0xf]
        %v591 = vld [vmem:[%s311 + $0x7c] sm:$0xf]
        %vm592 = vsmask.f32 4368
        %vm593 = vmor %vm328, %vm592
        %v595 = vshrl.u32 %v560, 16
        %v597 = vrot.slane %v595, 7
        %v598 = vshll.u32 %v560, 16
        %v600 = vor.u32 %v597, %v598
        %v601 = vrot.slane %v597, 4
        %v603 = vshrl.u32 %v561, 16
        %v605 = vrot.slane %v603, 7
        %v606 = vshll.u32 %v561, 16
        %v608 = vor.u32 %v605, %v606
        %v609 = vsel %vm593, %v601, %v608
        %v610 = vrot.slane %v605, 4
        %v612 = vshrl.u32 %v562, 16
        %v614 = vrot.slane %v612, 7
        %v615 = vshll.u32 %v562, 16
        %v617 = vor.u32 %v614, %v615
        %v618 = vrot.slane %v614, 4
        %v620 = vshrl.u32 %v563, 16
        %v622 = vrot.slane %v620, 7
        %v623 = vshll.u32 %v563, 16
        %v625 = vor.u32 %v622, %v623
        %v626 = vsel %vm593, %v618, %v625
        %v627 = vrot.slane %v622, 4
        %v629 = vshrl.u32 %v564, 16
        %v631 = vrot.slane %v629, 7
        %v632 = vshll.u32 %v564, 16
        %v634 = vor.u32 %v631, %v632
        %v635 = vrot.slane %v631, 4
        %v637 = vshrl.u32 %v565, 16
        %v639 = vrot.slane %v637, 7
        %v640 = vshll.u32 %v565, 16
        %v642 = vor.u32 %v639, %v640
        %v643 = vsel %vm593, %v635, %v642
        %v644 = vrot.slane %v639, 4
        %v646 = vshrl.u32 %v566, 16
        %v648 = vrot.slane %v646, 7
        %v649 = vshll.u32 %v566, 16
        %v651 = vor.u32 %v648, %v649
        %v652 = vrot.slane %v648, 4
        %v654 = vshrl.u32 %v567, 16
        %v656 = vrot.slane %v654, 7
        %v657 = vshll.u32 %v567, 16
        %v659 = vor.u32 %v656, %v657
        %v660 = vsel %vm593, %v652, %v659
        %v661 = vrot.slane %v656, 4
        %v663 = vshrl.u32 %v568, 16
        %v665 = vrot.slane %v663, 7
        %v666 = vshll.u32 %v568, 16
        %v668 = vor.u32 %v665, %v666
        %v669 = vrot.slane %v665, 4
        %v671 = vshrl.u32 %v569, 16
        %v673 = vrot.slane %v671, 7
        %v674 = vshll.u32 %v569, 16
        %v676 = vor.u32 %v673, %v674
        %v677 = vsel %vm593, %v669, %v676
        %v678 = vrot.slane %v673, 4
        %v680 = vshrl.u32 %v570, 16
        %v682 = vrot.slane %v680, 7
        %v683 = vshll.u32 %v570, 16
        %v685 = vor.u32 %v682, %v683
        %v686 = vrot.slane %v682, 4
        %v688 = vshrl.u32 %v571, 16
        %v690 = vrot.slane %v688, 7
        %v691 = vshll.u32 %v571, 16
        %v693 = vor.u32 %v690, %v691
        %v694 = vsel %vm593, %v686, %v693
        %v695 = vrot.slane %v690, 4
        %v697 = vshrl.u32 %v572, 16
        %v699 = vrot.slane %v697, 7
        %v700 = vshll.u32 %v572, 16
        %v702 = vor.u32 %v699, %v700
        %v703 = vrot.slane %v699, 4
        %v705 = vshrl.u32 %v573, 16
        %v707 = vrot.slane %v705, 7
        %v708 = vshll.u32 %v573, 16
        %v710 = vor.u32 %v707, %v708
        %v711 = vsel %vm593, %v703, %v710
        %v712 = vrot.slane %v707, 4
        %v714 = vshrl.u32 %v574, 16
        %v716 = vrot.slane %v714, 7
        %v717 = vshll.u32 %v574, 16
        %v719 = vor.u32 %v716, %v717
        %v720 = vrot.slane %v716, 4
        %v722 = vshrl.u32 %v575, 16
        %v724 = vrot.slane %v722, 7
        %v725 = vshll.u32 %v575, 16
        %v727 = vor.u32 %v724, %v725
        %v728 = vsel %vm593, %v720, %v727
        %v729 = vrot.slane %v724, 4
        %v731 = vshrl.u32 %v576, 16
        %v733 = vrot.slane %v731, 7
        %v734 = vshll.u32 %v576, 16
        %v736 = vor.u32 %v733, %v734
        %v737 = vrot.slane %v733, 4
        %v739 = vshrl.u32 %v577, 16
        %v741 = vrot.slane %v739, 7
        %v742 = vshll.u32 %v577, 16
        %v744 = vor.u32 %v741, %v742
        %v745 = vsel %vm593, %v737, %v744
        %v746 = vrot.slane %v741, 4
        %v748 = vshrl.u32 %v578, 16
        %v750 = vrot.slane %v748, 7
        %v751 = vshll.u32 %v578, 16
        %v753 = vor.u32 %v750, %v751
        %v754 = vrot.slane %v750, 4
        %v756 = vshrl.u32 %v579, 16
        %v758 = vrot.slane %v756, 7
        %v759 = vshll.u32 %v579, 16
        %v761 = vor.u32 %v758, %v759
        %v762 = vsel %vm593, %v754, %v761
        %v763 = vrot.slane %v758, 4
        %v765 = vshrl.u32 %v580, 16
        %v767 = vrot.slane %v765, 7
        %v768 = vshll.u32 %v580, 16
        %v770 = vor.u32 %v767, %v768
        %v771 = vrot.slane %v767, 4
        %v773 = vshrl.u32 %v581, 16
        %v775 = vrot.slane %v773, 7
        %v776 = vshll.u32 %v581, 16
        %v778 = vor.u32 %v775, %v776
        %v779 = vsel %vm593, %v771, %v778
        %v780 = vrot.slane %v775, 4
        %v782 = vshrl.u32 %v582, 16
        %v784 = vrot.slane %v782, 7
        %v785 = vshll.u32 %v582, 16
        %v787 = vor.u32 %v784, %v785
        %v788 = vrot.slane %v784, 4
        %v790 = vshrl.u32 %v583, 16
        %v792 = vrot.slane %v790, 7
        %v793 = vshll.u32 %v583, 16
        %v795 = vor.u32 %v792, %v793
        %v796 = vsel %vm593, %v788, %v795
        %v797 = vrot.slane %v792, 4
        %v799 = vshrl.u32 %v584, 16
        %v801 = vrot.slane %v799, 7
        %v802 = vshll.u32 %v584, 16
        %v804 = vor.u32 %v801, %v802
        %v805 = vrot.slane %v801, 4
        %v807 = vshrl.u32 %v585, 16
        %v809 = vrot.slane %v807, 7
        %v810 = vshll.u32 %v585, 16
        %v812 = vor.u32 %v809, %v810
        %v813 = vsel %vm593, %v805, %v812
        %v814 = vrot.slane %v809, 4
        %v816 = vshrl.u32 %v586, 16
        %v818 = vrot.slane %v816, 7
        %v819 = vshll.u32 %v586, 16
        %v821 = vor.u32 %v818, %v819
        %v822 = vrot.slane %v818, 4
        %v824 = vshrl.u32 %v587, 16
        %v826 = vrot.slane %v824, 7
        %v827 = vshll.u32 %v587, 16
        %v829 = vor.u32 %v826, %v827
        %v830 = vsel %vm593, %v822, %v829
        %v831 = vrot.slane %v826, 4
        %v833 = vshrl.u32 %v588, 16
        %v835 = vrot.slane %v833, 7
        %v836 = vshll.u32 %v588, 16
        %v838 = vor.u32 %v835, %v836
        %v839 = vrot.slane %v835, 4
        %v841 = vshrl.u32 %v589, 16
        %v843 = vrot.slane %v841, 7
        %v844 = vshll.u32 %v589, 16
        %v846 = vor.u32 %v843, %v844
        %v847 = vsel %vm593, %v839, %v846
        %v848 = vrot.slane %v843, 4
        %v850 = vshrl.u32 %v590, 16
        %v852 = vrot.slane %v850, 7
        %v853 = vshll.u32 %v590, 16
        %v855 = vor.u32 %v852, %v853
        %v856 = vrot.slane %v852, 4
        %v858 = vshrl.u32 %v591, 16
        %v860 = vrot.slane %v858, 7
        %v861 = vshll.u32 %v591, 16
        %v863 = vor.u32 %v860, %v861
        %v864 = vsel %vm593, %v856, %v863
        %v865 = vrot.slane %v860, 4
        %s914 = scalar_lea.vmem [#allocation2], 12
        %vm915 = vcmask 27648
        %vm916 = vmand %vm915, %vm384
        %v917 = vld [vmem:[%s914] sm:$0xf]
        %v918 = vsel %vm916, %v600, %v917
        %919 = vst [vmem:[%s914] sm:$0xf] %v918
        %920 = vst.msk [vmem:[%s914 + $0x4] sm:$0xf] %vm318, %v609
        %v921 = vld [vmem:[%s914 + $0x8] sm:$0x1]
        %v922 = vsel %vm329, %v610, %v921
        %923 = vst [vmem:[%s914 + $0x8] sm:$0x1] %v922
        %v924 = vld [vmem:[%s914 + $0xc] sm:$0xf]
        %v925 = vsel %vm916, %v617, %v924
        %926 = vst [vmem:[%s914 + $0xc] sm:$0xf] %v925
        %927 = vst.msk [vmem:[%s914 + $0x10] sm:$0xf] %vm318, %v626
        %v928 = vld [vmem:[%s914 + $0x14] sm:$0x1]
        %v929 = vsel %vm329, %v627, %v928
        %930 = vst [vmem:[%s914 + $0x14] sm:$0x1] %v929
        %v931 = vld [vmem:[%s914 + $0x18] sm:$0xf]
        %v932 = vsel %vm916, %v634, %v931
        %933 = vst [vmem:[%s914 + $0x18] sm:$0xf] %v932
        %934 = vst.msk [vmem:[%s914 + $0x1c] sm:$0xf] %vm318, %v643
        %v935 = vld [vmem:[%s914 + $0x20] sm:$0x1]
        %v936 = vsel %vm329, %v644, %v935
        %937 = vst [vmem:[%s914 + $0x20] sm:$0x1] %v936
        %v938 = vld [vmem:[%s914 + $0x24] sm:$0xf]
        %v939 = vsel %vm916, %v651, %v938
        %940 = vst [vmem:[%s914 + $0x24] sm:$0xf] %v939
        %941 = vst.msk [vmem:[%s914 + $0x28] sm:$0xf] %vm318, %v660
        %v942 = vld [vmem:[%s914 + $0x2c] sm:$0x1]
        %v943 = vsel %vm329, %v661, %v942
        %944 = vst [vmem:[%s914 + $0x2c] sm:$0x1] %v943
        %v945 = vld [vmem:[%s914 + $0x30] sm:$0xf]
        %v946 = vsel %vm916, %v668, %v945
        %947 = vst [vmem:[%s914 + $0x30] sm:$0xf] %v946
        %948 = vst.msk [vmem:[%s914 + $0x34] sm:$0xf] %vm318, %v677
        %v949 = vld [vmem:[%s914 + $0x38] sm:$0x1]
        %v950 = vsel %vm329, %v678, %v949
        %951 = vst [vmem:[%s914 + $0x38] sm:$0x1] %v950
        %v952 = vld [vmem:[%s914 + $0x3c] sm:$0xf]
        %v953 = vsel %vm916, %v685, %v952
        %954 = vst [vmem:[%s914 + $0x3c] sm:$0xf] %v953
        %955 = vst.msk [vmem:[%s914 + $0x40] sm:$0xf] %vm318, %v694
        %v956 = vld [vmem:[%s914 + $0x44] sm:$0x1]
        %v957 = vsel %vm329, %v695, %v956
        %958 = vst [vmem:[%s914 + $0x44] sm:$0x1] %v957
        %v959 = vld [vmem:[%s914 + $0x48] sm:$0xf]
        %v960 = vsel %vm916, %v702, %v959
        %961 = vst [vmem:[%s914 + $0x48] sm:$0xf] %v960
        %962 = vst.msk [vmem:[%s914 + $0x4c] sm:$0xf] %vm318, %v711
        %v963 = vld [vmem:[%s914 + $0x50] sm:$0x1]
        %v964 = vsel %vm329, %v712, %v963
        %965 = vst [vmem:[%s914 + $0x50] sm:$0x1] %v964
        %v966 = vld [vmem:[%s914 + $0x54] sm:$0xf]
        %v967 = vsel %vm916, %v719, %v966
        %968 = vst [vmem:[%s914 + $0x54] sm:$0xf] %v967
        %969 = vst.msk [vmem:[%s914 + $0x58] sm:$0xf] %vm318, %v728
        %v970 = vld [vmem:[%s914 + $0x5c] sm:$0x1]
        %v971 = vsel %vm329, %v729, %v970
        %972 = vst [vmem:[%s914 + $0x5c] sm:$0x1] %v971
        %v973 = vld [vmem:[%s914 + $0x60] sm:$0xf]
        %v974 = vsel %vm916, %v736, %v973
        %975 = vst [vmem:[%s914 + $0x60] sm:$0xf] %v974
        %976 = vst.msk [vmem:[%s914 + $0x64] sm:$0xf] %vm318, %v745
        %v977 = vld [vmem:[%s914 + $0x68] sm:$0x1]
        %v978 = vsel %vm329, %v746, %v977
        %979 = vst [vmem:[%s914 + $0x68] sm:$0x1] %v978
        %v980 = vld [vmem:[%s914 + $0x6c] sm:$0xf]
        %v981 = vsel %vm916, %v753, %v980
        %982 = vst [vmem:[%s914 + $0x6c] sm:$0xf] %v981
        %983 = vst.msk [vmem:[%s914 + $0x70] sm:$0xf] %vm318, %v762
        %v984 = vld [vmem:[%s914 + $0x74] sm:$0x1]
        %v985 = vsel %vm329, %v763, %v984
        %986 = vst [vmem:[%s914 + $0x74] sm:$0x1] %v985
        %v987 = vld [vmem:[%s914 + $0x78] sm:$0xf]
        %v988 = vsel %vm916, %v770, %v987
        %989 = vst [vmem:[%s914 + $0x78] sm:$0xf] %v988
        %990 = vst.msk [vmem:[%s914 + $0x7c] sm:$0xf] %vm318, %v779
        %v991 = vld [vmem:[%s914 + $0x80] sm:$0x1]
        %v992 = vsel %vm329, %v780, %v991
        %993 = vst [vmem:[%s914 + $0x80] sm:$0x1] %v992
        %v994 = vld [vmem:[%s914 + $0x84] sm:$0xf]
        %v995 = vsel %vm916, %v787, %v994
        %996 = vst [vmem:[%s914 + $0x84] sm:$0xf] %v995
        %997 = vst.msk [vmem:[%s914 + $0x88] sm:$0xf] %vm318, %v796
        %v998 = vld [vmem:[%s914 + $0x8c] sm:$0x1]
        %v999 = vsel %vm329, %v797, %v998
        %1000 = vst [vmem:[%s914 + $0x8c] sm:$0x1] %v999
        %v1001 = vld [vmem:[%s914 + $0x90] sm:$0xf]
        %v1002 = vsel %vm916, %v804, %v1001
        %1003 = vst [vmem:[%s914 + $0x90] sm:$0xf] %v1002
        %1004 = vst.msk [vmem:[%s914 + $0x94] sm:$0xf] %vm318, %v813
        %v1005 = vld [vmem:[%s914 + $0x98] sm:$0x1]
        %v1006 = vsel %vm329, %v814, %v1005
        %1007 = vst [vmem:[%s914 + $0x98] sm:$0x1] %v1006
        %v1008 = vld [vmem:[%s914 + $0x9c] sm:$0xf]
        %v1009 = vsel %vm916, %v821, %v1008
        %1010 = vst [vmem:[%s914 + $0x9c] sm:$0xf] %v1009
        %1011 = vst.msk [vmem:[%s914 + $0xa0] sm:$0xf] %vm318, %v830
        %v1012 = vld [vmem:[%s914 + $0xa4] sm:$0x1]
        %v1013 = vsel %vm329, %v831, %v1012
        %1014 = vst [vmem:[%s914 + $0xa4] sm:$0x1] %v1013
        %v1015 = vld [vmem:[%s914 + $0xa8] sm:$0xf]
        %v1016 = vsel %vm916, %v838, %v1015
        %1017 = vst [vmem:[%s914 + $0xa8] sm:$0xf] %v1016
        %1018 = vst.msk [vmem:[%s914 + $0xac] sm:$0xf] %vm318, %v847
        %v1019 = vld [vmem:[%s914 + $0xb0] sm:$0x1]
        %v1020 = vsel %vm329, %v848, %v1019
        %1021 = vst [vmem:[%s914 + $0xb0] sm:$0x1] %v1020
        %v1022 = vld [vmem:[%s914 + $0xb4] sm:$0xf]
        %v1023 = vsel %vm916, %v855, %v1022
        %1024 = vst [vmem:[%s914 + $0xb4] sm:$0xf] %v1023
        %1025 = vst.msk [vmem:[%s914 + $0xb8] sm:$0xf] %vm318, %v864
        %v1026 = vld [vmem:[%s914 + $0xbc] sm:$0x1]
        %v1027 = vsel %vm329, %v865, %v1026
        %1028 = vst [vmem:[%s914 + $0xbc] sm:$0x1] %v1027
        %v1029 = vld [vmem:[%s2] sm:$0x1]
        %v1030 = vld [vmem:[%s3] sm:$0x1]
        %v1031 = vld [vmem:[#allocation2] sm:$0xf]
        %v1032 = vld [vmem:[#allocation2 + $0x4] sm:$0xf]
        %v1033 = vld [vmem:[#allocation2 + $0xc] sm:$0xf]
        %v1034 = vld [vmem:[#allocation2 + $0x10] sm:$0xf]
        %v1035 = vld [vmem:[#allocation2 + $0x18] sm:$0xf]
        %v1036 = vld [vmem:[#allocation2 + $0x1c] sm:$0xf]
        %v1037 = vld [vmem:[#allocation2 + $0x24] sm:$0xf]
        %v1038 = vld [vmem:[#allocation2 + $0x28] sm:$0xf]
        %v1039 = vld [vmem:[#allocation2 + $0x30] sm:$0xf]
        %v1040 = vld [vmem:[#allocation2 + $0x34] sm:$0xf]
        %v1041 = vld [vmem:[#allocation2 + $0x3c] sm:$0xf]
        %v1042 = vld [vmem:[#allocation2 + $0x40] sm:$0xf]
        %v1043 = vld [vmem:[#allocation2 + $0x48] sm:$0xf]
        %v1044 = vld [vmem:[#allocation2 + $0x4c] sm:$0xf]
        %v1045 = vld [vmem:[#allocation2 + $0x54] sm:$0xf]
        %v1046 = vld [vmem:[#allocation2 + $0x58] sm:$0xf]
        %v1047 = vld [vmem:[#allocation2 + $0x60] sm:$0xf]
        %v1048 = vld [vmem:[#allocation2 + $0x64] sm:$0xf]
        %v1049 = vld [vmem:[#allocation2 + $0x6c] sm:$0xf]
        %v1050 = vld [vmem:[#allocation2 + $0x70] sm:$0xf]
        %v1051 = vld [vmem:[#allocation2 + $0x78] sm:$0xf]
        %v1052 = vld [vmem:[#allocation2 + $0x7c] sm:$0xf]
        %v1053 = vld [vmem:[#allocation2 + $0x84] sm:$0xf]
        %v1054 = vld [vmem:[#allocation2 + $0x88] sm:$0xf]
        %v1055 = vld [vmem:[#allocation2 + $0x90] sm:$0xf]
        %v1056 = vld [vmem:[#allocation2 + $0x94] sm:$0xf]
        %v1057 = vld [vmem:[#allocation2 + $0x9c] sm:$0xf]
        %v1058 = vld [vmem:[#allocation2 + $0xa0] sm:$0xf]
        %v1059 = vld [vmem:[#allocation2 + $0xa8] sm:$0xf]
        %v1060 = vld [vmem:[#allocation2 + $0xac] sm:$0xf]
        %v1061 = vld [vmem:[#allocation2 + $0xb4] sm:$0xf]
        %v1062 = vld [vmem:[#allocation2 + $0xb8] sm:$0xf]
        %v1063 = vld [vmem:[#allocation2 + $0xc0] sm:$0xf]
        %v1064 = vld [vmem:[#allocation2 + $0xc4] sm:$0xf]
        %v1065 = vld [vmem:[#allocation2 + $0xcc] sm:$0xf]
        %v1066 = vld [vmem:[#allocation2 + $0xd0] sm:$0xf]
        %v1067 = vld [vmem:[#allocation2 + $0x8] sm:$0x1]
        %v1068 = vld [vmem:[#allocation2 + $0x14] sm:$0x1]
        %v1069 = vld [vmem:[#allocation2 + $0x20] sm:$0x1]
        %v1070 = vld [vmem:[#allocation2 + $0x2c] sm:$0x1]
        %v1071 = vld [vmem:[#allocation2 + $0x38] sm:$0x1]
        %v1072 = vld [vmem:[#allocation2 + $0x44] sm:$0x1]
        %v1073 = vld [vmem:[#allocation2 + $0x50] sm:$0x1]
        %v1074 = vld [vmem:[#allocation2 + $0x5c] sm:$0x1]
        %v1075 = vld [vmem:[#allocation2 + $0x68] sm:$0x1]
        %v1076 = vld [vmem:[#allocation2 + $0x74] sm:$0x1]
        %v1077 = vld [vmem:[#allocation2 + $0x80] sm:$0x1]
        %v1078 = vld [vmem:[#allocation2 + $0x8c] sm:$0x1]
        %v1079 = vld [vmem:[#allocation2 + $0x98] sm:$0x1]
        %v1080 = vld [vmem:[#allocation2 + $0xa4] sm:$0x1]
        %v1081 = vld [vmem:[#allocation2 + $0xb0] sm:$0x1]
        %v1082 = vld [vmem:[#allocation2 + $0xbc] sm:$0x1]
        %v1083 = vld [vmem:[#allocation2 + $0xc8] sm:$0x1]
        %v1084 = vld [vmem:[#allocation2 + $0xd4] sm:$0x1]
        %v1085 = vld [vmem:[#allocation2] sm:$0xe]
        %v1086 = vld [vmem:[#allocation2 + $0xc] sm:$0xe]
        %v1087 = vld [vmem:[#allocation2 + $0x18] sm:$0xe]
        %v1088 = vld [vmem:[#allocation2 + $0x24] sm:$0xe]
        %v1089 = vld [vmem:[#allocation2 + $0x30] sm:$0xe]
        %v1090 = vld [vmem:[#allocation2 + $0x3c] sm:$0xe]
        %v1091 = vld [vmem:[#allocation2 + $0x48] sm:$0xe]
        %v1092 = vld [vmem:[#allocation2 + $0x54] sm:$0xe]
        %v1093 = vld [vmem:[#allocation2 + $0x60] sm:$0xe]
        %v1094 = vld [vmem:[#allocation2 + $0x6c] sm:$0xe]
        %v1095 = vld [vmem:[#allocation2 + $0x78] sm:$0xe]
        %v1096 = vld [vmem:[#allocation2 + $0x84] sm:$0xe]
        %v1097 = vld [vmem:[#allocation2 + $0x90] sm:$0xe]
        %v1098 = vld [vmem:[#allocation2 + $0x9c] sm:$0xe]
        %v1099 = vld [vmem:[#allocation2 + $0xa8] sm:$0xe]
        %v1100 = vld [vmem:[#allocation2 + $0xb4] sm:$0xe]
        %v1101 = vld [vmem:[#allocation2 + $0xc0] sm:$0xe]
        %v1102 = vld [vmem:[#allocation2 + $0xcc] sm:$0xe]
        %v1139 = vunpack.c.l.b16 %v1031
        %v1140 = vunpack.c.l.b16 %v1032
        %v1141 = vunpack.c.l.b16 %v1033
        %v1142 = vunpack.c.l.b16 %v1034
        %v1143 = vunpack.c.l.b16 %v1035
        %v1144 = vunpack.c.l.b16 %v1036
        %v1145 = vunpack.c.l.b16 %v1037
        %v1146 = vunpack.c.l.b16 %v1038
        %v1147 = vunpack.c.l.b16 %v1039
        %v1148 = vunpack.c.l.b16 %v1040
        %v1149 = vunpack.c.l.b16 %v1041
        %v1150 = vunpack.c.l.b16 %v1042
        %v1151 = vunpack.c.l.b16 %v1043
        %v1152 = vunpack.c.l.b16 %v1044
        %v1153 = vunpack.c.l.b16 %v1045
        %v1154 = vunpack.c.l.b16 %v1046
        %v1155 = vunpack.c.l.b16 %v1047
        %v1156 = vunpack.c.l.b16 %v1048
        %v1157 = vunpack.c.l.b16 %v1049
        %v1158 = vunpack.c.l.b16 %v1050
        %v1159 = vunpack.c.l.b16 %v1051
        %v1160 = vunpack.c.l.b16 %v1052
        %v1161 = vunpack.c.l.b16 %v1053
        %v1162 = vunpack.c.l.b16 %v1054
        %v1163 = vunpack.c.l.b16 %v1055
        %v1164 = vunpack.c.l.b16 %v1056
        %v1165 = vunpack.c.l.b16 %v1057
        %v1166 = vunpack.c.l.b16 %v1058
        %v1167 = vunpack.c.l.b16 %v1059
        %v1168 = vunpack.c.l.b16 %v1060
        %v1169 = vunpack.c.l.b16 %v1061
        %v1170 = vunpack.c.l.b16 %v1062
        %v1171 = vunpack.c.l.b16 %v1063
        %v1172 = vunpack.c.l.b16 %v1064
        %v1173 = vunpack.c.l.b16 %v1065
        %v1174 = vunpack.c.l.b16 %v1066
        %v1175 = vpack.c.b16 %v1140, %v1139
        %v1176 = vpack.c.b16 %v1142, %v1141
        %v1177 = vpack.c.b16 %v1144, %v1143
        %v1178 = vpack.c.b16 %v1146, %v1145
        %v1179 = vpack.c.b16 %v1148, %v1147
        %v1180 = vpack.c.b16 %v1150, %v1149
        %v1181 = vpack.c.b16 %v1152, %v1151
        %v1182 = vpack.c.b16 %v1154, %v1153
        %v1183 = vpack.c.b16 %v1156, %v1155
        %v1184 = vpack.c.b16 %v1158, %v1157
        %v1185 = vpack.c.b16 %v1160, %v1159
        %v1186 = vpack.c.b16 %v1162, %v1161
        %v1187 = vpack.c.b16 %v1164, %v1163
        %v1188 = vpack.c.b16 %v1166, %v1165
        %v1189 = vpack.c.b16 %v1168, %v1167
        %v1190 = vpack.c.b16 %v1170, %v1169
        %v1191 = vpack.c.b16 %v1172, %v1171
        %v1192 = vpack.c.b16 %v1174, %v1173
        %v1211 = vunpack.c.l.b16 %v1067
        %v1212 = vunpack.c.l.b16 %v1068
        %v1213 = vunpack.c.l.b16 %v1069
        %v1214 = vunpack.c.l.b16 %v1070
        %v1215 = vunpack.c.l.b16 %v1071
        %v1216 = vunpack.c.l.b16 %v1072
        %v1217 = vunpack.c.l.b16 %v1073
        %v1218 = vunpack.c.l.b16 %v1074
        %v1219 = vunpack.c.l.b16 %v1075
        %v1220 = vunpack.c.l.b16 %v1076
        %v1221 = vunpack.c.l.b16 %v1077
        %v1222 = vunpack.c.l.b16 %v1078
        %v1223 = vunpack.c.l.b16 %v1079
        %v1224 = vunpack.c.l.b16 %v1080
        %v1225 = vunpack.c.l.b16 %v1081
        %v1226 = vunpack.c.l.b16 %v1082
        %v1227 = vunpack.c.l.b16 %v1083
        %v1228 = vunpack.c.l.b16 %v1084
        %v1229 = vpack.c.b16 %v1211, %v1211
        %v1230 = vpack.c.b16 %v1212, %v1212
        %v1231 = vpack.c.b16 %v1213, %v1213
        %v1232 = vpack.c.b16 %v1214, %v1214
        %v1233 = vpack.c.b16 %v1215, %v1215
        %v1234 = vpack.c.b16 %v1216, %v1216
        %v1235 = vpack.c.b16 %v1217, %v1217
        %v1236 = vpack.c.b16 %v1218, %v1218
        %v1237 = vpack.c.b16 %v1219, %v1219
        %v1238 = vpack.c.b16 %v1220, %v1220
        %v1239 = vpack.c.b16 %v1221, %v1221
        %v1240 = vpack.c.b16 %v1222, %v1222
        %v1241 = vpack.c.b16 %v1223, %v1223
        %v1242 = vpack.c.b16 %v1224, %v1224
        %v1243 = vpack.c.b16 %v1225, %v1225
        %v1244 = vpack.c.b16 %v1226, %v1226
        %v1245 = vpack.c.b16 %v1227, %v1227
        %v1246 = vpack.c.b16 %v1228, %v1228
        %vm1247 = vsmask.f32 7424
        %v1249 = vshrl.u32 %v1175, 16
        %v1251 = vshll.u32 %v1175, 16
        %v1253 = vrot.slane %v1251, 1
        %v1254 = vor.u32 %v1249, %v1253
        %v1256 = vshll.u32 %v1229, 16
        %v1258 = vrot.slane %v1256, 1
        %v1259 = vsel %vm1247, %v1254, %v1258
        %v1261 = vshrl.u32 %v1176, 16
        %v1263 = vshll.u32 %v1176, 16
        %v1265 = vrot.slane %v1263, 1
        %v1266 = vor.u32 %v1261, %v1265
        %v1268 = vshll.u32 %v1230, 16
        %v1270 = vrot.slane %v1268, 1
        %v1271 = vsel %vm1247, %v1266, %v1270
        %v1273 = vshrl.u32 %v1177, 16
        %v1275 = vshll.u32 %v1177, 16
        %v1277 = vrot.slane %v1275, 1
        %v1278 = vor.u32 %v1273, %v1277
        %v1280 = vshll.u32 %v1231, 16
        %v1282 = vrot.slane %v1280, 1
        %v1283 = vsel %vm1247, %v1278, %v1282
        %v1285 = vshrl.u32 %v1178, 16
        %v1287 = vshll.u32 %v1178, 16
        %v1289 = vrot.slane %v1287, 1
        %v1290 = vor.u32 %v1285, %v1289
        %v1292 = vshll.u32 %v1232, 16
        %v1294 = vrot.slane %v1292, 1
        %v1295 = vsel %vm1247, %v1290, %v1294
        %v1297 = vshrl.u32 %v1179, 16
        %v1299 = vshll.u32 %v1179, 16
        %v1301 = vrot.slane %v1299, 1
        %v1302 = vor.u32 %v1297, %v1301
        %v1304 = vshll.u32 %v1233, 16
        %v1306 = vrot.slane %v1304, 1
        %v1307 = vsel %vm1247, %v1302, %v1306
        %v1309 = vshrl.u32 %v1180, 16
        %v1311 = vshll.u32 %v1180, 16
        %v1313 = vrot.slane %v1311, 1
        %v1314 = vor.u32 %v1309, %v1313
        %v1316 = vshll.u32 %v1234, 16
        %v1318 = vrot.slane %v1316, 1
        %v1319 = vsel %vm1247, %v1314, %v1318
        %v1321 = vshrl.u32 %v1181, 16
        %v1323 = vshll.u32 %v1181, 16
        %v1325 = vrot.slane %v1323, 1
        %v1326 = vor.u32 %v1321, %v1325
        %v1328 = vshll.u32 %v1235, 16
        %v1330 = vrot.slane %v1328, 1
        %v1331 = vsel %vm1247, %v1326, %v1330
        %v1333 = vshrl.u32 %v1182, 16
        %v1335 = vshll.u32 %v1182, 16
        %v1337 = vrot.slane %v1335, 1
        %v1338 = vor.u32 %v1333, %v1337
        %v1340 = vshll.u32 %v1236, 16
        %v1342 = vrot.slane %v1340, 1
        %v1343 = vsel %vm1247, %v1338, %v1342
        %v1345 = vshrl.u32 %v1183, 16
        %v1347 = vshll.u32 %v1183, 16
        %v1349 = vrot.slane %v1347, 1
        %v1350 = vor.u32 %v1345, %v1349
        %v1352 = vshll.u32 %v1237, 16
        %v1354 = vrot.slane %v1352, 1
        %v1355 = vsel %vm1247, %v1350, %v1354
        %v1357 = vshrl.u32 %v1184, 16
        %v1359 = vshll.u32 %v1184, 16
        %v1361 = vrot.slane %v1359, 1
        %v1362 = vor.u32 %v1357, %v1361
        %v1364 = vshll.u32 %v1238, 16
        %v1366 = vrot.slane %v1364, 1
        %v1367 = vsel %vm1247, %v1362, %v1366
        %v1369 = vshrl.u32 %v1185, 16
        %v1371 = vshll.u32 %v1185, 16
        %v1373 = vrot.slane %v1371, 1
        %v1374 = vor.u32 %v1369, %v1373
        %v1376 = vshll.u32 %v1239, 16
        %v1378 = vrot.slane %v1376, 1
        %v1379 = vsel %vm1247, %v1374, %v1378
        %v1381 = vshrl.u32 %v1186, 16
        %v1383 = vshll.u32 %v1186, 16
        %v1385 = vrot.slane %v1383, 1
        %v1386 = vor.u32 %v1381, %v1385
        %v1388 = vshll.u32 %v1240, 16
        %v1390 = vrot.slane %v1388, 1
        %v1391 = vsel %vm1247, %v1386, %v1390
        %v1393 = vshrl.u32 %v1187, 16
        %v1395 = vshll.u32 %v1187, 16
        %v1397 = vrot.slane %v1395, 1
        %v1398 = vor.u32 %v1393, %v1397
        %v1400 = vshll.u32 %v1241, 16
        %v1402 = vrot.slane %v1400, 1
        %v1403 = vsel %vm1247, %v1398, %v1402
        %v1405 = vshrl.u32 %v1188, 16
        %v1407 = vshll.u32 %v1188, 16
        %v1409 = vrot.slane %v1407, 1
        %v1410 = vor.u32 %v1405, %v1409
        %v1412 = vshll.u32 %v1242, 16
        %v1414 = vrot.slane %v1412, 1
        %v1415 = vsel %vm1247, %v1410, %v1414
        %v1417 = vshrl.u32 %v1189, 16
        %v1419 = vshll.u32 %v1189, 16
        %v1421 = vrot.slane %v1419, 1
        %v1422 = vor.u32 %v1417, %v1421
        %v1424 = vshll.u32 %v1243, 16
        %v1426 = vrot.slane %v1424, 1
        %v1427 = vsel %vm1247, %v1422, %v1426
        %v1429 = vshrl.u32 %v1190, 16
        %v1431 = vshll.u32 %v1190, 16
        %v1433 = vrot.slane %v1431, 1
        %v1434 = vor.u32 %v1429, %v1433
        %v1436 = vshll.u32 %v1244, 16
        %v1438 = vrot.slane %v1436, 1
        %v1439 = vsel %vm1247, %v1434, %v1438
        %v1441 = vshrl.u32 %v1191, 16
        %v1443 = vshll.u32 %v1191, 16
        %v1445 = vrot.slane %v1443, 1
        %v1446 = vor.u32 %v1441, %v1445
        %v1448 = vshll.u32 %v1245, 16
        %v1450 = vrot.slane %v1448, 1
        %v1451 = vsel %vm1247, %v1446, %v1450
        %v1453 = vshrl.u32 %v1192, 16
        %v1455 = vshll.u32 %v1192, 16
        %v1457 = vrot.slane %v1455, 1
        %v1458 = vor.u32 %v1453, %v1457
        %v1460 = vshll.u32 %v1246, 16
        %v1462 = vrot.slane %v1460, 1
        %v1463 = vsel %vm1247, %v1458, %v1462
        %1464 = vrot.lane.b32.xlu0 %v1259, 4
        %v1465 = vpop.permute.xlu0 %1464
        %1466 = vrot.lane.b32.xlu0 %v1271, 4
        %v1467 = vpop.permute.xlu0 %1466
        %1468 = vrot.lane.b32.xlu0 %v1283, 4
        %v1469 = vpop.permute.xlu0 %1468
        %1470 = vrot.lane.b32.xlu0 %v1295, 4
        %v1471 = vpop.permute.xlu0 %1470
        %1472 = vrot.lane.b32.xlu0 %v1307, 4
        %v1473 = vpop.permute.xlu0 %1472
        %1474 = vrot.lane.b32.xlu0 %v1319, 4
        %v1475 = vpop.permute.xlu0 %1474
        %1476 = vrot.lane.b32.xlu0 %v1331, 4
        %v1477 = vpop.permute.xlu0 %1476
        %1478 = vrot.lane.b32.xlu0 %v1343, 4
        %v1479 = vpop.permute.xlu0 %1478
        %1480 = vrot.lane.b32.xlu0 %v1355, 4
        %v1481 = vpop.permute.xlu0 %1480
        %1482 = vrot.lane.b32.xlu0 %v1367, 4
        %v1483 = vpop.permute.xlu0 %1482
        %1484 = vrot.lane.b32.xlu0 %v1379, 4
        %v1485 = vpop.permute.xlu0 %1484
        %1486 = vrot.lane.b32.xlu0 %v1391, 4
        %v1487 = vpop.permute.xlu0 %1486
        %1488 = vrot.lane.b32.xlu0 %v1403, 4
        %v1489 = vpop.permute.xlu0 %1488
        %1490 = vrot.lane.b32.xlu0 %v1415, 4
        %v1491 = vpop.permute.xlu0 %1490
        %1492 = vrot.lane.b32.xlu0 %v1427, 4
        %v1493 = vpop.permute.xlu0 %1492
        %1494 = vrot.lane.b32.xlu0 %v1439, 4
        %v1495 = vpop.permute.xlu0 %1494
        %1496 = vrot.lane.b32.xlu0 %v1451, 4
        %v1497 = vpop.permute.xlu0 %1496
        %1498 = vrot.lane.b32.xlu0 %v1463, 4
        %v1499 = vpop.permute.xlu0 %1498
        %v1518 = vunpack.c.l.b16 %v1085
        %v1519 = vunpack.c.l.b16 %v1086
        %v1520 = vunpack.c.l.b16 %v1087
        %v1521 = vunpack.c.l.b16 %v1088
        %v1522 = vunpack.c.l.b16 %v1089
        %v1523 = vunpack.c.l.b16 %v1090
        %v1524 = vunpack.c.l.b16 %v1091
        %v1525 = vunpack.c.l.b16 %v1092
        %v1526 = vunpack.c.l.b16 %v1093
        %v1527 = vunpack.c.l.b16 %v1094
        %v1528 = vunpack.c.l.b16 %v1095
        %v1529 = vunpack.c.l.b16 %v1096
        %v1530 = vunpack.c.l.b16 %v1097
        %v1531 = vunpack.c.l.b16 %v1098
        %v1532 = vunpack.c.l.b16 %v1099
        %v1533 = vunpack.c.l.b16 %v1100
        %v1534 = vunpack.c.l.b16 %v1101
        %v1535 = vunpack.c.l.b16 %v1102
        %v1536 = vpack.c.b16 %v1140, %v1518
        %v1537 = vpack.c.b16 %v1142, %v1519
        %v1538 = vpack.c.b16 %v1144, %v1520
        %v1539 = vpack.c.b16 %v1146, %v1521
        %v1540 = vpack.c.b16 %v1148, %v1522
        %v1541 = vpack.c.b16 %v1150, %v1523
        %v1542 = vpack.c.b16 %v1152, %v1524
        %v1543 = vpack.c.b16 %v1154, %v1525
        %v1544 = vpack.c.b16 %v1156, %v1526
        %v1545 = vpack.c.b16 %v1158, %v1527
        %v1546 = vpack.c.b16 %v1160, %v1528
        %v1547 = vpack.c.b16 %v1162, %v1529
        %v1548 = vpack.c.b16 %v1164, %v1530
        %v1549 = vpack.c.b16 %v1166, %v1531
        %v1550 = vpack.c.b16 %v1168, %v1532
        %v1551 = vpack.c.b16 %v1170, %v1533
        %v1552 = vpack.c.b16 %v1172, %v1534
        %v1553 = vpack.c.b16 %v1174, %v1535
        %vm1554 = vcmask 1046528
        %v1555 = vrot.slane %v1536, 1
        %v1556 = vrot.slane %v1229, 1
        %v1557 = vsel %vm1554, %v1555, %v1556
        %v1558 = vrot.slane %v1537, 1
        %v1559 = vrot.slane %v1230, 1
        %v1560 = vsel %vm1554, %v1558, %v1559
        %v1561 = vrot.slane %v1538, 1
        %v1562 = vrot.slane %v1231, 1
        %v1563 = vsel %vm1554, %v1561, %v1562
        %v1564 = vrot.slane %v1539, 1
        %v1565 = vrot.slane %v1232, 1
        %v1566 = vsel %vm1554, %v1564, %v1565
        %v1567 = vrot.slane %v1540, 1
        %v1568 = vrot.slane %v1233, 1
        %v1569 = vsel %vm1554, %v1567, %v1568
        %v1570 = vrot.slane %v1541, 1
        %v1571 = vrot.slane %v1234, 1
        %v1572 = vsel %vm1554, %v1570, %v1571
        %v1573 = vrot.slane %v1542, 1
        %v1574 = vrot.slane %v1235, 1
        %v1575 = vsel %vm1554, %v1573, %v1574
        %v1576 = vrot.slane %v1543, 1
        %v1577 = vrot.slane %v1236, 1
        %v1578 = vsel %vm1554, %v1576, %v1577
        %v1579 = vrot.slane %v1544, 1
        %v1580 = vrot.slane %v1237, 1
        %v1581 = vsel %vm1554, %v1579, %v1580
        %v1582 = vrot.slane %v1545, 1
        %v1583 = vrot.slane %v1238, 1
        %v1584 = vsel %vm1554, %v1582, %v1583
        %v1585 = vrot.slane %v1546, 1
        %v1586 = vrot.slane %v1239, 1
        %v1587 = vsel %vm1554, %v1585, %v1586
        %v1588 = vrot.slane %v1547, 1
        %v1589 = vrot.slane %v1240, 1
        %v1590 = vsel %vm1554, %v1588, %v1589
        %v1591 = vrot.slane %v1548, 1
        %v1592 = vrot.slane %v1241, 1
        %v1593 = vsel %vm1554, %v1591, %v1592
        %v1594 = vrot.slane %v1549, 1
        %v1595 = vrot.slane %v1242, 1
        %v1596 = vsel %vm1554, %v1594, %v1595
        %v1597 = vrot.slane %v1550, 1
        %v1598 = vrot.slane %v1243, 1
        %v1599 = vsel %vm1554, %v1597, %v1598
        %v1600 = vrot.slane %v1551, 1
        %v1601 = vrot.slane %v1244, 1
        %v1602 = vsel %vm1554, %v1600, %v1601
        %v1603 = vrot.slane %v1552, 1
        %v1604 = vrot.slane %v1245, 1
        %v1605 = vsel %vm1554, %v1603, %v1604
        %v1606 = vrot.slane %v1553, 1
        %v1607 = vrot.slane %v1246, 1
        %v1608 = vsel %vm1554, %v1606, %v1607
        %1609 = vrot.lane.b32.xlu0 %v1557, 8
        %v1610 = vpop.permute.xlu0 %1609
        %1611 = vrot.lane.b32.xlu0 %v1560, 8
        %v1612 = vpop.permute.xlu0 %1611
        %1613 = vrot.lane.b32.xlu0 %v1563, 8
        %v1614 = vpop.permute.xlu0 %1613
        %1615 = vrot.lane.b32.xlu0 %v1566, 8
        %v1616 = vpop.permute.xlu0 %1615
        %1617 = vrot.lane.b32.xlu0 %v1569, 8
        %v1618 = vpop.permute.xlu0 %1617
        %1619 = vrot.lane.b32.xlu0 %v1572, 8
        %v1620 = vpop.permute.xlu0 %1619
        %1621 = vrot.lane.b32.xlu0 %v1575, 8
        %v1622 = vpop.permute.xlu0 %1621
        %1623 = vrot.lane.b32.xlu0 %v1578, 8
        %v1624 = vpop.permute.xlu0 %1623
        %1625 = vrot.lane.b32.xlu0 %v1581, 8
        %v1626 = vpop.permute.xlu0 %1625
        %1627 = vrot.lane.b32.xlu0 %v1584, 8
        %v1628 = vpop.permute.xlu0 %1627
        %1629 = vrot.lane.b32.xlu0 %v1587, 8
        %v1630 = vpop.permute.xlu0 %1629
        %1631 = vrot.lane.b32.xlu0 %v1590, 8
        %v1632 = vpop.permute.xlu0 %1631
        %1633 = vrot.lane.b32.xlu0 %v1593, 8
        %v1634 = vpop.permute.xlu0 %1633
        %1635 = vrot.lane.b32.xlu0 %v1596, 8
        %v1636 = vpop.permute.xlu0 %1635
        %1637 = vrot.lane.b32.xlu0 %v1599, 8
        %v1638 = vpop.permute.xlu0 %1637
        %1639 = vrot.lane.b32.xlu0 %v1602, 8
        %v1640 = vpop.permute.xlu0 %1639
        %1641 = vrot.lane.b32.xlu0 %v1605, 8
        %v1642 = vpop.permute.xlu0 %1641
        %1643 = vrot.lane.b32.xlu0 %v1608, 8
        %v1644 = vpop.permute.xlu0 %1643
        %vm1645 = vcmask 31744
        %v1647 = vsel %vm1645, %v1175, %v1465
        %v1649 = vsel %vm1645, %v1176, %v1467
        %v1651 = vsel %vm1645, %v1177, %v1469
        %v1653 = vsel %vm1645, %v1178, %v1471
        %v1655 = vsel %vm1645, %v1179, %v1473
        %v1657 = vsel %vm1645, %v1180, %v1475
        %v1659 = vsel %vm1645, %v1181, %v1477
        %v1661 = vsel %vm1645, %v1182, %v1479
        %v1663 = vsel %vm1645, %v1183, %v1481
        %v1665 = vsel %vm1645, %v1184, %v1483
        %v1667 = vsel %vm1645, %v1185, %v1485
        %v1669 = vsel %vm1645, %v1186, %v1487
        %v1671 = vsel %vm1645, %v1187, %v1489
        %v1673 = vsel %vm1645, %v1188, %v1491
        %v1675 = vsel %vm1645, %v1189, %v1493
        %v1677 = vsel %vm1645, %v1190, %v1495
        %v1679 = vsel %vm1645, %v1191, %v1497
        %v1681 = vsel %vm1645, %v1192, %v1499
        %vm1682 = vcmask 64512
        %v1684 = vsel %vm1682, %v1647, %v1610
        %v1686 = vsel %vm1682, %v1649, %v1612
        %v1688 = vsel %vm1682, %v1651, %v1614
        %v1690 = vsel %vm1682, %v1653, %v1616
        %v1692 = vsel %vm1682, %v1655, %v1618
        %v1694 = vsel %vm1682, %v1657, %v1620
        %v1696 = vsel %vm1682, %v1659, %v1622
        %v1698 = vsel %vm1682, %v1661, %v1624
        %v1700 = vsel %vm1682, %v1663, %v1626
        %v1702 = vsel %vm1682, %v1665, %v1628
        %v1704 = vsel %vm1682, %v1667, %v1630
        %v1706 = vsel %vm1682, %v1669, %v1632
        %v1708 = vsel %vm1682, %v1671, %v1634
        %v1710 = vsel %vm1682, %v1673, %v1636
        %v1712 = vsel %vm1682, %v1675, %v1638
        %v1714 = vsel %vm1682, %v1677, %v1640
        %v1716 = vsel %vm1682, %v1679, %v1642
        %v1718 = vsel %vm1682, %v1681, %v1644
        %v1719 = vld [vmem:[%s1] sm:$0xf]
        %v1720 = vld [vmem:[%s1 + $0x4] sm:$0x3]
        %s1721 = scalar_lea.vmem %s1, 8
        %v1722 = vld [vmem:[%s1721] sm:$0xf]
        %v1723 = vld [vmem:[%s1721 + $0x4] sm:$0x3]
        %v1726 = vunpack.c.l.b16 %v1722
        %v1727 = vunpack.c.l.b16 %v1723
        %v1728 = vpack.c.b16 %v1727, %v1726
        %vm1729 = vcmask 97280
        %v1730 = vsel %vm1729, %v1686, 0
        %v1732 = vsel %vm1729, %v1688, 0
        %v1734 = vsel %vm1729, %v1690, 0
        %v1736 = vsel %vm1729, %v1692, 0
        %v1738 = vsel %vm1729, %v1694, 0
        %v1740 = vsel %vm1729, %v1696, 0
        %v1742 = vsel %vm1729, %v1698, 0
        %v1744 = vsel %vm1729, %v1700, 0
        %v1746 = vsel %vm1729, %v1702, 0
        %v1748 = vsel %vm1729, %v1704, 0
        %v1750 = vsel %vm1729, %v1706, 0
        %v1752 = vsel %vm1729, %v1708, 0
        %v1754 = vsel %vm1729, %v1710, 0
        %v1756 = vsel %vm1729, %v1712, 0
        %v1758 = vsel %vm1729, %v1714, 0
        %v1760 = vsel %vm1729, %v1716, 0
        %vm1762 = vcmask 1045504
        %v1764 = vsel %vm1762, %v1728, 0
        %1766 = vmatpush.bf16.msra.mxu0 0
        %1767 = vmatpush.bf16.msra.mxu0 0
        %1768 = vmatpush.bf16.msra.mxu0 0
        %1769 = vmatpush.bf16.msra.mxu0 0
        %1770 = vmatpush.bf16.msra.mxu0 0
        %1771 = vmatpush.bf16.msra.mxu0 0
        %1772 = vmatpush.bf16.msra.mxu0 0
        %1773 = vmatpush.bf16.msra.mxu0 %v1764
        %1774 = vmatmul.bf16.gmra.mxu0 %v1730
        %v1775 = vpop.f32.mrf.mxu0
        %v1776 = vadd.f32 0.0, %v1775
        %v1777 = vpop.f32.mrf.mxu0
        %v1778 = vadd.f32 0.0, %v1777
        %1779 = vmatmul.bf16.gmra.mxu0 %v1732
        %v1780 = vpop.f32.mrf.mxu0
        %v1781 = vadd.f32 0.0, %v1780
        %v1782 = vpop.f32.mrf.mxu0
        %v1783 = vadd.f32 0.0, %v1782
        %1784 = vmatmul.bf16.gmra.mxu0 %v1734
        %v1785 = vpop.f32.mrf.mxu0
        %v1786 = vadd.f32 0.0, %v1785
        %v1787 = vpop.f32.mrf.mxu0
        %v1788 = vadd.f32 0.0, %v1787
        %1789 = vmatmul.bf16.gmra.mxu0 %v1736
        %v1790 = vpop.f32.mrf.mxu0
        %v1791 = vadd.f32 0.0, %v1790
        %v1792 = vpop.f32.mrf.mxu0
        %v1793 = vadd.f32 0.0, %v1792
        %1794 = vmatmul.bf16.gmra.mxu0 %v1738
        %v1795 = vpop.f32.mrf.mxu0
        %v1796 = vadd.f32 0.0, %v1795
        %v1797 = vpop.f32.mrf.mxu0
        %v1798 = vadd.f32 0.0, %v1797
        %1799 = vmatmul.bf16.gmra.mxu0 %v1740
        %v1800 = vpop.f32.mrf.mxu0
        %v1801 = vadd.f32 0.0, %v1800
        %v1802 = vpop.f32.mrf.mxu0
        %v1803 = vadd.f32 0.0, %v1802
        %1804 = vmatmul.bf16.gmra.mxu0 %v1742
        %v1805 = vpop.f32.mrf.mxu0
        %v1806 = vadd.f32 0.0, %v1805
        %v1807 = vpop.f32.mrf.mxu0
        %v1808 = vadd.f32 0.0, %v1807
        %1809 = vmatmul.bf16.gmra.mxu0 %v1744
        %v1810 = vpop.f32.mrf.mxu0
        %v1811 = vadd.f32 0.0, %v1810
        %v1812 = vpop.f32.mrf.mxu0
        %v1813 = vadd.f32 0.0, %v1812
        %1814 = vmatmul.bf16.gmra.mxu0 %v1746
        %v1815 = vpop.f32.mrf.mxu0
        %v1816 = vadd.f32 0.0, %v1815
        %v1817 = vpop.f32.mrf.mxu0
        %v1818 = vadd.f32 0.0, %v1817
        %1819 = vmatmul.bf16.gmra.mxu0 %v1748
        %v1820 = vpop.f32.mrf.mxu0
        %v1821 = vadd.f32 0.0, %v1820
        %v1822 = vpop.f32.mrf.mxu0
        %v1823 = vadd.f32 0.0, %v1822
        %1824 = vmatmul.bf16.gmra.mxu0 %v1750
        %v1825 = vpop.f32.mrf.mxu0
        %v1826 = vadd.f32 0.0, %v1825
        %v1827 = vpop.f32.mrf.mxu0
        %v1828 = vadd.f32 0.0, %v1827
        %1829 = vmatmul.bf16.gmra.mxu0 %v1752
        %v1830 = vpop.f32.mrf.mxu0
        %v1831 = vadd.f32 0.0, %v1830
        %v1832 = vpop.f32.mrf.mxu0
        %v1833 = vadd.f32 0.0, %v1832
        %1834 = vmatmul.bf16.gmra.mxu0 %v1754
        %v1835 = vpop.f32.mrf.mxu0
        %v1836 = vadd.f32 0.0, %v1835
        %v1837 = vpop.f32.mrf.mxu0
        %v1838 = vadd.f32 0.0, %v1837
        %1839 = vmatmul.bf16.gmra.mxu0 %v1756
        %v1840 = vpop.f32.mrf.mxu0
        %v1841 = vadd.f32 0.0, %v1840
        %v1842 = vpop.f32.mrf.mxu0
        %v1843 = vadd.f32 0.0, %v1842
        %1844 = vmatmul.bf16.gmra.mxu0 %v1758
        %v1845 = vpop.f32.mrf.mxu0
        %v1846 = vadd.f32 0.0, %v1845
        %v1847 = vpop.f32.mrf.mxu0
        %v1848 = vadd.f32 0.0, %v1847
        %1849 = vmatmul.bf16.gmra.mxu0 %v1760
        %v1850 = vpop.f32.mrf.mxu0
        %v1851 = vadd.f32 0.0, %v1850
        %v1852 = vpop.f32.mrf.mxu0
        %v1853 = vadd.f32 0.0, %v1852
        %1854 = vdwg.mxu0
        %v1857 = vunpack.c.l.b16 %v1719
        %v1858 = vunpack.c.l.b16 %v1720
        %v1859 = vpack.c.b16 %v1858, %v1857
        %v1860 = vsel %vm1729, %v1684, 0
        %v1863 = vsel %vm1762, %v1859, 0
        %1865 = vmatpush.bf16.msra.mxu0 0
        %1866 = vmatpush.bf16.msra.mxu0 0
        %1867 = vmatpush.bf16.msra.mxu0 0
        %1868 = vmatpush.bf16.msra.mxu0 0
        %1869 = vmatpush.bf16.msra.mxu0 0
        %1870 = vmatpush.bf16.msra.mxu0 0
        %1871 = vmatpush.bf16.msra.mxu0 0
        %1872 = vmatpush.bf16.msra.mxu0 %v1863
        %1873 = vmatmul.bf16.gmra.mxu0 %v1860
        %v1874 = vpop.f32.mrf.mxu0
        %v1875 = vadd.f32 %v1776, %v1874
        %v1876 = vpop.f32.mrf.mxu0
        %v1877 = vadd.f32 %v1778, %v1876
        %1878 = vmatmul.bf16.gmra.mxu0 %v1730
        %v1879 = vpop.f32.mrf.mxu0
        %v1880 = vadd.f32 %v1781, %v1879
        %v1881 = vpop.f32.mrf.mxu0
        %v1882 = vadd.f32 %v1783, %v1881
        %1883 = vmatmul.bf16.gmra.mxu0 %v1732
        %v1884 = vpop.f32.mrf.mxu0
        %v1885 = vadd.f32 %v1786, %v1884
        %v1886 = vpop.f32.mrf.mxu0
        %v1887 = vadd.f32 %v1788, %v1886
        %1888 = vmatmul.bf16.gmra.mxu0 %v1734
        %v1889 = vpop.f32.mrf.mxu0
        %v1890 = vadd.f32 %v1791, %v1889
        %v1891 = vpop.f32.mrf.mxu0
        %v1892 = vadd.f32 %v1793, %v1891
        %1893 = vmatmul.bf16.gmra.mxu0 %v1736
        %v1894 = vpop.f32.mrf.mxu0
        %v1895 = vadd.f32 %v1796, %v1894
        %v1896 = vpop.f32.mrf.mxu0
        %v1897 = vadd.f32 %v1798, %v1896
        %1898 = vmatmul.bf16.gmra.mxu0 %v1738
        %v1899 = vpop.f32.mrf.mxu0
        %v1900 = vadd.f32 %v1801, %v1899
        %v1901 = vpop.f32.mrf.mxu0
        %v1902 = vadd.f32 %v1803, %v1901
        %1903 = vmatmul.bf16.gmra.mxu0 %v1740
        %v1904 = vpop.f32.mrf.mxu0
        %v1905 = vadd.f32 %v1806, %v1904
        %v1906 = vpop.f32.mrf.mxu0
        %v1907 = vadd.f32 %v1808, %v1906
        %1908 = vmatmul.bf16.gmra.mxu0 %v1742
        %v1909 = vpop.f32.mrf.mxu0
        %v1910 = vadd.f32 %v1811, %v1909
        %v1911 = vpop.f32.mrf.mxu0
        %v1912 = vadd.f32 %v1813, %v1911
        %1913 = vmatmul.bf16.gmra.mxu0 %v1744
        %v1914 = vpop.f32.mrf.mxu0
        %v1915 = vadd.f32 %v1816, %v1914
        %v1916 = vpop.f32.mrf.mxu0
        %v1917 = vadd.f32 %v1818, %v1916
        %1918 = vmatmul.bf16.gmra.mxu0 %v1746
        %v1919 = vpop.f32.mrf.mxu0
        %v1920 = vadd.f32 %v1821, %v1919
        %v1921 = vpop.f32.mrf.mxu0
        %v1922 = vadd.f32 %v1823, %v1921
        %1923 = vmatmul.bf16.gmra.mxu0 %v1748
        %v1924 = vpop.f32.mrf.mxu0
        %v1925 = vadd.f32 %v1826, %v1924
        %v1926 = vpop.f32.mrf.mxu0
        %v1927 = vadd.f32 %v1828, %v1926
        %1928 = vmatmul.bf16.gmra.mxu0 %v1750
        %v1929 = vpop.f32.mrf.mxu0
        %v1930 = vadd.f32 %v1831, %v1929
        %v1931 = vpop.f32.mrf.mxu0
        %v1932 = vadd.f32 %v1833, %v1931
        %1933 = vmatmul.bf16.gmra.mxu0 %v1752
        %v1934 = vpop.f32.mrf.mxu0
        %v1935 = vadd.f32 %v1836, %v1934
        %v1936 = vpop.f32.mrf.mxu0
        %v1937 = vadd.f32 %v1838, %v1936
        %1938 = vmatmul.bf16.gmra.mxu0 %v1754
        %v1939 = vpop.f32.mrf.mxu0
        %v1940 = vadd.f32 %v1841, %v1939
        %v1941 = vpop.f32.mrf.mxu0
        %v1942 = vadd.f32 %v1843, %v1941
        %1943 = vmatmul.bf16.gmra.mxu0 %v1756
        %v1944 = vpop.f32.mrf.mxu0
        %v1945 = vadd.f32 %v1846, %v1944
        %v1946 = vpop.f32.mrf.mxu0
        %v1947 = vadd.f32 %v1848, %v1946
        %1948 = vmatmul.bf16.gmra.mxu0 %v1758
        %v1949 = vpop.f32.mrf.mxu0
        %v1950 = vadd.f32 %v1851, %v1949
        %v1951 = vpop.f32.mrf.mxu0
        %v1952 = vadd.f32 %v1853, %v1951
        %1953 = vdwg.mxu0
        %s1954 = scalar_lea.vmem %s1, 16
        %v1955 = vld [vmem:[%s1954] sm:$0xf]
        %v1956 = vld [vmem:[%s1954 + $0x4] sm:$0x3]
        %v1959 = vunpack.c.l.b16 %v1955
        %v1960 = vunpack.c.l.b16 %v1956
        %v1961 = vpack.c.b16 %v1960, %v1959
        %v1962 = vsel %vm1729, %v1718, 0
        %v1965 = vsel %vm1762, %v1961, 0
        %1967 = vmatpush.bf16.msra.mxu0 0
        %1968 = vmatpush.bf16.msra.mxu0 0
        %1969 = vmatpush.bf16.msra.mxu0 0
        %1970 = vmatpush.bf16.msra.mxu0 0
        %1971 = vmatpush.bf16.msra.mxu0 0
        %1972 = vmatpush.bf16.msra.mxu0 0
        %1973 = vmatpush.bf16.msra.mxu0 0
        %1974 = vmatpush.bf16.msra.mxu0 %v1965
        %1975 = vmatmul.bf16.gmra.mxu0 %v1732
        %v1976 = vpop.f32.mrf.mxu0
        %v1977 = vadd.f32 0.0, %v1976
        %v1978 = vpop.f32.mrf.mxu0
        %v1979 = vadd.f32 0.0, %v1978
        %1980 = vmatmul.bf16.gmra.mxu0 %v1734
        %v1981 = vpop.f32.mrf.mxu0
        %v1982 = vadd.f32 0.0, %v1981
        %v1983 = vpop.f32.mrf.mxu0
        %v1984 = vadd.f32 0.0, %v1983
        %1985 = vmatmul.bf16.gmra.mxu0 %v1736
        %v1986 = vpop.f32.mrf.mxu0
        %v1987 = vadd.f32 0.0, %v1986
        %v1988 = vpop.f32.mrf.mxu0
        %v1989 = vadd.f32 0.0, %v1988
        %1990 = vmatmul.bf16.gmra.mxu0 %v1738
        %v1991 = vpop.f32.mrf.mxu0
        %v1992 = vadd.f32 0.0, %v1991
        %v1993 = vpop.f32.mrf.mxu0
        %v1994 = vadd.f32 0.0, %v1993
        %1995 = vmatmul.bf16.gmra.mxu0 %v1740
        %v1996 = vpop.f32.mrf.mxu0
        %v1997 = vadd.f32 0.0, %v1996
        %v1998 = vpop.f32.mrf.mxu0
        %v1999 = vadd.f32 0.0, %v1998
        %2000 = vmatmul.bf16.gmra.mxu0 %v1742
        %v2001 = vpop.f32.mrf.mxu0
        %v2002 = vadd.f32 0.0, %v2001
        %v2003 = vpop.f32.mrf.mxu0
        %v2004 = vadd.f32 0.0, %v2003
        %2005 = vmatmul.bf16.gmra.mxu0 %v1744
        %v2006 = vpop.f32.mrf.mxu0
        %v2007 = vadd.f32 0.0, %v2006
        %v2008 = vpop.f32.mrf.mxu0
        %v2009 = vadd.f32 0.0, %v2008
        %2010 = vmatmul.bf16.gmra.mxu0 %v1746
        %v2011 = vpop.f32.mrf.mxu0
        %v2012 = vadd.f32 0.0, %v2011
        %v2013 = vpop.f32.mrf.mxu0
        %v2014 = vadd.f32 0.0, %v2013
        %2015 = vmatmul.bf16.gmra.mxu0 %v1748
        %v2016 = vpop.f32.mrf.mxu0
        %v2017 = vadd.f32 0.0, %v2016
        %v2018 = vpop.f32.mrf.mxu0
        %v2019 = vadd.f32 0.0, %v2018
        %2020 = vmatmul.bf16.gmra.mxu0 %v1750
        %v2021 = vpop.f32.mrf.mxu0
        %v2022 = vadd.f32 0.0, %v2021
        %v2023 = vpop.f32.mrf.mxu0
        %v2024 = vadd.f32 0.0, %v2023
        %2025 = vmatmul.bf16.gmra.mxu0 %v1752
        %v2026 = vpop.f32.mrf.mxu0
        %v2027 = vadd.f32 0.0, %v2026
        %v2028 = vpop.f32.mrf.mxu0
        %v2029 = vadd.f32 0.0, %v2028
        %2030 = vmatmul.bf16.gmra.mxu0 %v1754
        %v2031 = vpop.f32.mrf.mxu0
        %v2032 = vadd.f32 0.0, %v2031
        %v2033 = vpop.f32.mrf.mxu0
        %v2034 = vadd.f32 0.0, %v2033
        %2035 = vmatmul.bf16.gmra.mxu0 %v1756
        %v2036 = vpop.f32.mrf.mxu0
        %v2037 = vadd.f32 0.0, %v2036
        %v2038 = vpop.f32.mrf.mxu0
        %v2039 = vadd.f32 0.0, %v2038
        %2040 = vmatmul.bf16.gmra.mxu0 %v1758
        %v2041 = vpop.f32.mrf.mxu0
        %v2042 = vadd.f32 0.0, %v2041
        %v2043 = vpop.f32.mrf.mxu0
        %v2044 = vadd.f32 0.0, %v2043
        %2045 = vmatmul.bf16.gmra.mxu0 %v1760
        %v2046 = vpop.f32.mrf.mxu0
        %v2047 = vadd.f32 0.0, %v2046
        %v2048 = vpop.f32.mrf.mxu0
        %v2049 = vadd.f32 0.0, %v2048
        %2050 = vmatmul.bf16.gmra.mxu0 %v1962
        %v2051 = vpop.f32.mrf.mxu0
        %v2052 = vadd.f32 0.0, %v2051
        %v2053 = vpop.f32.mrf.mxu0
        %v2054 = vadd.f32 0.0, %v2053
        %2055 = vdwg.mxu0
        %v2056 = vadd.f32 %v1875, %v1977
        %v2057 = vadd.f32 %v1877, %v1979
        %v2058 = vadd.f32 %v1880, %v1982
        %v2059 = vadd.f32 %v1882, %v1984
        %v2060 = vadd.f32 %v1885, %v1987
        %v2061 = vadd.f32 %v1887, %v1989
        %v2062 = vadd.f32 %v1890, %v1992
        %v2063 = vadd.f32 %v1892, %v1994
        %v2064 = vadd.f32 %v1895, %v1997
        %v2065 = vadd.f32 %v1897, %v1999
        %v2066 = vadd.f32 %v1900, %v2002
        %v2067 = vadd.f32 %v1902, %v2004
        %v2068 = vadd.f32 %v1905, %v2007
        %v2069 = vadd.f32 %v1907, %v2009
        %v2070 = vadd.f32 %v1910, %v2012
        %v2071 = vadd.f32 %v1912, %v2014
        %v2072 = vadd.f32 %v1915, %v2017
        %v2073 = vadd.f32 %v1917, %v2019
        %v2074 = vadd.f32 %v1920, %v2022
        %v2075 = vadd.f32 %v1922, %v2024
        %v2076 = vadd.f32 %v1925, %v2027
        %v2077 = vadd.f32 %v1927, %v2029
        %v2078 = vadd.f32 %v1930, %v2032
        %v2079 = vadd.f32 %v1932, %v2034
        %v2080 = vadd.f32 %v1935, %v2037
        %v2081 = vadd.f32 %v1937, %v2039
        %v2082 = vadd.f32 %v1940, %v2042
        %v2083 = vadd.f32 %v1942, %v2044
        %v2084 = vadd.f32 %v1945, %v2047
        %v2085 = vadd.f32 %v1947, %v2049
        %v2086 = vadd.f32 %v1950, %v2052
        %v2087 = vadd.f32 %v1952, %v2054
        %v2089 = vperm.slane %v1029, 0
        %v2091 = vmul.f32 %v2056, %v2089
        %v2092 = vmul.f32 %v2057, %v2089
        %v2093 = vmul.f32 %v2058, %v2089
        %v2094 = vmul.f32 %v2059, %v2089
        %v2095 = vmul.f32 %v2060, %v2089
        %v2096 = vmul.f32 %v2061, %v2089
        %v2097 = vmul.f32 %v2062, %v2089
        %v2098 = vmul.f32 %v2063, %v2089
        %v2099 = vmul.f32 %v2064, %v2089
        %v2100 = vmul.f32 %v2065, %v2089
        %v2101 = vmul.f32 %v2066, %v2089
        %v2102 = vmul.f32 %v2067, %v2089
        %v2103 = vmul.f32 %v2068, %v2089
        %v2104 = vmul.f32 %v2069, %v2089
        %v2105 = vmul.f32 %v2070, %v2089
        %v2106 = vmul.f32 %v2071, %v2089
        %v2107 = vmul.f32 %v2072, %v2089
        %v2108 = vmul.f32 %v2073, %v2089
        %v2109 = vmul.f32 %v2074, %v2089
        %v2110 = vmul.f32 %v2075, %v2089
        %v2111 = vmul.f32 %v2076, %v2089
        %v2112 = vmul.f32 %v2077, %v2089
        %v2113 = vmul.f32 %v2078, %v2089
        %v2114 = vmul.f32 %v2079, %v2089
        %v2115 = vmul.f32 %v2080, %v2089
        %v2116 = vmul.f32 %v2081, %v2089
        %v2117 = vmul.f32 %v2082, %v2089
        %v2118 = vmul.f32 %v2083, %v2089
        %v2119 = vmul.f32 %v2084, %v2089
        %v2120 = vmul.f32 %v2085, %v2089
        %v2121 = vmul.f32 %v2086, %v2089
        %v2122 = vmul.f32 %v2087, %v2089
        %v2124 = vperm.slane %v1030, 0
        %v2126 = vadd.f32 %v2091, %v2124
        %v2127 = vadd.f32 %v2092, %v2124
        %v2128 = vadd.f32 %v2093, %v2124
        %v2129 = vadd.f32 %v2094, %v2124
        %v2130 = vadd.f32 %v2095, %v2124
        %v2131 = vadd.f32 %v2096, %v2124
        %v2132 = vadd.f32 %v2097, %v2124
        %v2133 = vadd.f32 %v2098, %v2124
        %v2134 = vadd.f32 %v2099, %v2124
        %v2135 = vadd.f32 %v2100, %v2124
        %v2136 = vadd.f32 %v2101, %v2124
        %v2137 = vadd.f32 %v2102, %v2124
        %v2138 = vadd.f32 %v2103, %v2124
        %v2139 = vadd.f32 %v2104, %v2124
        %v2140 = vadd.f32 %v2105, %v2124
        %v2141 = vadd.f32 %v2106, %v2124
        %v2142 = vadd.f32 %v2107, %v2124
        %v2143 = vadd.f32 %v2108, %v2124
        %v2144 = vadd.f32 %v2109, %v2124
        %v2145 = vadd.f32 %v2110, %v2124
        %v2146 = vadd.f32 %v2111, %v2124
        %v2147 = vadd.f32 %v2112, %v2124
        %v2148 = vadd.f32 %v2113, %v2124
        %v2149 = vadd.f32 %v2114, %v2124
        %v2150 = vadd.f32 %v2115, %v2124
        %v2151 = vadd.f32 %v2116, %v2124
        %v2152 = vadd.f32 %v2117, %v2124
        %v2153 = vadd.f32 %v2118, %v2124
        %v2154 = vadd.f32 %v2119, %v2124
        %v2155 = vadd.f32 %v2120, %v2124
        %v2156 = vadd.f32 %v2121, %v2124
        %v2157 = vadd.f32 %v2122, %v2124
        %v2158 = vmax.f32 %v2126, 0.0
        %v2159 = vmax.f32 %v2127, 0.0
        %v2160 = vmax.f32 %v2128, 0.0
        %v2161 = vmax.f32 %v2129, 0.0
        %v2162 = vmax.f32 %v2130, 0.0
        %v2163 = vmax.f32 %v2131, 0.0
        %v2164 = vmax.f32 %v2132, 0.0
        %v2165 = vmax.f32 %v2133, 0.0
        %v2166 = vmax.f32 %v2134, 0.0
        %v2167 = vmax.f32 %v2135, 0.0
        %v2168 = vmax.f32 %v2136, 0.0
        %v2169 = vmax.f32 %v2137, 0.0
        %v2170 = vmax.f32 %v2138, 0.0
        %v2171 = vmax.f32 %v2139, 0.0
        %v2172 = vmax.f32 %v2140, 0.0
        %v2173 = vmax.f32 %v2141, 0.0
        %v2174 = vmax.f32 %v2142, 0.0
        %v2175 = vmax.f32 %v2143, 0.0
        %v2176 = vmax.f32 %v2144, 0.0
        %v2177 = vmax.f32 %v2145, 0.0
        %v2178 = vmax.f32 %v2146, 0.0
        %v2179 = vmax.f32 %v2147, 0.0
        %v2180 = vmax.f32 %v2148, 0.0
        %v2181 = vmax.f32 %v2149, 0.0
        %v2182 = vmax.f32 %v2150, 0.0
        %v2183 = vmax.f32 %v2151, 0.0
        %v2184 = vmax.f32 %v2152, 0.0
        %v2185 = vmax.f32 %v2153, 0.0
        %v2186 = vmax.f32 %v2154, 0.0
        %v2187 = vmax.f32 %v2155, 0.0
        %v2188 = vmax.f32 %v2156, 0.0
        %v2189 = vmax.f32 %v2157, 0.0
        %v2190 = vpack.c.bf16 %v2158, %v2158
        %v2191 = vpack.c.bf16 %v2159, %v2159
        %v2192 = vpack.c.bf16 %v2160, %v2160
        %v2193 = vpack.c.bf16 %v2161, %v2161
        %v2194 = vpack.c.bf16 %v2162, %v2162
        %v2195 = vpack.c.bf16 %v2163, %v2163
        %v2196 = vpack.c.bf16 %v2164, %v2164
        %v2197 = vpack.c.bf16 %v2165, %v2165
        %v2198 = vpack.c.bf16 %v2166, %v2166
        %v2199 = vpack.c.bf16 %v2167, %v2167
        %v2200 = vpack.c.bf16 %v2168, %v2168
        %v2201 = vpack.c.bf16 %v2169, %v2169
        %v2202 = vpack.c.bf16 %v2170, %v2170
        %v2203 = vpack.c.bf16 %v2171, %v2171
        %v2204 = vpack.c.bf16 %v2172, %v2172
        %v2205 = vpack.c.bf16 %v2173, %v2173
        %v2206 = vpack.c.bf16 %v2174, %v2174
        %v2207 = vpack.c.bf16 %v2175, %v2175
        %v2208 = vpack.c.bf16 %v2176, %v2176
        %v2209 = vpack.c.bf16 %v2177, %v2177
        %v2210 = vpack.c.bf16 %v2178, %v2178
        %v2211 = vpack.c.bf16 %v2179, %v2179
        %v2212 = vpack.c.bf16 %v2180, %v2180
        %v2213 = vpack.c.bf16 %v2181, %v2181
        %v2214 = vpack.c.bf16 %v2182, %v2182
        %v2215 = vpack.c.bf16 %v2183, %v2183
        %v2216 = vpack.c.bf16 %v2184, %v2184
        %v2217 = vpack.c.bf16 %v2185, %v2185
        %v2218 = vpack.c.bf16 %v2186, %v2186
        %v2219 = vpack.c.bf16 %v2187, %v2187
        %v2220 = vpack.c.bf16 %v2188, %v2188
        %v2221 = vpack.c.bf16 %v2189, %v2189
        %v2223 = vshrl.u32 %v2190, 16
        %v2225 = vrot.slane %v2223, 7
        %v2226 = vshll.u32 %v2190, 16
        %v2228 = vor.u32 %v2225, %v2226
        %v2229 = vrot.slane %v2225, 4
        %v2231 = vshrl.u32 %v2191, 16
        %v2233 = vrot.slane %v2231, 7
        %v2234 = vshll.u32 %v2191, 16
        %v2236 = vor.u32 %v2233, %v2234
        %v2237 = vsel %vm593, %v2229, %v2236
        %v2238 = vrot.slane %v2233, 4
        %v2240 = vshrl.u32 %v2192, 16
        %v2242 = vrot.slane %v2240, 7
        %v2243 = vshll.u32 %v2192, 16
        %v2245 = vor.u32 %v2242, %v2243
        %v2246 = vrot.slane %v2242, 4
        %v2248 = vshrl.u32 %v2193, 16
        %v2250 = vrot.slane %v2248, 7
        %v2251 = vshll.u32 %v2193, 16
        %v2253 = vor.u32 %v2250, %v2251
        %v2254 = vsel %vm593, %v2246, %v2253
        %v2255 = vrot.slane %v2250, 4
        %v2257 = vshrl.u32 %v2194, 16
        %v2259 = vrot.slane %v2257, 7
        %v2260 = vshll.u32 %v2194, 16
        %v2262 = vor.u32 %v2259, %v2260
        %v2263 = vrot.slane %v2259, 4
        %v2265 = vshrl.u32 %v2195, 16
        %v2267 = vrot.slane %v2265, 7
        %v2268 = vshll.u32 %v2195, 16
        %v2270 = vor.u32 %v2267, %v2268
        %v2271 = vsel %vm593, %v2263, %v2270
        %v2272 = vrot.slane %v2267, 4
        %v2274 = vshrl.u32 %v2196, 16
        %v2276 = vrot.slane %v2274, 7
        %v2277 = vshll.u32 %v2196, 16
        %v2279 = vor.u32 %v2276, %v2277
        %v2280 = vrot.slane %v2276, 4
        %v2282 = vshrl.u32 %v2197, 16
        %v2284 = vrot.slane %v2282, 7
        %v2285 = vshll.u32 %v2197, 16
        %v2287 = vor.u32 %v2284, %v2285
        %v2288 = vsel %vm593, %v2280, %v2287
        %v2289 = vrot.slane %v2284, 4
        %v2291 = vshrl.u32 %v2198, 16
        %v2293 = vrot.slane %v2291, 7
        %v2294 = vshll.u32 %v2198, 16
        %v2296 = vor.u32 %v2293, %v2294
        %v2297 = vrot.slane %v2293, 4
        %v2299 = vshrl.u32 %v2199, 16
        %v2301 = vrot.slane %v2299, 7
        %v2302 = vshll.u32 %v2199, 16
        %v2304 = vor.u32 %v2301, %v2302
        %v2305 = vsel %vm593, %v2297, %v2304
        %v2306 = vrot.slane %v2301, 4
        %v2308 = vshrl.u32 %v2200, 16
        %v2310 = vrot.slane %v2308, 7
        %v2311 = vshll.u32 %v2200, 16
        %v2313 = vor.u32 %v2310, %v2311
        %v2314 = vrot.slane %v2310, 4
        %v2316 = vshrl.u32 %v2201, 16
        %v2318 = vrot.slane %v2316, 7
        %v2319 = vshll.u32 %v2201, 16
        %v2321 = vor.u32 %v2318, %v2319
        %v2322 = vsel %vm593, %v2314, %v2321
        %v2323 = vrot.slane %v2318, 4
        %v2325 = vshrl.u32 %v2202, 16
        %v2327 = vrot.slane %v2325, 7
        %v2328 = vshll.u32 %v2202, 16
        %v2330 = vor.u32 %v2327, %v2328
        %v2331 = vrot.slane %v2327, 4
        %v2333 = vshrl.u32 %v2203, 16
        %v2335 = vrot.slane %v2333, 7
        %v2336 = vshll.u32 %v2203, 16
        %v2338 = vor.u32 %v2335, %v2336
        %v2339 = vsel %vm593, %v2331, %v2338
        %v2340 = vrot.slane %v2335, 4
        %v2342 = vshrl.u32 %v2204, 16
        %v2344 = vrot.slane %v2342, 7
        %v2345 = vshll.u32 %v2204, 16
        %v2347 = vor.u32 %v2344, %v2345
        %v2348 = vrot.slane %v2344, 4
        %v2350 = vshrl.u32 %v2205, 16
        %v2352 = vrot.slane %v2350, 7
        %v2353 = vshll.u32 %v2205, 16
        %v2355 = vor.u32 %v2352, %v2353
        %v2356 = vsel %vm593, %v2348, %v2355
        %v2357 = vrot.slane %v2352, 4
        %v2359 = vshrl.u32 %v2206, 16
        %v2361 = vrot.slane %v2359, 7
        %v2362 = vshll.u32 %v2206, 16
        %v2364 = vor.u32 %v2361, %v2362
        %v2365 = vrot.slane %v2361, 4
        %v2367 = vshrl.u32 %v2207, 16
        %v2369 = vrot.slane %v2367, 7
        %v2370 = vshll.u32 %v2207, 16
        %v2372 = vor.u32 %v2369, %v2370
        %v2373 = vsel %vm593, %v2365, %v2372
        %v2374 = vrot.slane %v2369, 4
        %v2376 = vshrl.u32 %v2208, 16
        %v2378 = vrot.slane %v2376, 7
        %v2379 = vshll.u32 %v2208, 16
        %v2381 = vor.u32 %v2378, %v2379
        %v2382 = vrot.slane %v2378, 4
        %v2384 = vshrl.u32 %v2209, 16
        %v2386 = vrot.slane %v2384, 7
        %v2387 = vshll.u32 %v2209, 16
        %v2389 = vor.u32 %v2386, %v2387
        %v2390 = vsel %vm593, %v2382, %v2389
        %v2391 = vrot.slane %v2386, 4
        %v2393 = vshrl.u32 %v2210, 16
        %v2395 = vrot.slane %v2393, 7
        %v2396 = vshll.u32 %v2210, 16
        %v2398 = vor.u32 %v2395, %v2396
        %v2399 = vrot.slane %v2395, 4
        %v2401 = vshrl.u32 %v2211, 16
        %v2403 = vrot.slane %v2401, 7
        %v2404 = vshll.u32 %v2211, 16
        %v2406 = vor.u32 %v2403, %v2404
        %v2407 = vsel %vm593, %v2399, %v2406
        %v2408 = vrot.slane %v2403, 4
        %v2410 = vshrl.u32 %v2212, 16
        %v2412 = vrot.slane %v2410, 7
        %v2413 = vshll.u32 %v2212, 16
        %v2415 = vor.u32 %v2412, %v2413
        %v2416 = vrot.slane %v2412, 4
        %v2418 = vshrl.u32 %v2213, 16
        %v2420 = vrot.slane %v2418, 7
        %v2421 = vshll.u32 %v2213, 16
        %v2423 = vor.u32 %v2420, %v2421
        %v2424 = vsel %vm593, %v2416, %v2423
        %v2425 = vrot.slane %v2420, 4
        %v2427 = vshrl.u32 %v2214, 16
        %v2429 = vrot.slane %v2427, 7
        %v2430 = vshll.u32 %v2214, 16
        %v2432 = vor.u32 %v2429, %v2430
        %v2433 = vrot.slane %v2429, 4
        %v2435 = vshrl.u32 %v2215, 16
        %v2437 = vrot.slane %v2435, 7
        %v2438 = vshll.u32 %v2215, 16
        %v2440 = vor.u32 %v2437, %v2438
        %v2441 = vsel %vm593, %v2433, %v2440
        %v2442 = vrot.slane %v2437, 4
        %v2444 = vshrl.u32 %v2216, 16
        %v2446 = vrot.slane %v2444, 7
        %v2447 = vshll.u32 %v2216, 16
        %v2449 = vor.u32 %v2446, %v2447
        %v2450 = vrot.slane %v2446, 4
        %v2452 = vshrl.u32 %v2217, 16
        %v2454 = vrot.slane %v2452, 7
        %v2455 = vshll.u32 %v2217, 16
        %v2457 = vor.u32 %v2454, %v2455
        %v2458 = vsel %vm593, %v2450, %v2457
        %v2459 = vrot.slane %v2454, 4
        %v2461 = vshrl.u32 %v2218, 16
        %v2463 = vrot.slane %v2461, 7
        %v2464 = vshll.u32 %v2218, 16
        %v2466 = vor.u32 %v2463, %v2464
        %v2467 = vrot.slane %v2463, 4
        %v2469 = vshrl.u32 %v2219, 16
        %v2471 = vrot.slane %v2469, 7
        %v2472 = vshll.u32 %v2219, 16
        %v2474 = vor.u32 %v2471, %v2472
        %v2475 = vsel %vm593, %v2467, %v2474
        %v2476 = vrot.slane %v2471, 4
        %v2478 = vshrl.u32 %v2220, 16
        %v2480 = vrot.slane %v2478, 7
        %v2481 = vshll.u32 %v2220, 16
        %v2483 = vor.u32 %v2480, %v2481
        %v2484 = vrot.slane %v2480, 4
        %v2486 = vshrl.u32 %v2221, 16
        %v2488 = vrot.slane %v2486, 7
        %v2489 = vshll.u32 %v2221, 16
        %v2491 = vor.u32 %v2488, %v2489
        %v2492 = vsel %vm593, %v2484, %v2491
        %v2493 = vrot.slane %v2488, 4
        %s2542 = scalar_lea.vmem [#allocation3], 12
        %vm2543 = vcmask 60416
        %vm2544 = vmand %vm2543, %vm384
        %v2545 = vld [vmem:[%s2542] sm:$0xf]
        %v2546 = vsel %vm2544, %v2228, %v2545
        %2547 = vst [vmem:[%s2542] sm:$0xf] %v2546
        %2548 = vst.msk [vmem:[%s2542 + $0x4] sm:$0xf] %vm440, %v2237
        %v2549 = vld [vmem:[%s2542 + $0x8] sm:$0x1]
        %v2550 = vsel %vm450, %v2238, %v2549
        %2551 = vst [vmem:[%s2542 + $0x8] sm:$0x1] %v2550
        %v2552 = vld [vmem:[%s2542 + $0xc] sm:$0xf]
        %v2553 = vsel %vm2544, %v2245, %v2552
        %2554 = vst [vmem:[%s2542 + $0xc] sm:$0xf] %v2553
        %2555 = vst.msk [vmem:[%s2542 + $0x10] sm:$0xf] %vm440, %v2254
        %v2556 = vld [vmem:[%s2542 + $0x14] sm:$0x1]
        %v2557 = vsel %vm450, %v2255, %v2556
        %2558 = vst [vmem:[%s2542 + $0x14] sm:$0x1] %v2557
        %v2559 = vld [vmem:[%s2542 + $0x18] sm:$0xf]
        %v2560 = vsel %vm2544, %v2262, %v2559
        %2561 = vst [vmem:[%s2542 + $0x18] sm:$0xf] %v2560
        %2562 = vst.msk [vmem:[%s2542 + $0x1c] sm:$0xf] %vm440, %v2271
        %v2563 = vld [vmem:[%s2542 + $0x20] sm:$0x1]
        %v2564 = vsel %vm450, %v2272, %v2563
        %2565 = vst [vmem:[%s2542 + $0x20] sm:$0x1] %v2564
        %v2566 = vld [vmem:[%s2542 + $0x24] sm:$0xf]
        %v2567 = vsel %vm2544, %v2279, %v2566
        %2568 = vst [vmem:[%s2542 + $0x24] sm:$0xf] %v2567
        %2569 = vst.msk [vmem:[%s2542 + $0x28] sm:$0xf] %vm440, %v2288
        %v2570 = vld [vmem:[%s2542 + $0x2c] sm:$0x1]
        %v2571 = vsel %vm450, %v2289, %v2570
        %2572 = vst [vmem:[%s2542 + $0x2c] sm:$0x1] %v2571
        %v2573 = vld [vmem:[%s2542 + $0x30] sm:$0xf]
        %v2574 = vsel %vm2544, %v2296, %v2573
        %2575 = vst [vmem:[%s2542 + $0x30] sm:$0xf] %v2574
        %2576 = vst.msk [vmem:[%s2542 + $0x34] sm:$0xf] %vm440, %v2305
        %v2577 = vld [vmem:[%s2542 + $0x38] sm:$0x1]
        %v2578 = vsel %vm450, %v2306, %v2577
        %2579 = vst [vmem:[%s2542 + $0x38] sm:$0x1] %v2578
        %v2580 = vld [vmem:[%s2542 + $0x3c] sm:$0xf]
        %v2581 = vsel %vm2544, %v2313, %v2580
        %2582 = vst [vmem:[%s2542 + $0x3c] sm:$0xf] %v2581
        %2583 = vst.msk [vmem:[%s2542 + $0x40] sm:$0xf] %vm440, %v2322
        %v2584 = vld [vmem:[%s2542 + $0x44] sm:$0x1]
        %v2585 = vsel %vm450, %v2323, %v2584
        %2586 = vst [vmem:[%s2542 + $0x44] sm:$0x1] %v2585
        %v2587 = vld [vmem:[%s2542 + $0x48] sm:$0xf]
        %v2588 = vsel %vm2544, %v2330, %v2587
        %2589 = vst [vmem:[%s2542 + $0x48] sm:$0xf] %v2588
        %2590 = vst.msk [vmem:[%s2542 + $0x4c] sm:$0xf] %vm440, %v2339
        %v2591 = vld [vmem:[%s2542 + $0x50] sm:$0x1]
        %v2592 = vsel %vm450, %v2340, %v2591
        %2593 = vst [vmem:[%s2542 + $0x50] sm:$0x1] %v2592
        %v2594 = vld [vmem:[%s2542 + $0x54] sm:$0xf]
        %v2595 = vsel %vm2544, %v2347, %v2594
        %2596 = vst [vmem:[%s2542 + $0x54] sm:$0xf] %v2595
        %2597 = vst.msk [vmem:[%s2542 + $0x58] sm:$0xf] %vm440, %v2356
        %v2598 = vld [vmem:[%s2542 + $0x5c] sm:$0x1]
        %v2599 = vsel %vm450, %v2357, %v2598
        %2600 = vst [vmem:[%s2542 + $0x5c] sm:$0x1] %v2599
        %v2601 = vld [vmem:[%s2542 + $0x60] sm:$0xf]
        %v2602 = vsel %vm2544, %v2364, %v2601
        %2603 = vst [vmem:[%s2542 + $0x60] sm:$0xf] %v2602
        %2604 = vst.msk [vmem:[%s2542 + $0x64] sm:$0xf] %vm440, %v2373
        %v2605 = vld [vmem:[%s2542 + $0x68] sm:$0x1]
        %v2606 = vsel %vm450, %v2374, %v2605
        %2607 = vst [vmem:[%s2542 + $0x68] sm:$0x1] %v2606
        %v2608 = vld [vmem:[%s2542 + $0x6c] sm:$0xf]
        %v2609 = vsel %vm2544, %v2381, %v2608
        %2610 = vst [vmem:[%s2542 + $0x6c] sm:$0xf] %v2609
        %2611 = vst.msk [vmem:[%s2542 + $0x70] sm:$0xf] %vm440, %v2390
        %v2612 = vld [vmem:[%s2542 + $0x74] sm:$0x1]
        %v2613 = vsel %vm450, %v2391, %v2612
        %2614 = vst [vmem:[%s2542 + $0x74] sm:$0x1] %v2613
        %v2615 = vld [vmem:[%s2542 + $0x78] sm:$0xf]
        %v2616 = vsel %vm2544, %v2398, %v2615
        %2617 = vst [vmem:[%s2542 + $0x78] sm:$0xf] %v2616
        %2618 = vst.msk [vmem:[%s2542 + $0x7c] sm:$0xf] %vm440, %v2407
        %v2619 = vld [vmem:[%s2542 + $0x80] sm:$0x1]
        %v2620 = vsel %vm450, %v2408, %v2619
        %2621 = vst [vmem:[%s2542 + $0x80] sm:$0x1] %v2620
        %v2622 = vld [vmem:[%s2542 + $0x84] sm:$0xf]
        %v2623 = vsel %vm2544, %v2415, %v2622
        %2624 = vst [vmem:[%s2542 + $0x84] sm:$0xf] %v2623
        %2625 = vst.msk [vmem:[%s2542 + $0x88] sm:$0xf] %vm440, %v2424
        %v2626 = vld [vmem:[%s2542 + $0x8c] sm:$0x1]
        %v2627 = vsel %vm450, %v2425, %v2626
        %2628 = vst [vmem:[%s2542 + $0x8c] sm:$0x1] %v2627
        %v2629 = vld [vmem:[%s2542 + $0x90] sm:$0xf]
        %v2630 = vsel %vm2544, %v2432, %v2629
        %2631 = vst [vmem:[%s2542 + $0x90] sm:$0xf] %v2630
        %2632 = vst.msk [vmem:[%s2542 + $0x94] sm:$0xf] %vm440, %v2441
        %v2633 = vld [vmem:[%s2542 + $0x98] sm:$0x1]
        %v2634 = vsel %vm450, %v2442, %v2633
        %2635 = vst [vmem:[%s2542 + $0x98] sm:$0x1] %v2634
        %v2636 = vld [vmem:[%s2542 + $0x9c] sm:$0xf]
        %v2637 = vsel %vm2544, %v2449, %v2636
        %2638 = vst [vmem:[%s2542 + $0x9c] sm:$0xf] %v2637
        %2639 = vst.msk [vmem:[%s2542 + $0xa0] sm:$0xf] %vm440, %v2458
        %v2640 = vld [vmem:[%s2542 + $0xa4] sm:$0x1]
        %v2641 = vsel %vm450, %v2459, %v2640
        %2642 = vst [vmem:[%s2542 + $0xa4] sm:$0x1] %v2641
        %v2643 = vld [vmem:[%s2542 + $0xa8] sm:$0xf]
        %v2644 = vsel %vm2544, %v2466, %v2643
        %2645 = vst [vmem:[%s2542 + $0xa8] sm:$0xf] %v2644
        %2646 = vst.msk [vmem:[%s2542 + $0xac] sm:$0xf] %vm440, %v2475
        %v2647 = vld [vmem:[%s2542 + $0xb0] sm:$0x1]
        %v2648 = vsel %vm450, %v2476, %v2647
        %2649 = vst [vmem:[%s2542 + $0xb0] sm:$0x1] %v2648
        %v2650 = vld [vmem:[%s2542 + $0xb4] sm:$0xf]
        %v2651 = vsel %vm2544, %v2483, %v2650
        %2652 = vst [vmem:[%s2542 + $0xb4] sm:$0xf] %v2651
        %2653 = vst.msk [vmem:[%s2542 + $0xb8] sm:$0xf] %vm440, %v2492
        %v2654 = vld [vmem:[%s2542 + $0xbc] sm:$0x1]
        %v2655 = vsel %vm450, %v2493, %v2654
        %2656 = vst [vmem:[%s2542 + $0xbc] sm:$0x1] %v2655
        %v2657 = vld [vmem:[%s5] sm:$0x1]
        %v2658 = vld [vmem:[%s6] sm:$0x1]
        %v2659 = vld [vmem:[#allocation3] sm:$0xf]
        %v2660 = vld [vmem:[#allocation3 + $0x4] sm:$0xf]
        %v2661 = vld [vmem:[#allocation3 + $0xc] sm:$0xf]
        %v2662 = vld [vmem:[#allocation3 + $0x10] sm:$0xf]
        %v2663 = vld [vmem:[#allocation3 + $0x18] sm:$0xf]
        %v2664 = vld [vmem:[#allocation3 + $0x1c] sm:$0xf]
        %v2665 = vld [vmem:[#allocation3 + $0x24] sm:$0xf]
        %v2666 = vld [vmem:[#allocation3 + $0x28] sm:$0xf]
        %v2667 = vld [vmem:[#allocation3 + $0x30] sm:$0xf]
        %v2668 = vld [vmem:[#allocation3 + $0x34] sm:$0xf]
        %v2669 = vld [vmem:[#allocation3 + $0x3c] sm:$0xf]
        %v2670 = vld [vmem:[#allocation3 + $0x40] sm:$0xf]
        %v2671 = vld [vmem:[#allocation3 + $0x48] sm:$0xf]
        %v2672 = vld [vmem:[#allocation3 + $0x4c] sm:$0xf]
        %v2673 = vld [vmem:[#allocation3 + $0x54] sm:$0xf]
        %v2674 = vld [vmem:[#allocation3 + $0x58] sm:$0xf]
        %v2675 = vld [vmem:[#allocation3 + $0x60] sm:$0xf]
        %v2676 = vld [vmem:[#allocation3 + $0x64] sm:$0xf]
        %v2677 = vld [vmem:[#allocation3 + $0x6c] sm:$0xf]
        %v2678 = vld [vmem:[#allocation3 + $0x70] sm:$0xf]
        %v2679 = vld [vmem:[#allocation3 + $0x78] sm:$0xf]
        %v2680 = vld [vmem:[#allocation3 + $0x7c] sm:$0xf]
        %v2681 = vld [vmem:[#allocation3 + $0x84] sm:$0xf]
        %v2682 = vld [vmem:[#allocation3 + $0x88] sm:$0xf]
        %v2683 = vld [vmem:[#allocation3 + $0x90] sm:$0xf]
        %v2684 = vld [vmem:[#allocation3 + $0x94] sm:$0xf]
        %v2685 = vld [vmem:[#allocation3 + $0x9c] sm:$0xf]
        %v2686 = vld [vmem:[#allocation3 + $0xa0] sm:$0xf]
        %v2687 = vld [vmem:[#allocation3 + $0xa8] sm:$0xf]
        %v2688 = vld [vmem:[#allocation3 + $0xac] sm:$0xf]
        %v2689 = vld [vmem:[#allocation3 + $0xb4] sm:$0xf]
        %v2690 = vld [vmem:[#allocation3 + $0xb8] sm:$0xf]
        %v2691 = vld [vmem:[#allocation3 + $0xc0] sm:$0xf]
        %v2692 = vld [vmem:[#allocation3 + $0xc4] sm:$0xf]
        %v2693 = vld [vmem:[#allocation3 + $0xcc] sm:$0xf]
        %v2694 = vld [vmem:[#allocation3 + $0xd0] sm:$0xf]
        %v2695 = vld [vmem:[#allocation3 + $0x8] sm:$0x1]
        %v2696 = vld [vmem:[#allocation3 + $0x14] sm:$0x1]
        %v2697 = vld [vmem:[#allocation3 + $0x20] sm:$0x1]
        %v2698 = vld [vmem:[#allocation3 + $0x2c] sm:$0x1]
        %v2699 = vld [vmem:[#allocation3 + $0x38] sm:$0x1]
        %v2700 = vld [vmem:[#allocation3 + $0x44] sm:$0x1]
        %v2701 = vld [vmem:[#allocation3 + $0x50] sm:$0x1]
        %v2702 = vld [vmem:[#allocation3 + $0x5c] sm:$0x1]
        %v2703 = vld [vmem:[#allocation3 + $0x68] sm:$0x1]
        %v2704 = vld [vmem:[#allocation3 + $0x74] sm:$0x1]
        %v2705 = vld [vmem:[#allocation3 + $0x80] sm:$0x1]
        %v2706 = vld [vmem:[#allocation3 + $0x8c] sm:$0x1]
        %v2707 = vld [vmem:[#allocation3 + $0x98] sm:$0x1]
        %v2708 = vld [vmem:[#allocation3 + $0xa4] sm:$0x1]
        %v2709 = vld [vmem:[#allocation3 + $0xb0] sm:$0x1]
        %v2710 = vld [vmem:[#allocation3 + $0xbc] sm:$0x1]
        %v2711 = vld [vmem:[#allocation3 + $0xc8] sm:$0x1]
        %v2712 = vld [vmem:[#allocation3 + $0xd4] sm:$0x1]
        %v2713 = vld [vmem:[#allocation3] sm:$0xe]
        %v2714 = vld [vmem:[#allocation3 + $0xc] sm:$0xe]
        %v2715 = vld [vmem:[#allocation3 + $0x18] sm:$0xe]
        %v2716 = vld [vmem:[#allocation3 + $0x24] sm:$0xe]
        %v2717 = vld [vmem:[#allocation3 + $0x30] sm:$0xe]
        %v2718 = vld [vmem:[#allocation3 + $0x3c] sm:$0xe]
        %v2719 = vld [vmem:[#allocation3 + $0x48] sm:$0xe]
        %v2720 = vld [vmem:[#allocation3 + $0x54] sm:$0xe]
        %v2721 = vld [vmem:[#allocation3 + $0x60] sm:$0xe]
        %v2722 = vld [vmem:[#allocation3 + $0x6c] sm:$0xe]
        %v2723 = vld [vmem:[#allocation3 + $0x78] sm:$0xe]
        %v2724 = vld [vmem:[#allocation3 + $0x84] sm:$0xe]
        %v2725 = vld [vmem:[#allocation3 + $0x90] sm:$0xe]
        %v2726 = vld [vmem:[#allocation3 + $0x9c] sm:$0xe]
        %v2727 = vld [vmem:[#allocation3 + $0xa8] sm:$0xe]
        %v2728 = vld [vmem:[#allocation3 + $0xb4] sm:$0xe]
        %v2729 = vld [vmem:[#allocation3 + $0xc0] sm:$0xe]
        %v2730 = vld [vmem:[#allocation3 + $0xcc] sm:$0xe]
        %v2767 = vunpack.c.l.b16 %v2659
        %v2768 = vunpack.c.l.b16 %v2660
        %v2769 = vunpack.c.l.b16 %v2661
        %v2770 = vunpack.c.l.b16 %v2662
        %v2771 = vunpack.c.l.b16 %v2663
        %v2772 = vunpack.c.l.b16 %v2664
        %v2773 = vunpack.c.l.b16 %v2665
        %v2774 = vunpack.c.l.b16 %v2666
        %v2775 = vunpack.c.l.b16 %v2667
        %v2776 = vunpack.c.l.b16 %v2668
        %v2777 = vunpack.c.l.b16 %v2669
        %v2778 = vunpack.c.l.b16 %v2670
        %v2779 = vunpack.c.l.b16 %v2671
        %v2780 = vunpack.c.l.b16 %v2672
        %v2781 = vunpack.c.l.b16 %v2673
        %v2782 = vunpack.c.l.b16 %v2674
        %v2783 = vunpack.c.l.b16 %v2675
        %v2784 = vunpack.c.l.b16 %v2676
        %v2785 = vunpack.c.l.b16 %v2677
        %v2786 = vunpack.c.l.b16 %v2678
        %v2787 = vunpack.c.l.b16 %v2679
        %v2788 = vunpack.c.l.b16 %v2680
        %v2789 = vunpack.c.l.b16 %v2681
        %v2790 = vunpack.c.l.b16 %v2682
        %v2791 = vunpack.c.l.b16 %v2683
        %v2792 = vunpack.c.l.b16 %v2684
        %v2793 = vunpack.c.l.b16 %v2685
        %v2794 = vunpack.c.l.b16 %v2686
        %v2795 = vunpack.c.l.b16 %v2687
        %v2796 = vunpack.c.l.b16 %v2688
        %v2797 = vunpack.c.l.b16 %v2689
        %v2798 = vunpack.c.l.b16 %v2690
        %v2799 = vunpack.c.l.b16 %v2691
        %v2800 = vunpack.c.l.b16 %v2692
        %v2801 = vunpack.c.l.b16 %v2693
        %v2802 = vunpack.c.l.b16 %v2694
        %v2803 = vpack.c.b16 %v2768, %v2767
        %v2804 = vpack.c.b16 %v2770, %v2769
        %v2805 = vpack.c.b16 %v2772, %v2771
        %v2806 = vpack.c.b16 %v2774, %v2773
        %v2807 = vpack.c.b16 %v2776, %v2775
        %v2808 = vpack.c.b16 %v2778, %v2777
        %v2809 = vpack.c.b16 %v2780, %v2779
        %v2810 = vpack.c.b16 %v2782, %v2781
        %v2811 = vpack.c.b16 %v2784, %v2783
        %v2812 = vpack.c.b16 %v2786, %v2785
        %v2813 = vpack.c.b16 %v2788, %v2787
        %v2814 = vpack.c.b16 %v2790, %v2789
        %v2815 = vpack.c.b16 %v2792, %v2791
        %v2816 = vpack.c.b16 %v2794, %v2793
        %v2817 = vpack.c.b16 %v2796, %v2795
        %v2818 = vpack.c.b16 %v2798, %v2797
        %v2819 = vpack.c.b16 %v2800, %v2799
        %v2820 = vpack.c.b16 %v2802, %v2801
        %v2839 = vunpack.c.l.b16 %v2695
        %v2840 = vunpack.c.l.b16 %v2696
        %v2841 = vunpack.c.l.b16 %v2697
        %v2842 = vunpack.c.l.b16 %v2698
        %v2843 = vunpack.c.l.b16 %v2699
        %v2844 = vunpack.c.l.b16 %v2700
        %v2845 = vunpack.c.l.b16 %v2701
        %v2846 = vunpack.c.l.b16 %v2702
        %v2847 = vunpack.c.l.b16 %v2703
        %v2848 = vunpack.c.l.b16 %v2704
        %v2849 = vunpack.c.l.b16 %v2705
        %v2850 = vunpack.c.l.b16 %v2706
        %v2851 = vunpack.c.l.b16 %v2707
        %v2852 = vunpack.c.l.b16 %v2708
        %v2853 = vunpack.c.l.b16 %v2709
        %v2854 = vunpack.c.l.b16 %v2710
        %v2855 = vunpack.c.l.b16 %v2711
        %v2856 = vunpack.c.l.b16 %v2712
        %v2857 = vpack.c.b16 %v2839, %v2839
        %v2858 = vpack.c.b16 %v2840, %v2840
        %v2859 = vpack.c.b16 %v2841, %v2841
        %v2860 = vpack.c.b16 %v2842, %v2842
        %v2861 = vpack.c.b16 %v2843, %v2843
        %v2862 = vpack.c.b16 %v2844, %v2844
        %v2863 = vpack.c.b16 %v2845, %v2845
        %v2864 = vpack.c.b16 %v2846, %v2846
        %v2865 = vpack.c.b16 %v2847, %v2847
        %v2866 = vpack.c.b16 %v2848, %v2848
        %v2867 = vpack.c.b16 %v2849, %v2849
        %v2868 = vpack.c.b16 %v2850, %v2850
        %v2869 = vpack.c.b16 %v2851, %v2851
        %v2870 = vpack.c.b16 %v2852, %v2852
        %v2871 = vpack.c.b16 %v2853, %v2853
        %v2872 = vpack.c.b16 %v2854, %v2854
        %v2873 = vpack.c.b16 %v2855, %v2855
        %v2874 = vpack.c.b16 %v2856, %v2856
        %v2876 = vshrl.u32 %v2803, 16
        %v2878 = vshll.u32 %v2803, 16
        %v2880 = vrot.slane %v2878, 1
        %v2881 = vor.u32 %v2876, %v2880
        %v2883 = vshll.u32 %v2857, 16
        %v2885 = vrot.slane %v2883, 1
        %v2886 = vsel %vm1247, %v2881, %v2885
        %v2888 = vshrl.u32 %v2804, 16
        %v2890 = vshll.u32 %v2804, 16
        %v2892 = vrot.slane %v2890, 1
        %v2893 = vor.u32 %v2888, %v2892
        %v2895 = vshll.u32 %v2858, 16
        %v2897 = vrot.slane %v2895, 1
        %v2898 = vsel %vm1247, %v2893, %v2897
        %v2900 = vshrl.u32 %v2805, 16
        %v2902 = vshll.u32 %v2805, 16
        %v2904 = vrot.slane %v2902, 1
        %v2905 = vor.u32 %v2900, %v2904
        %v2907 = vshll.u32 %v2859, 16
        %v2909 = vrot.slane %v2907, 1
        %v2910 = vsel %vm1247, %v2905, %v2909
        %v2912 = vshrl.u32 %v2806, 16
        %v2914 = vshll.u32 %v2806, 16
        %v2916 = vrot.slane %v2914, 1
        %v2917 = vor.u32 %v2912, %v2916
        %v2919 = vshll.u32 %v2860, 16
        %v2921 = vrot.slane %v2919, 1
        %v2922 = vsel %vm1247, %v2917, %v2921
        %v2924 = vshrl.u32 %v2807, 16
        %v2926 = vshll.u32 %v2807, 16
        %v2928 = vrot.slane %v2926, 1
        %v2929 = vor.u32 %v2924, %v2928
        %v2931 = vshll.u32 %v2861, 16
        %v2933 = vrot.slane %v2931, 1
        %v2934 = vsel %vm1247, %v2929, %v2933
        %v2936 = vshrl.u32 %v2808, 16
        %v2938 = vshll.u32 %v2808, 16
        %v2940 = vrot.slane %v2938, 1
        %v2941 = vor.u32 %v2936, %v2940
        %v2943 = vshll.u32 %v2862, 16
        %v2945 = vrot.slane %v2943, 1
        %v2946 = vsel %vm1247, %v2941, %v2945
        %v2948 = vshrl.u32 %v2809, 16
        %v2950 = vshll.u32 %v2809, 16
        %v2952 = vrot.slane %v2950, 1
        %v2953 = vor.u32 %v2948, %v2952
        %v2955 = vshll.u32 %v2863, 16
        %v2957 = vrot.slane %v2955, 1
        %v2958 = vsel %vm1247, %v2953, %v2957
        %v2960 = vshrl.u32 %v2810, 16
        %v2962 = vshll.u32 %v2810, 16
        %v2964 = vrot.slane %v2962, 1
        %v2965 = vor.u32 %v2960, %v2964
        %v2967 = vshll.u32 %v2864, 16
        %v2969 = vrot.slane %v2967, 1
        %v2970 = vsel %vm1247, %v2965, %v2969
        %v2972 = vshrl.u32 %v2811, 16
        %v2974 = vshll.u32 %v2811, 16
        %v2976 = vrot.slane %v2974, 1
        %v2977 = vor.u32 %v2972, %v2976
        %v2979 = vshll.u32 %v2865, 16
        %v2981 = vrot.slane %v2979, 1
        %v2982 = vsel %vm1247, %v2977, %v2981
        %v2984 = vshrl.u32 %v2812, 16
        %v2986 = vshll.u32 %v2812, 16
        %v2988 = vrot.slane %v2986, 1
        %v2989 = vor.u32 %v2984, %v2988
        %v2991 = vshll.u32 %v2866, 16
        %v2993 = vrot.slane %v2991, 1
        %v2994 = vsel %vm1247, %v2989, %v2993
        %v2996 = vshrl.u32 %v2813, 16
        %v2998 = vshll.u32 %v2813, 16
        %v3000 = vrot.slane %v2998, 1
        %v3001 = vor.u32 %v2996, %v3000
        %v3003 = vshll.u32 %v2867, 16
        %v3005 = vrot.slane %v3003, 1
        %v3006 = vsel %vm1247, %v3001, %v3005
        %v3008 = vshrl.u32 %v2814, 16
        %v3010 = vshll.u32 %v2814, 16
        %v3012 = vrot.slane %v3010, 1
        %v3013 = vor.u32 %v3008, %v3012
        %v3015 = vshll.u32 %v2868, 16
        %v3017 = vrot.slane %v3015, 1
        %v3018 = vsel %vm1247, %v3013, %v3017
        %v3020 = vshrl.u32 %v2815, 16
        %v3022 = vshll.u32 %v2815, 16
        %v3024 = vrot.slane %v3022, 1
        %v3025 = vor.u32 %v3020, %v3024
        %v3027 = vshll.u32 %v2869, 16
        %v3029 = vrot.slane %v3027, 1
        %v3030 = vsel %vm1247, %v3025, %v3029
        %v3032 = vshrl.u32 %v2816, 16
        %v3034 = vshll.u32 %v2816, 16
        %v3036 = vrot.slane %v3034, 1
        %v3037 = vor.u32 %v3032, %v3036
        %v3039 = vshll.u32 %v2870, 16
        %v3041 = vrot.slane %v3039, 1
        %v3042 = vsel %vm1247, %v3037, %v3041
        %v3044 = vshrl.u32 %v2817, 16
        %v3046 = vshll.u32 %v2817, 16
        %v3048 = vrot.slane %v3046, 1
        %v3049 = vor.u32 %v3044, %v3048
        %v3051 = vshll.u32 %v2871, 16
        %v3053 = vrot.slane %v3051, 1
        %v3054 = vsel %vm1247, %v3049, %v3053
        %v3056 = vshrl.u32 %v2818, 16
        %v3058 = vshll.u32 %v2818, 16
        %v3060 = vrot.slane %v3058, 1
        %v3061 = vor.u32 %v3056, %v3060
        %v3063 = vshll.u32 %v2872, 16
        %v3065 = vrot.slane %v3063, 1
        %v3066 = vsel %vm1247, %v3061, %v3065
        %v3068 = vshrl.u32 %v2819, 16
        %v3070 = vshll.u32 %v2819, 16
        %v3072 = vrot.slane %v3070, 1
        %v3073 = vor.u32 %v3068, %v3072
        %v3075 = vshll.u32 %v2873, 16
        %v3077 = vrot.slane %v3075, 1
        %v3078 = vsel %vm1247, %v3073, %v3077
        %v3080 = vshrl.u32 %v2820, 16
        %v3082 = vshll.u32 %v2820, 16
        %v3084 = vrot.slane %v3082, 1
        %v3085 = vor.u32 %v3080, %v3084
        %v3087 = vshll.u32 %v2874, 16
        %v3089 = vrot.slane %v3087, 1
        %v3090 = vsel %vm1247, %v3085, %v3089
        %3091 = vrot.lane.b32.xlu0 %v2886, 8
        %v3092 = vpop.permute.xlu0 %3091
        %3093 = vrot.lane.b32.xlu0 %v2898, 8
        %v3094 = vpop.permute.xlu0 %3093
        %3095 = vrot.lane.b32.xlu0 %v2910, 8
        %v3096 = vpop.permute.xlu0 %3095
        %3097 = vrot.lane.b32.xlu0 %v2922, 8
        %v3098 = vpop.permute.xlu0 %3097
        %3099 = vrot.lane.b32.xlu0 %v2934, 8
        %v3100 = vpop.permute.xlu0 %3099
        %3101 = vrot.lane.b32.xlu0 %v2946, 8
        %v3102 = vpop.permute.xlu0 %3101
        %3103 = vrot.lane.b32.xlu0 %v2958, 8
        %v3104 = vpop.permute.xlu0 %3103
        %3105 = vrot.lane.b32.xlu0 %v2970, 8
        %v3106 = vpop.permute.xlu0 %3105
        %3107 = vrot.lane.b32.xlu0 %v2982, 8
        %v3108 = vpop.permute.xlu0 %3107
        %3109 = vrot.lane.b32.xlu0 %v2994, 8
        %v3110 = vpop.permute.xlu0 %3109
        %3111 = vrot.lane.b32.xlu0 %v3006, 8
        %v3112 = vpop.permute.xlu0 %3111
        %3113 = vrot.lane.b32.xlu0 %v3018, 8
        %v3114 = vpop.permute.xlu0 %3113
        %3115 = vrot.lane.b32.xlu0 %v3030, 8
        %v3116 = vpop.permute.xlu0 %3115
        %3117 = vrot.lane.b32.xlu0 %v3042, 8
        %v3118 = vpop.permute.xlu0 %3117
        %3119 = vrot.lane.b32.xlu0 %v3054, 8
        %v3120 = vpop.permute.xlu0 %3119
        %3121 = vrot.lane.b32.xlu0 %v3066, 8
        %v3122 = vpop.permute.xlu0 %3121
        %3123 = vrot.lane.b32.xlu0 %v3078, 8
        %v3124 = vpop.permute.xlu0 %3123
        %3125 = vrot.lane.b32.xlu0 %v3090, 8
        %v3126 = vpop.permute.xlu0 %3125
        %v3145 = vunpack.c.l.b16 %v2713
        %v3146 = vunpack.c.l.b16 %v2714
        %v3147 = vunpack.c.l.b16 %v2715
        %v3148 = vunpack.c.l.b16 %v2716
        %v3149 = vunpack.c.l.b16 %v2717
        %v3150 = vunpack.c.l.b16 %v2718
        %v3151 = vunpack.c.l.b16 %v2719
        %v3152 = vunpack.c.l.b16 %v2720
        %v3153 = vunpack.c.l.b16 %v2721
        %v3154 = vunpack.c.l.b16 %v2722
        %v3155 = vunpack.c.l.b16 %v2723
        %v3156 = vunpack.c.l.b16 %v2724
        %v3157 = vunpack.c.l.b16 %v2725
        %v3158 = vunpack.c.l.b16 %v2726
        %v3159 = vunpack.c.l.b16 %v2727
        %v3160 = vunpack.c.l.b16 %v2728
        %v3161 = vunpack.c.l.b16 %v2729
        %v3162 = vunpack.c.l.b16 %v2730
        %v3163 = vpack.c.b16 %v2768, %v3145
        %v3164 = vpack.c.b16 %v2770, %v3146
        %v3165 = vpack.c.b16 %v2772, %v3147
        %v3166 = vpack.c.b16 %v2774, %v3148
        %v3167 = vpack.c.b16 %v2776, %v3149
        %v3168 = vpack.c.b16 %v2778, %v3150
        %v3169 = vpack.c.b16 %v2780, %v3151
        %v3170 = vpack.c.b16 %v2782, %v3152
        %v3171 = vpack.c.b16 %v2784, %v3153
        %v3172 = vpack.c.b16 %v2786, %v3154
        %v3173 = vpack.c.b16 %v2788, %v3155
        %v3174 = vpack.c.b16 %v2790, %v3156
        %v3175 = vpack.c.b16 %v2792, %v3157
        %v3176 = vpack.c.b16 %v2794, %v3158
        %v3177 = vpack.c.b16 %v2796, %v3159
        %v3178 = vpack.c.b16 %v2798, %v3160
        %v3179 = vpack.c.b16 %v2800, %v3161
        %v3180 = vpack.c.b16 %v2802, %v3162
        %v3181 = vrot.slane %v3163, 1
        %v3182 = vrot.slane %v2857, 1
        %v3183 = vsel %vm1554, %v3181, %v3182
        %v3184 = vrot.slane %v3164, 1
        %v3185 = vrot.slane %v2858, 1
        %v3186 = vsel %vm1554, %v3184, %v3185
        %v3187 = vrot.slane %v3165, 1
        %v3188 = vrot.slane %v2859, 1
        %v3189 = vsel %vm1554, %v3187, %v3188
        %v3190 = vrot.slane %v3166, 1
        %v3191 = vrot.slane %v2860, 1
        %v3192 = vsel %vm1554, %v3190, %v3191
        %v3193 = vrot.slane %v3167, 1
        %v3194 = vrot.slane %v2861, 1
        %v3195 = vsel %vm1554, %v3193, %v3194
        %v3196 = vrot.slane %v3168, 1
        %v3197 = vrot.slane %v2862, 1
        %v3198 = vsel %vm1554, %v3196, %v3197
        %v3199 = vrot.slane %v3169, 1
        %v3200 = vrot.slane %v2863, 1
        %v3201 = vsel %vm1554, %v3199, %v3200
        %v3202 = vrot.slane %v3170, 1
        %v3203 = vrot.slane %v2864, 1
        %v3204 = vsel %vm1554, %v3202, %v3203
        %v3205 = vrot.slane %v3171, 1
        %v3206 = vrot.slane %v2865, 1
        %v3207 = vsel %vm1554, %v3205, %v3206
        %v3208 = vrot.slane %v3172, 1
        %v3209 = vrot.slane %v2866, 1
        %v3210 = vsel %vm1554, %v3208, %v3209
        %v3211 = vrot.slane %v3173, 1
        %v3212 = vrot.slane %v2867, 1
        %v3213 = vsel %vm1554, %v3211, %v3212
        %v3214 = vrot.slane %v3174, 1
        %v3215 = vrot.slane %v2868, 1
        %v3216 = vsel %vm1554, %v3214, %v3215
        %v3217 = vrot.slane %v3175, 1
        %v3218 = vrot.slane %v2869, 1
        %v3219 = vsel %vm1554, %v3217, %v3218
        %v3220 = vrot.slane %v3176, 1
        %v3221 = vrot.slane %v2870, 1
        %v3222 = vsel %vm1554, %v3220, %v3221
        %v3223 = vrot.slane %v3177, 1
        %v3224 = vrot.slane %v2871, 1
        %v3225 = vsel %vm1554, %v3223, %v3224
        %v3226 = vrot.slane %v3178, 1
        %v3227 = vrot.slane %v2872, 1
        %v3228 = vsel %vm1554, %v3226, %v3227
        %v3229 = vrot.slane %v3179, 1
        %v3230 = vrot.slane %v2873, 1
        %v3231 = vsel %vm1554, %v3229, %v3230
        %v3232 = vrot.slane %v3180, 1
        %v3233 = vrot.slane %v2874, 1
        %v3234 = vsel %vm1554, %v3232, %v3233
        %3235 = vrot.lane.b32.xlu0 %v3183, 16
        %v3236 = vpop.permute.xlu0 %3235
        %3237 = vrot.lane.b32.xlu0 %v3186, 16
        %v3238 = vpop.permute.xlu0 %3237
        %3239 = vrot.lane.b32.xlu0 %v3189, 16
        %v3240 = vpop.permute.xlu0 %3239
        %3241 = vrot.lane.b32.xlu0 %v3192, 16
        %v3242 = vpop.permute.xlu0 %3241
        %3243 = vrot.lane.b32.xlu0 %v3195, 16
        %v3244 = vpop.permute.xlu0 %3243
        %3245 = vrot.lane.b32.xlu0 %v3198, 16
        %v3246 = vpop.permute.xlu0 %3245
        %3247 = vrot.lane.b32.xlu0 %v3201, 16
        %v3248 = vpop.permute.xlu0 %3247
        %3249 = vrot.lane.b32.xlu0 %v3204, 16
        %v3250 = vpop.permute.xlu0 %3249
        %3251 = vrot.lane.b32.xlu0 %v3207, 16
        %v3252 = vpop.permute.xlu0 %3251
        %3253 = vrot.lane.b32.xlu0 %v3210, 16
        %v3254 = vpop.permute.xlu0 %3253
        %3255 = vrot.lane.b32.xlu0 %v3213, 16
        %v3256 = vpop.permute.xlu0 %3255
        %3257 = vrot.lane.b32.xlu0 %v3216, 16
        %v3258 = vpop.permute.xlu0 %3257
        %3259 = vrot.lane.b32.xlu0 %v3219, 16
        %v3260 = vpop.permute.xlu0 %3259
        %3261 = vrot.lane.b32.xlu0 %v3222, 16
        %v3262 = vpop.permute.xlu0 %3261
        %3263 = vrot.lane.b32.xlu0 %v3225, 16
        %v3264 = vpop.permute.xlu0 %3263
        %3265 = vrot.lane.b32.xlu0 %v3228, 16
        %v3266 = vpop.permute.xlu0 %3265
        %3267 = vrot.lane.b32.xlu0 %v3231, 16
        %v3268 = vpop.permute.xlu0 %3267
        %3269 = vrot.lane.b32.xlu0 %v3234, 16
        %v3270 = vpop.permute.xlu0 %3269
        %v3272 = vsel %vm1682, %v2803, %v3092
        %v3274 = vsel %vm1682, %v2804, %v3094
        %v3276 = vsel %vm1682, %v2805, %v3096
        %v3278 = vsel %vm1682, %v2806, %v3098
        %v3280 = vsel %vm1682, %v2807, %v3100
        %v3282 = vsel %vm1682, %v2808, %v3102
        %v3284 = vsel %vm1682, %v2809, %v3104
        %v3286 = vsel %vm1682, %v2810, %v3106
        %v3288 = vsel %vm1682, %v2811, %v3108
        %v3290 = vsel %vm1682, %v2812, %v3110
        %v3292 = vsel %vm1682, %v2813, %v3112
        %v3294 = vsel %vm1682, %v2814, %v3114
        %v3296 = vsel %vm1682, %v2815, %v3116
        %v3298 = vsel %vm1682, %v2816, %v3118
        %v3300 = vsel %vm1682, %v2817, %v3120
        %v3302 = vsel %vm1682, %v2818, %v3122
        %v3304 = vsel %vm1682, %v2819, %v3124
        %v3306 = vsel %vm1682, %v2820, %v3126
        %vm3307 = vcmask 130048
        %v3309 = vsel %vm3307, %v3272, %v3236
        %v3311 = vsel %vm3307, %v3274, %v3238
        %v3313 = vsel %vm3307, %v3276, %v3240
        %v3315 = vsel %vm3307, %v3278, %v3242
        %v3317 = vsel %vm3307, %v3280, %v3244
        %v3319 = vsel %vm3307, %v3282, %v3246
        %v3321 = vsel %vm3307, %v3284, %v3248
        %v3323 = vsel %vm3307, %v3286, %v3250
        %v3325 = vsel %vm3307, %v3288, %v3252
        %v3327 = vsel %vm3307, %v3290, %v3254
        %v3329 = vsel %vm3307, %v3292, %v3256
        %v3331 = vsel %vm3307, %v3294, %v3258
        %v3333 = vsel %vm3307, %v3296, %v3260
        %v3335 = vsel %vm3307, %v3298, %v3262
        %v3337 = vsel %vm3307, %v3300, %v3264
        %v3339 = vsel %vm3307, %v3302, %v3266
        %v3341 = vsel %vm3307, %v3304, %v3268
        %v3343 = vsel %vm3307, %v3306, %v3270
        %v3344 = vld [vmem:[%s4] sm:$0xf]
        %v3345 = vld [vmem:[%s4 + $0x4] sm:$0xf]
        %v3346 = vld [vmem:[%s4 + $0x8] sm:$0xf]
        %s3347 = scalar_lea.vmem %s4, 12
        %v3348 = vld [vmem:[%s3347] sm:$0xf]
        %v3349 = vld [vmem:[%s3347 + $0x4] sm:$0xf]
        %v3350 = vld [vmem:[%s3347 + $0x8] sm:$0xf]
        %v3354 = vunpack.c.l.b16 %v3348
        %v3355 = vunpack.c.l.b16 %v3349
        %v3356 = vunpack.c.l.b16 %v3350
        %v3357 = vpack.c.b16 %v3355, %v3354
        %v3358 = vpack.c.b16 %v3356, %v3356
        %vm3360 = vcmask 195584
        %v3361 = vsel %vm3360, %v3311, 0
        %v3363 = vsel %vm3360, %v3313, 0
        %v3365 = vsel %vm3360, %v3315, 0
        %v3367 = vsel %vm3360, %v3317, 0
        %v3369 = vsel %vm3360, %v3319, 0
        %v3371 = vsel %vm3360, %v3321, 0
        %v3373 = vsel %vm3360, %v3323, 0
        %v3375 = vsel %vm3360, %v3325, 0
        %v3377 = vsel %vm3360, %v3327, 0
        %v3379 = vsel %vm3360, %v3329, 0
        %v3381 = vsel %vm3360, %v3331, 0
        %v3383 = vsel %vm3360, %v3333, 0
        %v3385 = vsel %vm3360, %v3335, 0
        %v3387 = vsel %vm3360, %v3337, 0
        %v3389 = vsel %vm3360, %v3339, 0
        %v3391 = vsel %vm3360, %v3341, 0
        %vm3393 = vcmask 1043456
        %v3395 = vsel %vm3393, %v3358, 0
        %3397 = vmatpush.bf16.msra.mxu0 0
        %3398 = vmatpush.bf16.msra.mxu0 0
        %3399 = vmatpush.bf16.msra.mxu0 0
        %3400 = vmatpush.bf16.msra.mxu0 0
        %3401 = vmatpush.bf16.msra.mxu0 0
        %3402 = vmatpush.bf16.msra.mxu0 0
        %3403 = vmatpush.bf16.msra.mxu0 %v3395
        %3404 = vmatpush.bf16.msra.mxu0 %v3357
        %3405 = vmatmul.bf16.gmra.mxu0 %v3361
        %v3406 = vpop.f32.mrf.mxu0
        %v3407 = vadd.f32 0.0, %v3406
        %v3408 = vpop.f32.mrf.mxu0
        %v3409 = vadd.f32 0.0, %v3408
        %3410 = vmatmul.bf16.gmra.mxu0 %v3363
        %v3411 = vpop.f32.mrf.mxu0
        %v3412 = vadd.f32 0.0, %v3411
        %v3413 = vpop.f32.mrf.mxu0
        %v3414 = vadd.f32 0.0, %v3413
        %3415 = vmatmul.bf16.gmra.mxu0 %v3365
        %v3416 = vpop.f32.mrf.mxu0
        %v3417 = vadd.f32 0.0, %v3416
        %v3418 = vpop.f32.mrf.mxu0
        %v3419 = vadd.f32 0.0, %v3418
        %3420 = vmatmul.bf16.gmra.mxu0 %v3367
        %v3421 = vpop.f32.mrf.mxu0
        %v3422 = vadd.f32 0.0, %v3421
        %v3423 = vpop.f32.mrf.mxu0
        %v3424 = vadd.f32 0.0, %v3423
        %3425 = vmatmul.bf16.gmra.mxu0 %v3369
        %v3426 = vpop.f32.mrf.mxu0
        %v3427 = vadd.f32 0.0, %v3426
        %v3428 = vpop.f32.mrf.mxu0
        %v3429 = vadd.f32 0.0, %v3428
        %3430 = vmatmul.bf16.gmra.mxu0 %v3371
        %v3431 = vpop.f32.mrf.mxu0
        %v3432 = vadd.f32 0.0, %v3431
        %v3433 = vpop.f32.mrf.mxu0
        %v3434 = vadd.f32 0.0, %v3433
        %3435 = vmatmul.bf16.gmra.mxu0 %v3373
        %v3436 = vpop.f32.mrf.mxu0
        %v3437 = vadd.f32 0.0, %v3436
        %v3438 = vpop.f32.mrf.mxu0
        %v3439 = vadd.f32 0.0, %v3438
        %3440 = vmatmul.bf16.gmra.mxu0 %v3375
        %v3441 = vpop.f32.mrf.mxu0
        %v3442 = vadd.f32 0.0, %v3441
        %v3443 = vpop.f32.mrf.mxu0
        %v3444 = vadd.f32 0.0, %v3443
        %3445 = vmatmul.bf16.gmra.mxu0 %v3377
        %v3446 = vpop.f32.mrf.mxu0
        %v3447 = vadd.f32 0.0, %v3446
        %v3448 = vpop.f32.mrf.mxu0
        %v3449 = vadd.f32 0.0, %v3448
        %3450 = vmatmul.bf16.gmra.mxu0 %v3379
        %v3451 = vpop.f32.mrf.mxu0
        %v3452 = vadd.f32 0.0, %v3451
        %v3453 = vpop.f32.mrf.mxu0
        %v3454 = vadd.f32 0.0, %v3453
        %3455 = vmatmul.bf16.gmra.mxu0 %v3381
        %v3456 = vpop.f32.mrf.mxu0
        %v3457 = vadd.f32 0.0, %v3456
        %v3458 = vpop.f32.mrf.mxu0
        %v3459 = vadd.f32 0.0, %v3458
        %3460 = vmatmul.bf16.gmra.mxu0 %v3383
        %v3461 = vpop.f32.mrf.mxu0
        %v3462 = vadd.f32 0.0, %v3461
        %v3463 = vpop.f32.mrf.mxu0
        %v3464 = vadd.f32 0.0, %v3463
        %3465 = vmatmul.bf16.gmra.mxu0 %v3385
        %v3466 = vpop.f32.mrf.mxu0
        %v3467 = vadd.f32 0.0, %v3466
        %v3468 = vpop.f32.mrf.mxu0
        %v3469 = vadd.f32 0.0, %v3468
        %3470 = vmatmul.bf16.gmra.mxu0 %v3387
        %v3471 = vpop.f32.mrf.mxu0
        %v3472 = vadd.f32 0.0, %v3471
        %v3473 = vpop.f32.mrf.mxu0
        %v3474 = vadd.f32 0.0, %v3473
        %3475 = vmatmul.bf16.gmra.mxu0 %v3389
        %v3476 = vpop.f32.mrf.mxu0
        %v3477 = vadd.f32 0.0, %v3476
        %v3478 = vpop.f32.mrf.mxu0
        %v3479 = vadd.f32 0.0, %v3478
        %3480 = vmatmul.bf16.gmra.mxu0 %v3391
        %v3481 = vpop.f32.mrf.mxu0
        %v3482 = vadd.f32 0.0, %v3481
        %v3483 = vpop.f32.mrf.mxu0
        %v3484 = vadd.f32 0.0, %v3483
        %3485 = vdwg.mxu0
        %v3489 = vunpack.c.l.b16 %v3344
        %v3490 = vunpack.c.l.b16 %v3345
        %v3491 = vunpack.c.l.b16 %v3346
        %v3492 = vpack.c.b16 %v3490, %v3489
        %v3493 = vpack.c.b16 %v3491, %v3491
        %v3495 = vsel %vm3360, %v3309, 0
        %v3498 = vsel %vm3393, %v3493, 0
        %3500 = vmatpush.bf16.msra.mxu0 0
        %3501 = vmatpush.bf16.msra.mxu0 0
        %3502 = vmatpush.bf16.msra.mxu0 0
        %3503 = vmatpush.bf16.msra.mxu0 0
        %3504 = vmatpush.bf16.msra.mxu0 0
        %3505 = vmatpush.bf16.msra.mxu0 0
        %3506 = vmatpush.bf16.msra.mxu0 %v3498
        %3507 = vmatpush.bf16.msra.mxu0 %v3492
        %3508 = vmatmul.bf16.gmra.mxu0 %v3495
        %v3509 = vpop.f32.mrf.mxu0
        %v3510 = vadd.f32 %v3407, %v3509
        %v3511 = vpop.f32.mrf.mxu0
        %v3512 = vadd.f32 %v3409, %v3511
        %3513 = vmatmul.bf16.gmra.mxu0 %v3361
        %v3514 = vpop.f32.mrf.mxu0
        %v3515 = vadd.f32 %v3412, %v3514
        %v3516 = vpop.f32.mrf.mxu0
        %v3517 = vadd.f32 %v3414, %v3516
        %3518 = vmatmul.bf16.gmra.mxu0 %v3363
        %v3519 = vpop.f32.mrf.mxu0
        %v3520 = vadd.f32 %v3417, %v3519
        %v3521 = vpop.f32.mrf.mxu0
        %v3522 = vadd.f32 %v3419, %v3521
        %3523 = vmatmul.bf16.gmra.mxu0 %v3365
        %v3524 = vpop.f32.mrf.mxu0
        %v3525 = vadd.f32 %v3422, %v3524
        %v3526 = vpop.f32.mrf.mxu0
        %v3527 = vadd.f32 %v3424, %v3526
        %3528 = vmatmul.bf16.gmra.mxu0 %v3367
        %v3529 = vpop.f32.mrf.mxu0
        %v3530 = vadd.f32 %v3427, %v3529
        %v3531 = vpop.f32.mrf.mxu0
        %v3532 = vadd.f32 %v3429, %v3531
        %3533 = vmatmul.bf16.gmra.mxu0 %v3369
        %v3534 = vpop.f32.mrf.mxu0
        %v3535 = vadd.f32 %v3432, %v3534
        %v3536 = vpop.f32.mrf.mxu0
        %v3537 = vadd.f32 %v3434, %v3536
        %3538 = vmatmul.bf16.gmra.mxu0 %v3371
        %v3539 = vpop.f32.mrf.mxu0
        %v3540 = vadd.f32 %v3437, %v3539
        %v3541 = vpop.f32.mrf.mxu0
        %v3542 = vadd.f32 %v3439, %v3541
        %3543 = vmatmul.bf16.gmra.mxu0 %v3373
        %v3544 = vpop.f32.mrf.mxu0
        %v3545 = vadd.f32 %v3442, %v3544
        %v3546 = vpop.f32.mrf.mxu0
        %v3547 = vadd.f32 %v3444, %v3546
        %3548 = vmatmul.bf16.gmra.mxu0 %v3375
        %v3549 = vpop.f32.mrf.mxu0
        %v3550 = vadd.f32 %v3447, %v3549
        %v3551 = vpop.f32.mrf.mxu0
        %v3552 = vadd.f32 %v3449, %v3551
        %3553 = vmatmul.bf16.gmra.mxu0 %v3377
        %v3554 = vpop.f32.mrf.mxu0
        %v3555 = vadd.f32 %v3452, %v3554
        %v3556 = vpop.f32.mrf.mxu0
        %v3557 = vadd.f32 %v3454, %v3556
        %3558 = vmatmul.bf16.gmra.mxu0 %v3379
        %v3559 = vpop.f32.mrf.mxu0
        %v3560 = vadd.f32 %v3457, %v3559
        %v3561 = vpop.f32.mrf.mxu0
        %v3562 = vadd.f32 %v3459, %v3561
        %3563 = vmatmul.bf16.gmra.mxu0 %v3381
        %v3564 = vpop.f32.mrf.mxu0
        %v3565 = vadd.f32 %v3462, %v3564
        %v3566 = vpop.f32.mrf.mxu0
        %v3567 = vadd.f32 %v3464, %v3566
        %3568 = vmatmul.bf16.gmra.mxu0 %v3383
        %v3569 = vpop.f32.mrf.mxu0
        %v3570 = vadd.f32 %v3467, %v3569
        %v3571 = vpop.f32.mrf.mxu0
        %v3572 = vadd.f32 %v3469, %v3571
        %3573 = vmatmul.bf16.gmra.mxu0 %v3385
        %v3574 = vpop.f32.mrf.mxu0
        %v3575 = vadd.f32 %v3472, %v3574
        %v3576 = vpop.f32.mrf.mxu0
        %v3577 = vadd.f32 %v3474, %v3576
        %3578 = vmatmul.bf16.gmra.mxu0 %v3387
        %v3579 = vpop.f32.mrf.mxu0
        %v3580 = vadd.f32 %v3477, %v3579
        %v3581 = vpop.f32.mrf.mxu0
        %v3582 = vadd.f32 %v3479, %v3581
        %3583 = vmatmul.bf16.gmra.mxu0 %v3389
        %v3584 = vpop.f32.mrf.mxu0
        %v3585 = vadd.f32 %v3482, %v3584
        %v3586 = vpop.f32.mrf.mxu0
        %v3587 = vadd.f32 %v3484, %v3586
        %3588 = vdwg.mxu0
        %s3589 = scalar_lea.vmem %s4, 24
        %v3590 = vld [vmem:[%s3589] sm:$0xf]
        %v3591 = vld [vmem:[%s3589 + $0x4] sm:$0xf]
        %v3592 = vld [vmem:[%s3589 + $0x8] sm:$0xf]
        %v3596 = vunpack.c.l.b16 %v3590
        %v3597 = vunpack.c.l.b16 %v3591
        %v3598 = vunpack.c.l.b16 %v3592
        %v3599 = vpack.c.b16 %v3597, %v3596
        %v3600 = vpack.c.b16 %v3598, %v3598
        %v3602 = vsel %vm3360, %v3343, 0
        %v3605 = vsel %vm3393, %v3600, 0
        %3607 = vmatpush.bf16.msra.mxu0 0
        %3608 = vmatpush.bf16.msra.mxu0 0
        %3609 = vmatpush.bf16.msra.mxu0 0
        %3610 = vmatpush.bf16.msra.mxu0 0
        %3611 = vmatpush.bf16.msra.mxu0 0
        %3612 = vmatpush.bf16.msra.mxu0 0
        %3613 = vmatpush.bf16.msra.mxu0 %v3605
        %3614 = vmatpush.bf16.msra.mxu0 %v3599
        %3615 = vmatmul.bf16.gmra.mxu0 %v3363
        %v3616 = vpop.f32.mrf.mxu0
        %v3617 = vadd.f32 0.0, %v3616
        %v3618 = vpop.f32.mrf.mxu0
        %v3619 = vadd.f32 0.0, %v3618
        %3620 = vmatmul.bf16.gmra.mxu0 %v3365
        %v3621 = vpop.f32.mrf.mxu0
        %v3622 = vadd.f32 0.0, %v3621
        %v3623 = vpop.f32.mrf.mxu0
        %v3624 = vadd.f32 0.0, %v3623
        %3625 = vmatmul.bf16.gmra.mxu0 %v3367
        %v3626 = vpop.f32.mrf.mxu0
        %v3627 = vadd.f32 0.0, %v3626
        %v3628 = vpop.f32.mrf.mxu0
        %v3629 = vadd.f32 0.0, %v3628
        %3630 = vmatmul.bf16.gmra.mxu0 %v3369
        %v3631 = vpop.f32.mrf.mxu0
        %v3632 = vadd.f32 0.0, %v3631
        %v3633 = vpop.f32.mrf.mxu0
        %v3634 = vadd.f32 0.0, %v3633
        %3635 = vmatmul.bf16.gmra.mxu0 %v3371
        %v3636 = vpop.f32.mrf.mxu0
        %v3637 = vadd.f32 0.0, %v3636
        %v3638 = vpop.f32.mrf.mxu0
        %v3639 = vadd.f32 0.0, %v3638
        %3640 = vmatmul.bf16.gmra.mxu0 %v3373
        %v3641 = vpop.f32.mrf.mxu0
        %v3642 = vadd.f32 0.0, %v3641
        %v3643 = vpop.f32.mrf.mxu0
        %v3644 = vadd.f32 0.0, %v3643
        %3645 = vmatmul.bf16.gmra.mxu0 %v3375
        %v3646 = vpop.f32.mrf.mxu0
        %v3647 = vadd.f32 0.0, %v3646
        %v3648 = vpop.f32.mrf.mxu0
        %v3649 = vadd.f32 0.0, %v3648
        %3650 = vmatmul.bf16.gmra.mxu0 %v3377
        %v3651 = vpop.f32.mrf.mxu0
        %v3652 = vadd.f32 0.0, %v3651
        %v3653 = vpop.f32.mrf.mxu0
        %v3654 = vadd.f32 0.0, %v3653
        %3655 = vmatmul.bf16.gmra.mxu0 %v3379
        %v3656 = vpop.f32.mrf.mxu0
        %v3657 = vadd.f32 0.0, %v3656
        %v3658 = vpop.f32.mrf.mxu0
        %v3659 = vadd.f32 0.0, %v3658
        %3660 = vmatmul.bf16.gmra.mxu0 %v3381
        %v3661 = vpop.f32.mrf.mxu0
        %v3662 = vadd.f32 0.0, %v3661
        %v3663 = vpop.f32.mrf.mxu0
        %v3664 = vadd.f32 0.0, %v3663
        %3665 = vmatmul.bf16.gmra.mxu0 %v3383
        %v3666 = vpop.f32.mrf.mxu0
        %v3667 = vadd.f32 0.0, %v3666
        %v3668 = vpop.f32.mrf.mxu0
        %v3669 = vadd.f32 0.0, %v3668
        %3670 = vmatmul.bf16.gmra.mxu0 %v3385
        %v3671 = vpop.f32.mrf.mxu0
        %v3672 = vadd.f32 0.0, %v3671
        %v3673 = vpop.f32.mrf.mxu0
        %v3674 = vadd.f32 0.0, %v3673
        %3675 = vmatmul.bf16.gmra.mxu0 %v3387
        %v3676 = vpop.f32.mrf.mxu0
        %v3677 = vadd.f32 0.0, %v3676
        %v3678 = vpop.f32.mrf.mxu0
        %v3679 = vadd.f32 0.0, %v3678
        %3680 = vmatmul.bf16.gmra.mxu0 %v3389
        %v3681 = vpop.f32.mrf.mxu0
        %v3682 = vadd.f32 0.0, %v3681
        %v3683 = vpop.f32.mrf.mxu0
        %v3684 = vadd.f32 0.0, %v3683
        %3685 = vmatmul.bf16.gmra.mxu0 %v3391
        %v3686 = vpop.f32.mrf.mxu0
        %v3687 = vadd.f32 0.0, %v3686
        %v3688 = vpop.f32.mrf.mxu0
        %v3689 = vadd.f32 0.0, %v3688
        %3690 = vmatmul.bf16.gmra.mxu0 %v3602
        %v3691 = vpop.f32.mrf.mxu0
        %v3692 = vadd.f32 0.0, %v3691
        %v3693 = vpop.f32.mrf.mxu0
        %v3694 = vadd.f32 0.0, %v3693
        %3695 = vdwg.mxu0
        %v3696 = vadd.f32 %v3510, %v3617
        %v3697 = vadd.f32 %v3512, %v3619
        %v3698 = vadd.f32 %v3515, %v3622
        %v3699 = vadd.f32 %v3517, %v3624
        %v3700 = vadd.f32 %v3520, %v3627
        %v3701 = vadd.f32 %v3522, %v3629
        %v3702 = vadd.f32 %v3525, %v3632
        %v3703 = vadd.f32 %v3527, %v3634
        %v3704 = vadd.f32 %v3530, %v3637
        %v3705 = vadd.f32 %v3532, %v3639
        %v3706 = vadd.f32 %v3535, %v3642
        %v3707 = vadd.f32 %v3537, %v3644
        %v3708 = vadd.f32 %v3540, %v3647
        %v3709 = vadd.f32 %v3542, %v3649
        %v3710 = vadd.f32 %v3545, %v3652
        %v3711 = vadd.f32 %v3547, %v3654
        %v3712 = vadd.f32 %v3550, %v3657
        %v3713 = vadd.f32 %v3552, %v3659
        %v3714 = vadd.f32 %v3555, %v3662
        %v3715 = vadd.f32 %v3557, %v3664
        %v3716 = vadd.f32 %v3560, %v3667
        %v3717 = vadd.f32 %v3562, %v3669
        %v3718 = vadd.f32 %v3565, %v3672
        %v3719 = vadd.f32 %v3567, %v3674
        %v3720 = vadd.f32 %v3570, %v3677
        %v3721 = vadd.f32 %v3572, %v3679
        %v3722 = vadd.f32 %v3575, %v3682
        %v3723 = vadd.f32 %v3577, %v3684
        %v3724 = vadd.f32 %v3580, %v3687
        %v3725 = vadd.f32 %v3582, %v3689
        %v3726 = vadd.f32 %v3585, %v3692
        %v3727 = vadd.f32 %v3587, %v3694
        %v3729 = vperm.slane %v2657, 0
        %v3731 = vmul.f32 %v3696, %v3729
        %v3732 = vmul.f32 %v3697, %v3729
        %v3733 = vmul.f32 %v3698, %v3729
        %v3734 = vmul.f32 %v3699, %v3729
        %v3735 = vmul.f32 %v3700, %v3729
        %v3736 = vmul.f32 %v3701, %v3729
        %v3737 = vmul.f32 %v3702, %v3729
        %v3738 = vmul.f32 %v3703, %v3729
        %v3739 = vmul.f32 %v3704, %v3729
        %v3740 = vmul.f32 %v3705, %v3729
        %v3741 = vmul.f32 %v3706, %v3729
        %v3742 = vmul.f32 %v3707, %v3729
        %v3743 = vmul.f32 %v3708, %v3729
        %v3744 = vmul.f32 %v3709, %v3729
        %v3745 = vmul.f32 %v3710, %v3729
        %v3746 = vmul.f32 %v3711, %v3729
        %v3747 = vmul.f32 %v3712, %v3729
        %v3748 = vmul.f32 %v3713, %v3729
        %v3749 = vmul.f32 %v3714, %v3729
        %v3750 = vmul.f32 %v3715, %v3729
        %v3751 = vmul.f32 %v3716, %v3729
        %v3752 = vmul.f32 %v3717, %v3729
        %v3753 = vmul.f32 %v3718, %v3729
        %v3754 = vmul.f32 %v3719, %v3729
        %v3755 = vmul.f32 %v3720, %v3729
        %v3756 = vmul.f32 %v3721, %v3729
        %v3757 = vmul.f32 %v3722, %v3729
        %v3758 = vmul.f32 %v3723, %v3729
        %v3759 = vmul.f32 %v3724, %v3729
        %v3760 = vmul.f32 %v3725, %v3729
        %v3761 = vmul.f32 %v3726, %v3729
        %v3762 = vmul.f32 %v3727, %v3729
        %v3764 = vperm.slane %v2658, 0
        %v3766 = vadd.f32 %v3731, %v3764
        %v3767 = vadd.f32 %v3732, %v3764
        %v3768 = vadd.f32 %v3733, %v3764
        %v3769 = vadd.f32 %v3734, %v3764
        %v3770 = vadd.f32 %v3735, %v3764
        %v3771 = vadd.f32 %v3736, %v3764
        %v3772 = vadd.f32 %v3737, %v3764
        %v3773 = vadd.f32 %v3738, %v3764
        %v3774 = vadd.f32 %v3739, %v3764
        %v3775 = vadd.f32 %v3740, %v3764
        %v3776 = vadd.f32 %v3741, %v3764
        %v3777 = vadd.f32 %v3742, %v3764
        %v3778 = vadd.f32 %v3743, %v3764
        %v3779 = vadd.f32 %v3744, %v3764
        %v3780 = vadd.f32 %v3745, %v3764
        %v3781 = vadd.f32 %v3746, %v3764
        %v3782 = vadd.f32 %v3747, %v3764
        %v3783 = vadd.f32 %v3748, %v3764
        %v3784 = vadd.f32 %v3749, %v3764
        %v3785 = vadd.f32 %v3750, %v3764
        %v3786 = vadd.f32 %v3751, %v3764
        %v3787 = vadd.f32 %v3752, %v3764
        %v3788 = vadd.f32 %v3753, %v3764
        %v3789 = vadd.f32 %v3754, %v3764
        %v3790 = vadd.f32 %v3755, %v3764
        %v3791 = vadd.f32 %v3756, %v3764
        %v3792 = vadd.f32 %v3757, %v3764
        %v3793 = vadd.f32 %v3758, %v3764
        %v3794 = vadd.f32 %v3759, %v3764
        %v3795 = vadd.f32 %v3760, %v3764
        %v3796 = vadd.f32 %v3761, %v3764
        %v3797 = vadd.f32 %v3762, %v3764
        %v3798 = vmax.f32 %v3766, 0.0
        %v3799 = vmax.f32 %v3767, 0.0
        %v3800 = vmax.f32 %v3768, 0.0
        %v3801 = vmax.f32 %v3769, 0.0
        %v3802 = vmax.f32 %v3770, 0.0
        %v3803 = vmax.f32 %v3771, 0.0
        %v3804 = vmax.f32 %v3772, 0.0
        %v3805 = vmax.f32 %v3773, 0.0
        %v3806 = vmax.f32 %v3774, 0.0
        %v3807 = vmax.f32 %v3775, 0.0
        %v3808 = vmax.f32 %v3776, 0.0
        %v3809 = vmax.f32 %v3777, 0.0
        %v3810 = vmax.f32 %v3778, 0.0
        %v3811 = vmax.f32 %v3779, 0.0
        %v3812 = vmax.f32 %v3780, 0.0
        %v3813 = vmax.f32 %v3781, 0.0
        %v3814 = vmax.f32 %v3782, 0.0
        %v3815 = vmax.f32 %v3783, 0.0
        %v3816 = vmax.f32 %v3784, 0.0
        %v3817 = vmax.f32 %v3785, 0.0
        %v3818 = vmax.f32 %v3786, 0.0
        %v3819 = vmax.f32 %v3787, 0.0
        %v3820 = vmax.f32 %v3788, 0.0
        %v3821 = vmax.f32 %v3789, 0.0
        %v3822 = vmax.f32 %v3790, 0.0
        %v3823 = vmax.f32 %v3791, 0.0
        %v3824 = vmax.f32 %v3792, 0.0
        %v3825 = vmax.f32 %v3793, 0.0
        %v3826 = vmax.f32 %v3794, 0.0
        %v3827 = vmax.f32 %v3795, 0.0
        %v3828 = vmax.f32 %v3796, 0.0
        %v3829 = vmax.f32 %v3797, 0.0
        %3830 = vst.msk [vmem:[%s316] sm:$0xff] %vm1682, %v3798
        %3831 = vst.msk [vmem:[%s316 + $0x8] sm:$0xff] %vm1682, %v3799
        %3832 = vst.msk [vmem:[%s316 + $0x10] sm:$0xff] %vm1682, %v3800
        %3833 = vst.msk [vmem:[%s316 + $0x18] sm:$0xff] %vm1682, %v3801
        %3834 = vst.msk [vmem:[%s316 + $0x20] sm:$0xff] %vm1682, %v3802
        %3835 = vst.msk [vmem:[%s316 + $0x28] sm:$0xff] %vm1682, %v3803
        %3836 = vst.msk [vmem:[%s316 + $0x30] sm:$0xff] %vm1682, %v3804
        %3837 = vst.msk [vmem:[%s316 + $0x38] sm:$0xff] %vm1682, %v3805
        %3838 = vst.msk [vmem:[%s316 + $0x40] sm:$0xff] %vm1682, %v3806
        %3839 = vst.msk [vmem:[%s316 + $0x48] sm:$0xff] %vm1682, %v3807
        %3840 = vst.msk [vmem:[%s316 + $0x50] sm:$0xff] %vm1682, %v3808
        %3841 = vst.msk [vmem:[%s316 + $0x58] sm:$0xff] %vm1682, %v3809
        %3842 = vst.msk [vmem:[%s316 + $0x60] sm:$0xff] %vm1682, %v3810
        %3843 = vst.msk [vmem:[%s316 + $0x68] sm:$0xff] %vm1682, %v3811
        %3844 = vst.msk [vmem:[%s316 + $0x70] sm:$0xff] %vm1682, %v3812
        %3845 = vst.msk [vmem:[%s316 + $0x78] sm:$0xff] %vm1682, %v3813
        %3846 = vst.msk [vmem:[%s316 + $0x80] sm:$0xff] %vm1682, %v3814
        %3847 = vst.msk [vmem:[%s316 + $0x88] sm:$0xff] %vm1682, %v3815
        %3848 = vst.msk [vmem:[%s316 + $0x90] sm:$0xff] %vm1682, %v3816
        %3849 = vst.msk [vmem:[%s316 + $0x98] sm:$0xff] %vm1682, %v3817
        %3850 = vst.msk [vmem:[%s316 + $0xa0] sm:$0xff] %vm1682, %v3818
        %3851 = vst.msk [vmem:[%s316 + $0xa8] sm:$0xff] %vm1682, %v3819
        %3852 = vst.msk [vmem:[%s316 + $0xb0] sm:$0xff] %vm1682, %v3820
        %3853 = vst.msk [vmem:[%s316 + $0xb8] sm:$0xff] %vm1682, %v3821
        %3854 = vst.msk [vmem:[%s316 + $0xc0] sm:$0xff] %vm1682, %v3822
        %3855 = vst.msk [vmem:[%s316 + $0xc8] sm:$0xff] %vm1682, %v3823
        %3856 = vst.msk [vmem:[%s316 + $0xd0] sm:$0xff] %vm1682, %v3824
        %3857 = vst.msk [vmem:[%s316 + $0xd8] sm:$0xff] %vm1682, %v3825
        %3858 = vst.msk [vmem:[%s316 + $0xe0] sm:$0xff] %vm1682, %v3826
        %3859 = vst.msk [vmem:[%s316 + $0xe8] sm:$0xff] %vm1682, %v3827
        %3860 = vst.msk [vmem:[%s316 + $0xf0] sm:$0xff] %vm1682, %v3828
        %3861 = vst.msk [vmem:[%s316 + $0xf8] sm:$0xff] %vm1682, %v3829
        %v3862 = vmax.f32 %v3798, %v3800
        %v3863 = vmax.f32 %v3799, %v3801
        %v3864 = vmax.f32 %v3802, %v3804
        %v3865 = vmax.f32 %v3803, %v3805
        %v3866 = vmax.f32 %v3806, %v3808
        %v3867 = vmax.f32 %v3807, %v3809
        %v3868 = vmax.f32 %v3810, %v3812
        %v3869 = vmax.f32 %v3811, %v3813
        %v3870 = vmax.f32 %v3814, %v3816
        %v3871 = vmax.f32 %v3815, %v3817
        %v3872 = vmax.f32 %v3818, %v3820
        %v3873 = vmax.f32 %v3819, %v3821
        %v3874 = vmax.f32 %v3822, %v3824
        %v3875 = vmax.f32 %v3823, %v3825
        %v3876 = vmax.f32 %v3826, %v3828
        %v3877 = vmax.f32 %v3827, %v3829
        %3878 = vst.msk [vmem:[#allocation4] sm:$0xff] %vm1682, %v3862
        %3879 = vst.msk [vmem:[#allocation4 + $0x8] sm:$0xff] %vm1682, %v3863
        %3880 = vst.msk [vmem:[#allocation4 + $0x10] sm:$0xff] %vm1682, %v3864
        %3881 = vst.msk [vmem:[#allocation4 + $0x18] sm:$0xff] %vm1682, %v3865
        %3882 = vst.msk [vmem:[#allocation4 + $0x20] sm:$0xff] %vm1682, %v3866
        %3883 = vst.msk [vmem:[#allocation4 + $0x28] sm:$0xff] %vm1682, %v3867
        %3884 = vst.msk [vmem:[#allocation4 + $0x30] sm:$0xff] %vm1682, %v3868
        %3885 = vst.msk [vmem:[#allocation4 + $0x38] sm:$0xff] %vm1682, %v3869
        %3886 = vst.msk [vmem:[#allocation4 + $0x40] sm:$0xff] %vm1682, %v3870
        %3887 = vst.msk [vmem:[#allocation4 + $0x48] sm:$0xff] %vm1682, %v3871
        %3888 = vst.msk [vmem:[#allocation4 + $0x50] sm:$0xff] %vm1682, %v3872
        %3889 = vst.msk [vmem:[#allocation4 + $0x58] sm:$0xff] %vm1682, %v3873
        %3890 = vst.msk [vmem:[#allocation4 + $0x60] sm:$0xff] %vm1682, %v3874
        %3891 = vst.msk [vmem:[#allocation4 + $0x68] sm:$0xff] %vm1682, %v3875
        %3892 = vst.msk [vmem:[#allocation4 + $0x70] sm:$0xff] %vm1682, %v3876
        %3893 = vst.msk [vmem:[#allocation4 + $0x78] sm:$0xff] %vm1682, %v3877
        %v3894 = vld [vmem:[#allocation4] ss:$2 sm:$0xff]
        %s3895 = scalar_lea.vmem [#allocation4], 16
        %v3896 = vld [vmem:[%s3895] ss:$2 sm:$0xff]
        %s3897 = scalar_lea.vmem [#allocation4], 32
        %v3898 = vld [vmem:[%s3897] ss:$2 sm:$0xff]
        %s3899 = scalar_lea.vmem [#allocation4], 48
        %v3900 = vld [vmem:[%s3899] ss:$2 sm:$0xff]
        %s3901 = scalar_lea.vmem [#allocation4], 64
        %v3902 = vld [vmem:[%s3901] ss:$2 sm:$0xff]
        %s3903 = scalar_lea.vmem [#allocation4], 80
        %v3904 = vld [vmem:[%s3903] ss:$2 sm:$0xff]
        %s3905 = scalar_lea.vmem [#allocation4], 96
        %v3906 = vld [vmem:[%s3905] ss:$2 sm:$0xff]
        %s3907 = scalar_lea.vmem [#allocation4], 112
        %v3908 = vld [vmem:[%s3907] ss:$2 sm:$0xff]
        %s3909 = scalar_lea.vmem [#allocation4], 1
        %v3910 = vld [vmem:[%s3909] ss:$2 sm:$0xff]
        %s3911 = scalar_lea.vmem [#allocation4], 17
        %v3912 = vld [vmem:[%s3911] ss:$2 sm:$0xff]
        %s3913 = scalar_lea.vmem [#allocation4], 33
        %v3914 = vld [vmem:[%s3913] ss:$2 sm:$0xff]
        %s3915 = scalar_lea.vmem [#allocation4], 49
        %v3916 = vld [vmem:[%s3915] ss:$2 sm:$0xff]
        %s3917 = scalar_lea.vmem [#allocation4], 65
        %v3918 = vld [vmem:[%s3917] ss:$2 sm:$0xff]
        %s3919 = scalar_lea.vmem [#allocation4], 81
        %v3920 = vld [vmem:[%s3919] ss:$2 sm:$0xff]
        %s3921 = scalar_lea.vmem [#allocation4], 97
        %v3922 = vld [vmem:[%s3921] ss:$2 sm:$0xff]
        %s3923 = scalar_lea.vmem [#allocation4], 113
        %v3924 = vld [vmem:[%s3923] ss:$2 sm:$0xff]
        %v3925 = vmax.f32 %v3894, %v3910
        %v3926 = vmax.f32 %v3896, %v3912
        %v3927 = vmax.f32 %v3898, %v3914
        %v3928 = vmax.f32 %v3900, %v3916
        %v3929 = vmax.f32 %v3902, %v3918
        %v3930 = vmax.f32 %v3904, %v3920
        %v3931 = vmax.f32 %v3906, %v3922
        %v3932 = vmax.f32 %v3908, %v3924
        %3933 = vst.msk [vmem:[%s306] sm:$0xff] %vm1682, %v3925
        %3934 = vst.msk [vmem:[%s306 + $0x8] sm:$0xff] %vm1682, %v3926
        %3935 = vst.msk [vmem:[%s306 + $0x10] sm:$0xff] %vm1682, %v3927
        %3936 = vst.msk [vmem:[%s306 + $0x18] sm:$0xff] %vm1682, %v3928
        %3937 = vst.msk [vmem:[%s306 + $0x20] sm:$0xff] %vm1682, %v3929
        %3938 = vst.msk [vmem:[%s306 + $0x28] sm:$0xff] %vm1682, %v3930
        %3939 = vst.msk [vmem:[%s306 + $0x30] sm:$0xff] %vm1682, %v3931
        %3940 = vst.msk [vmem:[%s306 + $0x38] sm:$0xff] %vm1682, %v3932
        %p3941 = scmp.lt.s32.totalorder %s23, 1
        %s3942 = scalar_select %p3941, %s23, 1
        %s3943 = smul.addr %s3942, 32
        %s3944 = smul.addr %s3943, 8
        %s3945 = scalar_lea.vmem %s7, %s3944
        %s3946 = sand.u32 %s209, 1
        %s3947 = scalar_lea.sflag [#allocation6], %s3946
        %s3948 = sand.u32 %s209, 1
        %s3949 = smul.addr %s3948, 64
        %s3950 = scalar_lea.vmem [#allocation5], %s3949
        // Predicated region
        $region49: #{tpu_custom_call.1} parent=47 // pred_check
          %p3951 = pneg %p193
        $region50: #{tpu_custom_call.1} parent=47 // pred_check_branch
          %3953 = sbr.rel (%p3951) target = $region52
        $region51: #{tpu_custom_call.1} parent=47 // pred_region
          _
        $region52: #{tpu_custom_call.1} parent=47 // pred_fallthru
          _
        // Predicated region
        $region53: #{tpu_custom_call.1} parent=47 // pred_check
          %p3954 = pneg %p219
        $region54: #{tpu_custom_call.1} parent=47 // pred_check_branch
          %3956 = sbr.rel (%p3954) target = $region56
        $region55: #{tpu_custom_call.1} parent=47 // pred_region
          %3958 = vsyncadd %s3947, 0
          %s3959 = smul.addr %s23, 8
          %s3960 = smul.addr %s3959, 8
          %s3961 = scalar_lea.hbm %s8, %s3960
          %s3962 = sshll.u32 %s3950, 4
          %s3963 = int_to_ptr.vmem [resolvable:$true] %s3962
          %s3964 = sshll.u32 %s3961, 4
          %s3965 = int_to_ptr.hbm [resolvable:$true] %s3964
          %3970 = dma.vmem_to_hbm [thread:$0]  %s3963, 1024, %s3965, %s3947, 128, 128, 8
        $region56: #{tpu_custom_call.1} parent=47 // pred_fallthru
          _
      $region48: #{tpu_custom_call.1} parent=5 // pred_fallthru
        _
      %p3971 = scmp.le.s32.totalorder 2, %s18
      // Predicated region
      $region57: #{tpu_custom_call.1} parent=5 // pred_check
        %p3972 = pneg %p3971
      $region58: #{tpu_custom_call.1} parent=5 // pred_check_branch
        %3974 = sbr.rel (%p3972) target = $region60
      $region59: #{tpu_custom_call.1} parent=5 // pred_region
        %s3975 = ssub.s32 %s18, 2
        // Predicated region
        $region61: #{tpu_custom_call.1} parent=59 // pred_check
          %p3976 = pneg %p199
        $region62: #{tpu_custom_call.1} parent=59 // pred_check_branch
          %3978 = sbr.rel (%p3976) target = $region64
        $region63: #{tpu_custom_call.1} parent=59 // pred_region
          %p3979 = scmp.lt.s32.totalorder %s24, 1
          %s3980 = scalar_select %p3979, %s24, 1
          %s3981 = smul.addr %s3980, 32
          %s3982 = smul.addr %s3981, 8
          %s3983 = scalar_lea.vmem %s7, %s3982
        $region64: #{tpu_custom_call.1} parent=59 // pred_fallthru
          _
        // Predicated region
        $region65: #{tpu_custom_call.1} parent=59 // pred_check
          %p3984 = pneg %p225
        $region66: #{tpu_custom_call.1} parent=59 // pred_check_branch
          %3986 = sbr.rel (%p3984) target = $region68
        $region67: #{tpu_custom_call.1} parent=59 // pred_region
          %s3987 = sand.u32 %s210, 1
          %s3988 = scalar_lea.sflag [#allocation6], %s3987
          %s3989 = sand.u32 %s210, 1
          %s3990 = smul.addr %s3989, 64
          %s3991 = scalar_lea.vmem [#allocation5], %s3990
          %3993 = dma.done %s3988, 1024
        $region68: #{tpu_custom_call.1} parent=59 // pred_fallthru
          _
      $region60: #{tpu_custom_call.1} parent=5 // pred_fallthru
        _
    $region6: #{tpu_custom_call.1} parent=1 // loop_footer
      %s22 = sadd.s32 1, %s18
    $region7: #{tpu_custom_call.1} parent=1 // loop_footer_branch
      %17 = sbr.rel target = $region3
    $region8: #{tpu_custom_call.1} parent=1 // loop_exit
      _
    %3994 = vsyncpa [#allocation6], 1
    %s3995 = scalar_lea.sflag [#allocation6], 1
    %3996 = vsyncpa %s3995, 1

</llo_original>
